<compile_context>
chip_gen: v5e
topology: v5e:2x2
jax: 0.10.0
libtpu: 0.0.40
codegen_flags: <defaults>
</compile_context>

<pallas_src>
import functools

import jax
import jax.numpy as jnp
from jax.experimental import pallas as pl
from jax.experimental.pallas import tpu as pltpu  # noqa: F401  (TPU backend)


# ----------------------------------------------------------------------------
# Pallas kernels (all operate on whole-array VMEM blocks; no grid needed)
# ----------------------------------------------------------------------------
def _bn_cols(y, g, b, eps=1e-5):
    """BatchNorm with batch statistics on y:(C, M) f32 — per-channel (row)
    mean/var over the lane axis M = N*H*W, folded into one scale/shift so the
    per-element work is a single fused multiply-add."""
    mean = jnp.mean(y, axis=1, keepdims=True)
    var = jnp.maximum(jnp.mean(y * y, axis=1, keepdims=True) - mean * mean, 0.0)
    scale = g * jax.lax.rsqrt(var + eps)
    shift = b - mean * scale
    return y * scale + shift


def _conv_bn_kernel(p_ref, w_ref, g_ref, b_ref, o_ref, *, relu):
    # conv as (Cout,K) @ (K,M) on the MXU (bf16 in, f32 acc) + BN (+ReLU)
    y = jnp.dot(w_ref[...], p_ref[...], preferred_element_type=jnp.float32)
    out = _bn_cols(y, g_ref[...], b_ref[...])
    if relu:
        out = jnp.maximum(out, 0.0)
    o_ref[...] = out


def _conv_bn_add_relu_kernel(p_ref, w_ref, g_ref, b_ref, r_ref, o_ref):
    # conv2 + bn2 + identity-shortcut add + relu, fully fused
    y = jnp.dot(w_ref[...], p_ref[...], preferred_element_type=jnp.float32)
    out = _bn_cols(y, g_ref[...], b_ref[...]) + r_ref[...]
    o_ref[...] = jnp.maximum(out, 0.0)


def _conv_bn_add_sc_kernel(p_ref, w_ref, g_ref, b_ref,
                           ps_ref, ws_ref, gs_ref, bs_ref, o_ref):
    # conv2 + bn2 + (1x1 shortcut conv + bn) + add + relu, fully fused
    y = jnp.dot(w_ref[...], p_ref[...], preferred_element_type=jnp.float32)
    sc = jnp.dot(ws_ref[...], ps_ref[...], preferred_element_type=jnp.float32)
    out = _bn_cols(y, g_ref[...], b_ref[...]) + _bn_cols(sc, gs_ref[...], bs_ref[...])
    o_ref[...] = jnp.maximum(out, 0.0)


def _linear_kernel(x_ref, w_ref, b_ref, o_ref):
    # head Linear (avg-pool already folded into w): y = x @ w + b
    o_ref[...] = (
        jnp.dot(x_ref[...], w_ref[...], preferred_element_type=jnp.float32)
        + b_ref[...]
    )


# ----------------------------------------------------------------------------
# Conv glue: im2col in CNHW layout (channels-first, batch*spatial on lanes)
# ----------------------------------------------------------------------------
def im2col_cnhw(x, k, stride, pad):
    """x:(C, N, H, W) f32 -> patches:(k*k*C, N*Ho*Wo) bf16, row index ordered
    (dy*k + dx)*C + c to match the weight-matrix layout."""
    C, N, H, W = x.shape
    Ho = (H + 2 * pad - k) // stride + 1
    Wo = (W + 2 * pad - k) // stride + 1
    xp = jnp.pad(x, ((0, 0), (0, 0), (pad, pad), (pad, pad)))
    cols = []
    for dy in range(k):
        for dx in range(k):
            cols.append(
                xp[:, :, dy : dy + stride * Ho : stride, dx : dx + stride * Wo : stride]
            )
    patches = jnp.concatenate(cols, axis=0)  # (k*k*C, N, Ho, Wo)
    return patches.reshape(k * k * C, N * Ho * Wo).astype(jnp.bfloat16), (N, Ho, Wo)


def conv_bn_relu(x, p, relu=True):
    """conv (bias dropped; cancelled by BN) -> BN(batch stats) -> [ReLU].
    x:(Cin, N, H, W) f32 -> (Cout, N, Ho, Wo) f32."""
    patches, (N, Ho, Wo) = im2col_cnhw(x, p["k"], p["stride"], p["pad"])
    cout = p["cout"]
    kern = functools.partial(_conv_bn_kernel, relu=relu)
    y = pl.pallas_call(
        kern, out_shape=jax.ShapeDtypeStruct((cout, N * Ho * Wo), jnp.float32)
    )(patches, p["w_mat"], p["gamma"], p["beta"])
    return y.reshape(cout, N, Ho, Wo)


def stage_forward(x, st):
    """One BasicBlock: relu(bn2(conv2(relu(bn1(conv1(x))))) + shortcut(x))."""
    c1, c2, sc = st["conv1"], st["conv2"], st["shortcut"]
    h = conv_bn_relu(x, c1, relu=True)                         # (Cout, N, Ho, Wo)
    p2, (N, Ho, Wo) = im2col_cnhw(h, c2["k"], c2["stride"], c2["pad"])
    cout = c2["cout"]
    M = N * Ho * Wo
    if sc is None:
        r = x.reshape(cout, M)                                 # identity shortcut (f32)
        out = pl.pallas_call(
            _conv_bn_add_relu_kernel,
            out_shape=jax.ShapeDtypeStruct((cout, M), jnp.float32),
        )(p2, c2["w_mat"], c2["gamma"], c2["beta"], r)
    else:
        s = sc["stride"]
        # 1x1 stride-s conv patches = strided subsample of the stage input
        psc = x[:, :, ::s, ::s].reshape(x.shape[0], M).astype(jnp.bfloat16)
        out = pl.pallas_call(
            _conv_bn_add_sc_kernel,
            out_shape=jax.ShapeDtypeStruct((cout, M), jnp.float32),
        )(p2, c2["w_mat"], c2["gamma"], c2["beta"],
          psc, sc["w_mat"], sc["gamma"], sc["beta"])
    return out.reshape(cout, N, Ho, Wo)


# ----------------------------------------------------------------------------
# Parameter construction (deterministic, synthetic)
# ----------------------------------------------------------------------------
def make_conv_params(key, cin, cout, k, stride, rank=2):
    ks = jax.random.split(key, 8)
    w_base = jax.random.normal(ks[0], (cout, cin, k, k), jnp.float32) * 0.2
    s_mask = jax.random.normal(ks[2], (cout, rank), jnp.float32) * 0.5
    r_mask = jax.random.normal(ks[3], (rank, cin * k * k), jnp.float32) * 0.5
    s_bias = jax.random.normal(ks[4], (cout, rank), jnp.float32) * 0.05
    r_bias = jax.random.normal(ks[5], (rank, cin * k * k), jnp.float32) * 0.05
    # TODO(synk): rankPerturb4_Conv2d source not provided; modeled as
    #   W_eff = W ⊙ reshape(S_mask @ R_mask) + reshape(S_bias @ R_bias)
    w_eff = w_base * (s_mask @ r_mask).reshape(cout, cin, k, k) + (
        s_bias @ r_bias
    ).reshape(cout, cin, k, k)
    # Conv bias is intentionally NOT used: BN with batch statistics cancels it.
    # OIHW -> (Cout, kh, kw, Cin) -> (Cout, k*k*Cin) matching patch row ordering
    w_mat = jnp.transpose(w_eff, (0, 2, 3, 1)).reshape(cout, k * k * cin)
    gamma = 1.0 + 0.1 * jax.random.normal(ks[6], (cout,), jnp.float32)
    beta = 0.1 * jax.random.normal(ks[7], (cout,), jnp.float32)
    return dict(
        w_mat=w_mat.astype(jnp.bfloat16),
        gamma=gamma.reshape(cout, 1).astype(jnp.float32),
        beta=beta.reshape(cout, 1).astype(jnp.float32),
        k=k,
        stride=stride,
        pad=1 if k == 3 else 0,
        cout=cout,
    )


def build_params(key, nf=4, out_dim=10, img_sz=16):
    params = {"block0": make_conv_params(jax.random.fold_in(key, 0), 3, nf, 3, 1)}
    # (cin, cout, stride, has_downsample_shortcut) per residual stage
    stage_cfg = [
        (nf, nf, 1, False),
        (nf, nf, 1, False),
        (nf, 2 * nf, 2, True),
        (2 * nf, 2 * nf, 1, False),
        (2 * nf, 4 * nf, 2, True),
        (4 * nf, 4 * nf, 1, False),
        (4 * nf, 8 * nf, 2, True),
        (8 * nf, 8 * nf, 1, False),
    ]
    stages = []
    for si, (cin, cout, stride, has_sc) in enumerate(stage_cfg):
        kb = jax.random.fold_in(key, 100 + si)
        stages.append(
            {
                "conv1": make_conv_params(jax.random.fold_in(kb, 1), cin, cout, 3, stride),
                "conv2": make_conv_params(jax.random.fold_in(kb, 2), cout, cout, 3, 1),
                "shortcut": (
                    make_conv_params(jax.random.fold_in(kb, 3), cin, cout, 1, stride)
                    if has_sc
                    else None
                ),
            }
        )
    params["stages"] = stages

    C = 8 * nf
    ss = img_sz // 16                  # spatial after the 2x2 average pool
    Hpre = img_sz // 8                 # spatial of the last stage (pre-pool)
    feat = C * ss * ss
    kh = jax.random.fold_in(key, 999)
    head_w = jax.random.normal(jax.random.fold_in(kh, 0), (out_dim, feat), jnp.float32) * 0.1
    head_b = jax.random.normal(jax.random.fold_in(kh, 1), (out_dim,), jnp.float32) * 0.1
    # Fold F.avg_pool2d(., 2) into the head weights: each pooled cell's weight is
    # replicated onto its 2x2 window with a 0.25 coefficient (NCHW flatten order).
    w4 = head_w.reshape(out_dim, C, ss, ss)
    w_exp = 0.25 * jnp.repeat(jnp.repeat(w4, 2, axis=2), 2, axis=3)  # (out, C, Hpre, Hpre)
    params["head_w_exp"] = w_exp.reshape(out_dim, C * Hpre * Hpre).T.astype(jnp.bfloat16)
    params["head_b"] = head_b.reshape(1, out_dim).astype(jnp.float32)
    return params


# ----------------------------------------------------------------------------
# Forward pass (mirrors rankPerturb4_Res18.forward)
# ----------------------------------------------------------------------------
def forward(params, x_nchw):
    x = jnp.transpose(x_nchw.astype(jnp.float32), (1, 0, 2, 3))  # NCHW -> CNHW
    out = conv_bn_relu(x, params["block0"], relu=True)           # conv, bn, relu
    for st in params["stages"]:
        out = stage_forward(out, st)
    # avg_pool2d(2) is folded into head_w_exp; flatten pre-pool act in NCHW order
    C, N, H, W = out.shape
    flat = jnp.transpose(out, (1, 0, 2, 3)).reshape(N, C * H * W).astype(jnp.bfloat16)
    out_dim = params["head_b"].shape[-1]
    return pl.pallas_call(
        _linear_kernel,
        out_shape=jax.ShapeDtypeStruct((N, out_dim), jnp.float32),
    )(flat, params["head_w_exp"], params["head_b"])


if __name__ == "__main__":
    key = jax.random.PRNGKey(0)
    nf, out_dim, img_sz, batch = 4, 10, 16, 2
    params = build_params(key, nf=nf, out_dim=out_dim, img_sz=img_sz)
    x = jax.random.normal(
        jax.random.fold_in(key, 1234), (batch, 3, img_sz, img_sz), jnp.float32
    )
    fwd = jax.jit(lambda xx: forward(params, xx))
    y = jax.block_until_ready(fwd(x))
    assert y.shape == (batch, out_dim), y.shape
    assert bool(jnp.all(jnp.isfinite(y)))
    print("KERNEL_OK")
</pallas_src>

<mosaic_0001>
module attributes {stable_mosaic.version = 11 : i64} {
  func.func @_conv_bn_kernel(%arg0: memref<27x512xbf16, #tpu.memory_space<vmem>>, %arg1: memref<4x27xbf16, #tpu.memory_space<vmem>>, %arg2: memref<4x1xf32, #tpu.memory_space<vmem>>, %arg3: memref<4x1xf32, #tpu.memory_space<vmem>>, %arg4: memref<4x512xf32, #tpu.memory_space<vmem>>) attributes {dimension_semantics = [], scalar_prefetch = 0 : i64, scratch_operands = 0 : i64, tpu.core_type = #tpu.core_type<tc>} {
    %c0 = arith.constant 0 : index
    %c0_0 = arith.constant 0 : index
    %0 = vector.load %arg1[%c0, %c0_0] : memref<4x27xbf16, #tpu.memory_space<vmem>>, vector<4x27xbf16>
    %c0_1 = arith.constant 0 : index
    %c0_2 = arith.constant 0 : index
    %1 = vector.load %arg0[%c0_1, %c0_2] : memref<27x512xbf16, #tpu.memory_space<vmem>>, vector<27x512xbf16>
    %cst = arith.constant dense<0.000000e+00> : vector<4x512xf32>
    %2 = tpu.matmul %0, %1, %cst {dimension_numbers = #tpu.dot_dimension_numbers<[1], [0], [0], [1], [0, 0, 1, 1], [], []>} : vector<4x27xbf16>, vector<27x512xbf16>, vector<4x512xf32> -> vector<4x512xf32>
    %c0_3 = arith.constant 0 : index
    %c0_4 = arith.constant 0 : index
    %3 = vector.load %arg2[%c0_3, %c0_4] : memref<4x1xf32, #tpu.memory_space<vmem>>, vector<4x1xf32>
    %c0_5 = arith.constant 0 : index
    %c0_6 = arith.constant 0 : index
    %4 = vector.load %arg3[%c0_5, %c0_6] : memref<4x1xf32, #tpu.memory_space<vmem>>, vector<4x1xf32>
    %cst_7 = arith.constant dense<0.000000e+00> : vector<4xf32>
    %5 = vector.multi_reduction <add>, %2, %cst_7 [1] : vector<4x512xf32> to vector<4xf32>
    %6 = vector.shape_cast %5 : vector<4xf32> to vector<4x1xf32>
    %cst_8 = arith.constant 5.120000e+02 : f32
    %7 = vector.broadcast %cst_8 : f32 to vector<4x1xf32>
    %8 = arith.divf %6, %7 : vector<4x1xf32>
    %9 = arith.mulf %2, %2 : vector<4x512xf32>
    %cst_9 = arith.constant dense<0.000000e+00> : vector<4xf32>
    %10 = vector.multi_reduction <add>, %9, %cst_9 [1] : vector<4x512xf32> to vector<4xf32>
    %11 = vector.shape_cast %10 : vector<4xf32> to vector<4x1xf32>
    %cst_10 = arith.constant 5.120000e+02 : f32
    %12 = vector.broadcast %cst_10 : f32 to vector<4x1xf32>
    %13 = arith.divf %11, %12 : vector<4x1xf32>
    %14 = arith.mulf %8, %8 : vector<4x1xf32>
    %15 = arith.subf %13, %14 : vector<4x1xf32>
    %cst_11 = arith.constant 0.000000e+00 : f32
    %16 = vector.broadcast %cst_11 : f32 to vector<4x1xf32>
    %17 = arith.maximumf %15, %16 : vector<4x1xf32>
    %cst_12 = arith.constant 9.99999974E-6 : f32
    %18 = vector.broadcast %cst_12 : f32 to vector<4x1xf32>
    %19 = arith.addf %17, %18 : vector<4x1xf32>
    %20 = math.rsqrt %19 : vector<4x1xf32>
    %21 = arith.mulf %3, %20 : vector<4x1xf32>
    %22 = arith.mulf %8, %21 : vector<4x1xf32>
    %23 = arith.subf %4, %22 : vector<4x1xf32>
    %24 = vector.broadcast %21 : vector<4x1xf32> to vector<4x512xf32>
    %25 = arith.mulf %2, %24 : vector<4x512xf32>
    %26 = vector.broadcast %23 : vector<4x1xf32> to vector<4x512xf32>
    %27 = arith.addf %25, %26 : vector<4x512xf32>
    %cst_13 = arith.constant 0.000000e+00 : f32
    %28 = vector.broadcast %cst_13 : f32 to vector<4x512xf32>
    %29 = arith.maximumf %27, %28 : vector<4x512xf32>
    %c0_14 = arith.constant 0 : index
    %c0_15 = arith.constant 0 : index
    %30 = vector.load %arg4[%c0_14, %c0_15] : memref<4x512xf32, #tpu.memory_space<vmem>>, vector<4x512xf32>
    tpu.vector_store %arg4[%c0_14, %c0_15], %29 {strides = array<i32>} : memref<4x512xf32, #tpu.memory_space<vmem>>, vector<4x512xf32>,
    return
  }
}

module attributes {stable_mosaic.version = 11 : i64} {
  func.func @_conv_bn_kernel(%arg0: memref<36x512xbf16, #tpu.memory_space<vmem>>, %arg1: memref<4x36xbf16, #tpu.memory_space<vmem>>, %arg2: memref<4x1xf32, #tpu.memory_space<vmem>>, %arg3: memref<4x1xf32, #tpu.memory_space<vmem>>, %arg4: memref<4x512xf32, #tpu.memory_space<vmem>>) attributes {dimension_semantics = [], scalar_prefetch = 0 : i64, scratch_operands = 0 : i64, tpu.core_type = #tpu.core_type<tc>} {
    %c0 = arith.constant 0 : index
    %c0_0 = arith.constant 0 : index
    %0 = vector.load %arg1[%c0, %c0_0] : memref<4x36xbf16, #tpu.memory_space<vmem>>, vector<4x36xbf16>
    %c0_1 = arith.constant 0 : index
    %c0_2 = arith.constant 0 : index
    %1 = vector.load %arg0[%c0_1, %c0_2] : memref<36x512xbf16, #tpu.memory_space<vmem>>, vector<36x512xbf16>
    %cst = arith.constant dense<0.000000e+00> : vector<4x512xf32>
    %2 = tpu.matmul %0, %1, %cst {dimension_numbers = #tpu.dot_dimension_numbers<[1], [0], [0], [1], [0, 0, 1, 1], [], []>} : vector<4x36xbf16>, vector<36x512xbf16>, vector<4x512xf32> -> vector<4x512xf32>
    %c0_3 = arith.constant 0 : index
    %c0_4 = arith.constant 0 : index
    %3 = vector.load %arg2[%c0_3, %c0_4] : memref<4x1xf32, #tpu.memory_space<vmem>>, vector<4x1xf32>
    %c0_5 = arith.constant 0 : index
    %c0_6 = arith.constant 0 : index
    %4 = vector.load %arg3[%c0_5, %c0_6] : memref<4x1xf32, #tpu.memory_space<vmem>>, vector<4x1xf32>
    %cst_7 = arith.constant dense<0.000000e+00> : vector<4xf32>
    %5 = vector.multi_reduction <add>, %2, %cst_7 [1] : vector<4x512xf32> to vector<4xf32>
    %6 = vector.shape_cast %5 : vector<4xf32> to vector<4x1xf32>
    %cst_8 = arith.constant 5.120000e+02 : f32
    %7 = vector.broadcast %cst_8 : f32 to vector<4x1xf32>
    %8 = arith.divf %6, %7 : vector<4x1xf32>
    %9 = arith.mulf %2, %2 : vector<4x512xf32>
    %cst_9 = arith.constant dense<0.000000e+00> : vector<4xf32>
    %10 = vector.multi_reduction <add>, %9, %cst_9 [1] : vector<4x512xf32> to vector<4xf32>
    %11 = vector.shape_cast %10 : vector<4xf32> to vector<4x1xf32>
    %cst_10 = arith.constant 5.120000e+02 : f32
    %12 = vector.broadcast %cst_10 : f32 to vector<4x1xf32>
    %13 = arith.divf %11, %12 : vector<4x1xf32>
    %14 = arith.mulf %8, %8 : vector<4x1xf32>
    %15 = arith.subf %13, %14 : vector<4x1xf32>
    %cst_11 = arith.constant 0.000000e+00 : f32
    %16 = vector.broadcast %cst_11 : f32 to vector<4x1xf32>
    %17 = arith.maximumf %15, %16 : vector<4x1xf32>
    %cst_12 = arith.constant 9.99999974E-6 : f32
    %18 = vector.broadcast %cst_12 : f32 to vector<4x1xf32>
    %19 = arith.addf %17, %18 : vector<4x1xf32>
    %20 = math.rsqrt %19 : vector<4x1xf32>
    %21 = arith.mulf %3, %20 : vector<4x1xf32>
    %22 = arith.mulf %8, %21 : vector<4x1xf32>
    %23 = arith.subf %4, %22 : vector<4x1xf32>
    %24 = vector.broadcast %21 : vector<4x1xf32> to vector<4x512xf32>
    %25 = arith.mulf %2, %24 : vector<4x512xf32>
    %26 = vector.broadcast %23 : vector<4x1xf32> to vector<4x512xf32>
    %27 = arith.addf %25, %26 : vector<4x512xf32>
    %cst_13 = arith.constant 0.000000e+00 : f32
    %28 = vector.broadcast %cst_13 : f32 to vector<4x512xf32>
    %29 = arith.maximumf %27, %28 : vector<4x512xf32>
    %c0_14 = arith.constant 0 : index
    %c0_15 = arith.constant 0 : index
    %30 = vector.load %arg4[%c0_14, %c0_15] : memref<4x512xf32, #tpu.memory_space<vmem>>, vector<4x512xf32>
    tpu.vector_store %arg4[%c0_14, %c0_15], %29 {strides = array<i32>} : memref<4x512xf32, #tpu.memory_space<vmem>>, vector<4x512xf32>,
    return
  }
}

module attributes {stable_mosaic.version = 11 : i64} {
  func.func @_conv_bn_add_relu_kernel(%arg0: memref<36x512xbf16, #tpu.memory_space<vmem>>, %arg1: memref<4x36xbf16, #tpu.memory_space<vmem>>, %arg2: memref<4x1xf32, #tpu.memory_space<vmem>>, %arg3: memref<4x1xf32, #tpu.memory_space<vmem>>, %arg4: memref<4x512xf32, #tpu.memory_space<vmem>>, %arg5: memref<4x512xf32, #tpu.memory_space<vmem>>) attributes {dimension_semantics = [], scalar_prefetch = 0 : i64, scratch_operands = 0 : i64, tpu.core_type = #tpu.core_type<tc>} {
    %c0 = arith.constant 0 : index
    %c0_0 = arith.constant 0 : index
    %0 = vector.load %arg1[%c0, %c0_0] : memref<4x36xbf16, #tpu.memory_space<vmem>>, vector<4x36xbf16>
    %c0_1 = arith.constant 0 : index
    %c0_2 = arith.constant 0 : index
    %1 = vector.load %arg0[%c0_1, %c0_2] : memref<36x512xbf16, #tpu.memory_space<vmem>>, vector<36x512xbf16>
    %cst = arith.constant dense<0.000000e+00> : vector<4x512xf32>
    %2 = tpu.matmul %0, %1, %cst {dimension_numbers = #tpu.dot_dimension_numbers<[1], [0], [0], [1], [0, 0, 1, 1], [], []>} : vector<4x36xbf16>, vector<36x512xbf16>, vector<4x512xf32> -> vector<4x512xf32>
    %c0_3 = arith.constant 0 : index
    %c0_4 = arith.constant 0 : index
    %3 = vector.load %arg2[%c0_3, %c0_4] : memref<4x1xf32, #tpu.memory_space<vmem>>, vector<4x1xf32>
    %c0_5 = arith.constant 0 : index
    %c0_6 = arith.constant 0 : index
    %4 = vector.load %arg3[%c0_5, %c0_6] : memref<4x1xf32, #tpu.memory_space<vmem>>, vector<4x1xf32>
    %cst_7 = arith.constant dense<0.000000e+00> : vector<4xf32>
    %5 = vector.multi_reduction <add>, %2, %cst_7 [1] : vector<4x512xf32> to vector<4xf32>
    %6 = vector.shape_cast %5 : vector<4xf32> to vector<4x1xf32>
    %cst_8 = arith.constant 5.120000e+02 : f32
    %7 = vector.broadcast %cst_8 : f32 to vector<4x1xf32>
    %8 = arith.divf %6, %7 : vector<4x1xf32>
    %9 = arith.mulf %2, %2 : vector<4x512xf32>
    %cst_9 = arith.constant dense<0.000000e+00> : vector<4xf32>
    %10 = vector.multi_reduction <add>, %9, %cst_9 [1] : vector<4x512xf32> to vector<4xf32>
    %11 = vector.shape_cast %10 : vector<4xf32> to vector<4x1xf32>
    %cst_10 = arith.constant 5.120000e+02 : f32
    %12 = vector.broadcast %cst_10 : f32 to vector<4x1xf32>
    %13 = arith.divf %11, %12 : vector<4x1xf32>
    %14 = arith.mulf %8, %8 : vector<4x1xf32>
    %15 = arith.subf %13, %14 : vector<4x1xf32>
    %cst_11 = arith.constant 0.000000e+00 : f32
    %16 = vector.broadcast %cst_11 : f32 to vector<4x1xf32>
    %17 = arith.maximumf %15, %16 : vector<4x1xf32>
    %cst_12 = arith.constant 9.99999974E-6 : f32
    %18 = vector.broadcast %cst_12 : f32 to vector<4x1xf32>
    %19 = arith.addf %17, %18 : vector<4x1xf32>
    %20 = math.rsqrt %19 : vector<4x1xf32>
    %21 = arith.mulf %3, %20 : vector<4x1xf32>
    %22 = arith.mulf %8, %21 : vector<4x1xf32>
    %23 = arith.subf %4, %22 : vector<4x1xf32>
    %24 = vector.broadcast %21 : vector<4x1xf32> to vector<4x512xf32>
    %25 = arith.mulf %2, %24 : vector<4x512xf32>
    %26 = vector.broadcast %23 : vector<4x1xf32> to vector<4x512xf32>
    %27 = arith.addf %25, %26 : vector<4x512xf32>
    %c0_13 = arith.constant 0 : index
    %c0_14 = arith.constant 0 : index
    %28 = vector.load %arg4[%c0_13, %c0_14] : memref<4x512xf32, #tpu.memory_space<vmem>>, vector<4x512xf32>
    %29 = arith.addf %27, %28 : vector<4x512xf32>
    %cst_15 = arith.constant 0.000000e+00 : f32
    %30 = vector.broadcast %cst_15 : f32 to vector<4x512xf32>
    %31 = arith.maximumf %29, %30 : vector<4x512xf32>
    %c0_16 = arith.constant 0 : index
    %c0_17 = arith.constant 0 : index
    %32 = vector.load %arg5[%c0_16, %c0_17] : memref<4x512xf32, #tpu.memory_space<vmem>>, vector<4x512xf32>
    tpu.vector_store %arg5[%c0_16, %c0_17], %31 {strides = array<i32>} : memref<4x512xf32, #tpu.memory_space<vmem>>, vector<4x512xf32>,
    return
  }
}

module attributes {stable_mosaic.version = 11 : i64} {
  func.func @_conv_bn_kernel(%arg0: memref<36x128xbf16, #tpu.memory_space<vmem>>, %arg1: memref<8x36xbf16, #tpu.memory_space<vmem>>, %arg2: memref<8x1xf32, #tpu.memory_space<vmem>>, %arg3: memref<8x1xf32, #tpu.memory_space<vmem>>, %arg4: memref<8x128xf32, #tpu.memory_space<vmem>>) attributes {dimension_semantics = [], scalar_prefetch = 0 : i64, scratch_operands = 0 : i64, tpu.core_type = #tpu.core_type<tc>} {
    %c0 = arith.constant 0 : index
    %c0_0 = arith.constant 0 : index
    %0 = vector.load %arg1[%c0, %c0_0] : memref<8x36xbf16, #tpu.memory_space<vmem>>, vector<8x36xbf16>
    %c0_1 = arith.constant 0 : index
    %c0_2 = arith.constant 0 : index
    %1 = vector.load %arg0[%c0_1, %c0_2] : memref<36x128xbf16, #tpu.memory_space<vmem>>, vector<36x128xbf16>
    %cst = arith.constant dense<0.000000e+00> : vector<8x128xf32>
    %2 = tpu.matmul %0, %1, %cst {dimension_numbers = #tpu.dot_dimension_numbers<[1], [0], [0], [1], [0, 0, 1, 1], [], []>} : vector<8x36xbf16>, vector<36x128xbf16>, vector<8x128xf32> -> vector<8x128xf32>
    %c0_3 = arith.constant 0 : index
    %c0_4 = arith.constant 0 : index
    %3 = vector.load %arg2[%c0_3, %c0_4] : memref<8x1xf32, #tpu.memory_space<vmem>>, vector<8x1xf32>
    %c0_5 = arith.constant 0 : index
    %c0_6 = arith.constant 0 : index
    %4 = vector.load %arg3[%c0_5, %c0_6] : memref<8x1xf32, #tpu.memory_space<vmem>>, vector<8x1xf32>
    %cst_7 = arith.constant dense<0.000000e+00> : vector<8xf32>
    %5 = vector.multi_reduction <add>, %2, %cst_7 [1] : vector<8x128xf32> to vector<8xf32>
    %6 = vector.shape_cast %5 : vector<8xf32> to vector<8x1xf32>
    %cst_8 = arith.constant 1.280000e+02 : f32
    %7 = vector.broadcast %cst_8 : f32 to vector<8x1xf32>
    %8 = arith.divf %6, %7 : vector<8x1xf32>
    %9 = arith.mulf %2, %2 : vector<8x128xf32>
    %cst_9 = arith.constant dense<0.000000e+00> : vector<8xf32>
    %10 = vector.multi_reduction <add>, %9, %cst_9 [1] : vector<8x128xf32> to vector<8xf32>
    %11 = vector.shape_cast %10 : vector<8xf32> to vector<8x1xf32>
    %cst_10 = arith.constant 1.280000e+02 : f32
    %12 = vector.broadcast %cst_10 : f32 to vector<8x1xf32>
    %13 = arith.divf %11, %12 : vector<8x1xf32>
    %14 = arith.mulf %8, %8 : vector<8x1xf32>
    %15 = arith.subf %13, %14 : vector<8x1xf32>
    %cst_11 = arith.constant 0.000000e+00 : f32
    %16 = vector.broadcast %cst_11 : f32 to vector<8x1xf32>
    %17 = arith.maximumf %15, %16 : vector<8x1xf32>
    %cst_12 = arith.constant 9.99999974E-6 : f32
    %18 = vector.broadcast %cst_12 : f32 to vector<8x1xf32>
    %19 = arith.addf %17, %18 : vector<8x1xf32>
    %20 = math.rsqrt %19 : vector<8x1xf32>
    %21 = arith.mulf %3, %20 : vector<8x1xf32>
    %22 = arith.mulf %8, %21 : vector<8x1xf32>
    %23 = arith.subf %4, %22 : vector<8x1xf32>
    %24 = vector.broadcast %21 : vector<8x1xf32> to vector<8x128xf32>
    %25 = arith.mulf %2, %24 : vector<8x128xf32>
    %26 = vector.broadcast %23 : vector<8x1xf32> to vector<8x128xf32>
    %27 = arith.addf %25, %26 : vector<8x128xf32>
    %cst_13 = arith.constant 0.000000e+00 : f32
    %28 = vector.broadcast %cst_13 : f32 to vector<8x128xf32>
    %29 = arith.maximumf %27, %28 : vector<8x128xf32>
    %c0_14 = arith.constant 0 : index
    %c0_15 = arith.constant 0 : index
    %30 = vector.load %arg4[%c0_14, %c0_15] : memref<8x128xf32, #tpu.memory_space<vmem>>, vector<8x128xf32>
    tpu.vector_store %arg4[%c0_14, %c0_15], %29 {strides = array<i32>} : memref<8x128xf32, #tpu.memory_space<vmem>>, vector<8x128xf32>,
    return
  }
}

module attributes {stable_mosaic.version = 11 : i64} {
  func.func @_conv_bn_add_relu_kernel(%arg0: memref<72x128xbf16, #tpu.memory_space<vmem>>, %arg1: memref<8x72xbf16, #tpu.memory_space<vmem>>, %arg2: memref<8x1xf32, #tpu.memory_space<vmem>>, %arg3: memref<8x1xf32, #tpu.memory_space<vmem>>, %arg4: memref<8x128xf32, #tpu.memory_space<vmem>>, %arg5: memref<8x128xf32, #tpu.memory_space<vmem>>) attributes {dimension_semantics = [], scalar_prefetch = 0 : i64, scratch_operands = 0 : i64, tpu.core_type = #tpu.core_type<tc>} {
    %c0 = arith.constant 0 : index
    %c0_0 = arith.constant 0 : index
    %0 = vector.load %arg1[%c0, %c0_0] : memref<8x72xbf16, #tpu.memory_space<vmem>>, vector<8x72xbf16>
    %c0_1 = arith.constant 0 : index
    %c0_2 = arith.constant 0 : index
    %1 = vector.load %arg0[%c0_1, %c0_2] : memref<72x128xbf16, #tpu.memory_space<vmem>>, vector<72x128xbf16>
    %cst = arith.constant dense<0.000000e+00> : vector<8x128xf32>
    %2 = tpu.matmul %0, %1, %cst {dimension_numbers = #tpu.dot_dimension_numbers<[1], [0], [0], [1], [0, 0, 1, 1], [], []>} : vector<8x72xbf16>, vector<72x128xbf16>, vector<8x128xf32> -> vector<8x128xf32>
    %c0_3 = arith.constant 0 : index
    %c0_4 = arith.constant 0 : index
    %3 = vector.load %arg2[%c0_3, %c0_4] : memref<8x1xf32, #tpu.memory_space<vmem>>, vector<8x1xf32>
    %c0_5 = arith.constant 0 : index
    %c0_6 = arith.constant 0 : index
    %4 = vector.load %arg3[%c0_5, %c0_6] : memref<8x1xf32, #tpu.memory_space<vmem>>, vector<8x1xf32>
    %cst_7 = arith.constant dense<0.000000e+00> : vector<8xf32>
    %5 = vector.multi_reduction <add>, %2, %cst_7 [1] : vector<8x128xf32> to vector<8xf32>
    %6 = vector.shape_cast %5 : vector<8xf32> to vector<8x1xf32>
    %cst_8 = arith.constant 1.280000e+02 : f32
    %7 = vector.broadcast %cst_8 : f32 to vector<8x1xf32>
    %8 = arith.divf %6, %7 : vector<8x1xf32>
    %9 = arith.mulf %2, %2 : vector<8x128xf32>
    %cst_9 = arith.constant dense<0.000000e+00> : vector<8xf32>
    %10 = vector.multi_reduction <add>, %9, %cst_9 [1] : vector<8x128xf32> to vector<8xf32>
    %11 = vector.shape_cast %10 : vector<8xf32> to vector<8x1xf32>
    %cst_10 = arith.constant 1.280000e+02 : f32
    %12 = vector.broadcast %cst_10 : f32 to vector<8x1xf32>
    %13 = arith.divf %11, %12 : vector<8x1xf32>
    %14 = arith.mulf %8, %8 : vector<8x1xf32>
    %15 = arith.subf %13, %14 : vector<8x1xf32>
    %cst_11 = arith.constant 0.000000e+00 : f32
    %16 = vector.broadcast %cst_11 : f32 to vector<8x1xf32>
    %17 = arith.maximumf %15, %16 : vector<8x1xf32>
    %cst_12 = arith.constant 9.99999974E-6 : f32
    %18 = vector.broadcast %cst_12 : f32 to vector<8x1xf32>
    %19 = arith.addf %17, %18 : vector<8x1xf32>
    %20 = math.rsqrt %19 : vector<8x1xf32>
    %21 = arith.mulf %3, %20 : vector<8x1xf32>
    %22 = arith.mulf %8, %21 : vector<8x1xf32>
    %23 = arith.subf %4, %22 : vector<8x1xf32>
    %24 = vector.broadcast %21 : vector<8x1xf32> to vector<8x128xf32>
    %25 = arith.mulf %2, %24 : vector<8x128xf32>
    %26 = vector.broadcast %23 : vector<8x1xf32> to vector<8x128xf32>
    %27 = arith.addf %25, %26 : vector<8x128xf32>
    %c0_13 = arith.constant 0 : index
    %c0_14 = arith.constant 0 : index
    %28 = vector.load %arg4[%c0_13, %c0_14] : memref<8x128xf32, #tpu.memory_space<vmem>>, vector<8x128xf32>
    %29 = arith.addf %27, %28 : vector<8x128xf32>
    %cst_15 = arith.constant 0.000000e+00 : f32
    %30 = vector.broadcast %cst_15 : f32 to vector<8x128xf32>
    %31 = arith.maximumf %29, %30 : vector<8x128xf32>
    %c0_16 = arith.constant 0 : index
    %c0_17 = arith.constant 0 : index
    %32 = vector.load %arg5[%c0_16, %c0_17] : memref<8x128xf32, #tpu.memory_space<vmem>>, vector<8x128xf32>
    tpu.vector_store %arg5[%c0_16, %c0_17], %31 {strides = array<i32>} : memref<8x128xf32, #tpu.memory_space<vmem>>, vector<8x128xf32>,
    return
  }
}

module attributes {stable_mosaic.version = 11 : i64} {
  func.func @_conv_bn_add_sc_kernel(%arg0: memref<72x128xbf16, #tpu.memory_space<vmem>>, %arg1: memref<8x72xbf16, #tpu.memory_space<vmem>>, %arg2: memref<8x1xf32, #tpu.memory_space<vmem>>, %arg3: memref<8x1xf32, #tpu.memory_space<vmem>>, %arg4: memref<4x128xbf16, #tpu.memory_space<vmem>>, %arg5: memref<8x4xbf16, #tpu.memory_space<vmem>>, %arg6: memref<8x1xf32, #tpu.memory_space<vmem>>, %arg7: memref<8x1xf32, #tpu.memory_space<vmem>>, %arg8: memref<8x128xf32, #tpu.memory_space<vmem>>) attributes {dimension_semantics = [], scalar_prefetch = 0 : i64, scratch_operands = 0 : i64, tpu.core_type = #tpu.core_type<tc>} {
    %c0 = arith.constant 0 : index
    %c0_0 = arith.constant 0 : index
    %0 = vector.load %arg1[%c0, %c0_0] : memref<8x72xbf16, #tpu.memory_space<vmem>>, vector<8x72xbf16>
    %c0_1 = arith.constant 0 : index
    %c0_2 = arith.constant 0 : index
    %1 = vector.load %arg0[%c0_1, %c0_2] : memref<72x128xbf16, #tpu.memory_space<vmem>>, vector<72x128xbf16>
    %cst = arith.constant dense<0.000000e+00> : vector<8x128xf32>
    %2 = tpu.matmul %0, %1, %cst {dimension_numbers = #tpu.dot_dimension_numbers<[1], [0], [0], [1], [0, 0, 1, 1], [], []>} : vector<8x72xbf16>, vector<72x128xbf16>, vector<8x128xf32> -> vector<8x128xf32>
    %c0_3 = arith.constant 0 : index
    %c0_4 = arith.constant 0 : index
    %3 = vector.load %arg5[%c0_3, %c0_4] : memref<8x4xbf16, #tpu.memory_space<vmem>>, vector<8x4xbf16>
    %c0_5 = arith.constant 0 : index
    %c0_6 = arith.constant 0 : index
    %4 = vector.load %arg4[%c0_5, %c0_6] : memref<4x128xbf16, #tpu.memory_space<vmem>>, vector<4x128xbf16>
    %cst_7 = arith.constant dense<0.000000e+00> : vector<8x128xf32>
    %5 = tpu.matmul %3, %4, %cst_7 {dimension_numbers = #tpu.dot_dimension_numbers<[1], [0], [0], [1], [0, 0, 1, 1], [], []>} : vector<8x4xbf16>, vector<4x128xbf16>, vector<8x128xf32> -> vector<8x128xf32>
    %c0_8 = arith.constant 0 : index
    %c0_9 = arith.constant 0 : index
    %6 = vector.load %arg2[%c0_8, %c0_9] : memref<8x1xf32, #tpu.memory_space<vmem>>, vector<8x1xf32>
    %c0_10 = arith.constant 0 : index
    %c0_11 = arith.constant 0 : index
    %7 = vector.load %arg3[%c0_10, %c0_11] : memref<8x1xf32, #tpu.memory_space<vmem>>, vector<8x1xf32>
    %cst_12 = arith.constant dense<0.000000e+00> : vector<8xf32>
    %8 = vector.multi_reduction <add>, %2, %cst_12 [1] : vector<8x128xf32> to vector<8xf32>
    %9 = vector.shape_cast %8 : vector<8xf32> to vector<8x1xf32>
    %cst_13 = arith.constant 1.280000e+02 : f32
    %10 = vector.broadcast %cst_13 : f32 to vector<8x1xf32>
    %11 = arith.divf %9, %10 : vector<8x1xf32>
    %12 = arith.mulf %2, %2 : vector<8x128xf32>
    %cst_14 = arith.constant dense<0.000000e+00> : vector<8xf32>
    %13 = vector.multi_reduction <add>, %12, %cst_14 [1] : vector<8x128xf32> to vector<8xf32>
    %14 = vector.shape_cast %13 : vector<8xf32> to vector<8x1xf32>
    %cst_15 = arith.constant 1.280000e+02 : f32
    %15 = vector.broadcast %cst_15 : f32 to vector<8x1xf32>
    %16 = arith.divf %14, %15 : vector<8x1xf32>
    %17 = arith.mulf %11, %11 : vector<8x1xf32>
    %18 = arith.subf %16, %17 : vector<8x1xf32>
    %cst_16 = arith.constant 0.000000e+00 : f32
    %19 = vector.broadcast %cst_16 : f32 to vector<8x1xf32>
    %20 = arith.maximumf %18, %19 : vector<8x1xf32>
    %cst_17 = arith.constant 9.99999974E-6 : f32
    %21 = vector.broadcast %cst_17 : f32 to vector<8x1xf32>
    %22 = arith.addf %20, %21 : vector<8x1xf32>
    %23 = math.rsqrt %22 : vector<8x1xf32>
    %24 = arith.mulf %6, %23 : vector<8x1xf32>
    %25 = arith.mulf %11, %24 : vector<8x1xf32>
    %26 = arith.subf %7, %25 : vector<8x1xf32>
    %27 = vector.broadcast %24 : vector<8x1xf32> to vector<8x128xf32>
    %28 = arith.mulf %2, %27 : vector<8x128xf32>
    %29 = vector.broadcast %26 : vector<8x1xf32> to vector<8x128xf32>
    %30 = arith.addf %28, %29 : vector<8x128xf32>
    %c0_18 = arith.constant 0 : index
    %c0_19 = arith.constant 0 : index
    %31 = vector.load %arg6[%c0_18, %c0_19] : memref<8x1xf32, #tpu.memory_space<vmem>>, vector<8x1xf32>
    %c0_20 = arith.constant 0 : index
    %c0_21 = arith.constant 0 : index
    %32 = vector.load %arg7[%c0_20, %c0_21] : memref<8x1xf32, #tpu.memory_space<vmem>>, vector<8x1xf32>
    %cst_22 = arith.constant dense<0.000000e+00> : vector<8xf32>
    %33 = vector.multi_reduction <add>, %5, %cst_22 [1] : vector<8x128xf32> to vector<8xf32>
    %34 = vector.shape_cast %33 : vector<8xf32> to vector<8x1xf32>
    %cst_23 = arith.constant 1.280000e+02 : f32
    %35 = vector.broadcast %cst_23 : f32 to vector<8x1xf32>
    %36 = arith.divf %34, %35 : vector<8x1xf32>
    %37 = arith.mulf %5, %5 : vector<8x128xf32>
    %cst_24 = arith.constant dense<0.000000e+00> : vector<8xf32>
    %38 = vector.multi_reduction <add>, %37, %cst_24 [1] : vector<8x128xf32> to vector<8xf32>
    %39 = vector.shape_cast %38 : vector<8xf32> to vector<8x1xf32>
    %cst_25 = arith.constant 1.280000e+02 : f32
    %40 = vector.broadcast %cst_25 : f32 to vector<8x1xf32>
    %41 = arith.divf %39, %40 : vector<8x1xf32>
    %42 = arith.mulf %36, %36 : vector<8x1xf32>
    %43 = arith.subf %41, %42 : vector<8x1xf32>
    %cst_26 = arith.constant 0.000000e+00 : f32
    %44 = vector.broadcast %cst_26 : f32 to vector<8x1xf32>
    %45 = arith.maximumf %43, %44 : vector<8x1xf32>
    %cst_27 = arith.constant 9.99999974E-6 : f32
    %46 = vector.broadcast %cst_27 : f32 to vector<8x1xf32>
    %47 = arith.addf %45, %46 : vector<8x1xf32>
    %48 = math.rsqrt %47 : vector<8x1xf32>
    %49 = arith.mulf %31, %48 : vector<8x1xf32>
    %50 = arith.mulf %36, %49 : vector<8x1xf32>
    %51 = arith.subf %32, %50 : vector<8x1xf32>
    %52 = vector.broadcast %49 : vector<8x1xf32> to vector<8x128xf32>
    %53 = arith.mulf %5, %52 : vector<8x128xf32>
    %54 = vector.broadcast %51 : vector<8x1xf32> to vector<8x128xf32>
    %55 = arith.addf %53, %54 : vector<8x128xf32>
    %56 = arith.addf %30, %55 : vector<8x128xf32>
    %cst_28 = arith.constant 0.000000e+00 : f32
    %57 = vector.broadcast %cst_28 : f32 to vector<8x128xf32>
    %58 = arith.maximumf %56, %57 : vector<8x128xf32>
    %c0_29 = arith.constant 0 : index
    %c0_30 = arith.constant 0 : index
    %59 = vector.load %arg8[%c0_29, %c0_30] : memref<8x128xf32, #tpu.memory_space<vmem>>, vector<8x128xf32>
    tpu.vector_store %arg8[%c0_29, %c0_30], %58 {strides = array<i32>} : memref<8x128xf32, #tpu.memory_space<vmem>>, vector<8x128xf32>,
    return
  }
}

module attributes {stable_mosaic.version = 11 : i64} {
  func.func @_conv_bn_kernel(%arg0: memref<72x128xbf16, #tpu.memory_space<vmem>>, %arg1: memref<8x72xbf16, #tpu.memory_space<vmem>>, %arg2: memref<8x1xf32, #tpu.memory_space<vmem>>, %arg3: memref<8x1xf32, #tpu.memory_space<vmem>>, %arg4: memref<8x128xf32, #tpu.memory_space<vmem>>) attributes {dimension_semantics = [], scalar_prefetch = 0 : i64, scratch_operands = 0 : i64, tpu.core_type = #tpu.core_type<tc>} {
    %c0 = arith.constant 0 : index
    %c0_0 = arith.constant 0 : index
    %0 = vector.load %arg1[%c0, %c0_0] : memref<8x72xbf16, #tpu.memory_space<vmem>>, vector<8x72xbf16>
    %c0_1 = arith.constant 0 : index
    %c0_2 = arith.constant 0 : index
    %1 = vector.load %arg0[%c0_1, %c0_2] : memref<72x128xbf16, #tpu.memory_space<vmem>>, vector<72x128xbf16>
    %cst = arith.constant dense<0.000000e+00> : vector<8x128xf32>
    %2 = tpu.matmul %0, %1, %cst {dimension_numbers = #tpu.dot_dimension_numbers<[1], [0], [0], [1], [0, 0, 1, 1], [], []>} : vector<8x72xbf16>, vector<72x128xbf16>, vector<8x128xf32> -> vector<8x128xf32>
    %c0_3 = arith.constant 0 : index
    %c0_4 = arith.constant 0 : index
    %3 = vector.load %arg2[%c0_3, %c0_4] : memref<8x1xf32, #tpu.memory_space<vmem>>, vector<8x1xf32>
    %c0_5 = arith.constant 0 : index
    %c0_6 = arith.constant 0 : index
    %4 = vector.load %arg3[%c0_5, %c0_6] : memref<8x1xf32, #tpu.memory_space<vmem>>, vector<8x1xf32>
    %cst_7 = arith.constant dense<0.000000e+00> : vector<8xf32>
    %5 = vector.multi_reduction <add>, %2, %cst_7 [1] : vector<8x128xf32> to vector<8xf32>
    %6 = vector.shape_cast %5 : vector<8xf32> to vector<8x1xf32>
    %cst_8 = arith.constant 1.280000e+02 : f32
    %7 = vector.broadcast %cst_8 : f32 to vector<8x1xf32>
    %8 = arith.divf %6, %7 : vector<8x1xf32>
    %9 = arith.mulf %2, %2 : vector<8x128xf32>
    %cst_9 = arith.constant dense<0.000000e+00> : vector<8xf32>
    %10 = vector.multi_reduction <add>, %9, %cst_9 [1] : vector<8x128xf32> to vector<8xf32>
    %11 = vector.shape_cast %10 : vector<8xf32> to vector<8x1xf32>
    %cst_10 = arith.constant 1.280000e+02 : f32
    %12 = vector.broadcast %cst_10 : f32 to vector<8x1xf32>
    %13 = arith.divf %11, %12 : vector<8x1xf32>
    %14 = arith.mulf %8, %8 : vector<8x1xf32>
    %15 = arith.subf %13, %14 : vector<8x1xf32>
    %cst_11 = arith.constant 0.000000e+00 : f32
    %16 = vector.broadcast %cst_11 : f32 to vector<8x1xf32>
    %17 = arith.maximumf %15, %16 : vector<8x1xf32>
    %cst_12 = arith.constant 9.99999974E-6 : f32
    %18 = vector.broadcast %cst_12 : f32 to vector<8x1xf32>
    %19 = arith.addf %17, %18 : vector<8x1xf32>
    %20 = math.rsqrt %19 : vector<8x1xf32>
    %21 = arith.mulf %3, %20 : vector<8x1xf32>
    %22 = arith.mulf %8, %21 : vector<8x1xf32>
    %23 = arith.subf %4, %22 : vector<8x1xf32>
    %24 = vector.broadcast %21 : vector<8x1xf32> to vector<8x128xf32>
    %25 = arith.mulf %2, %24 : vector<8x128xf32>
    %26 = vector.broadcast %23 : vector<8x1xf32> to vector<8x128xf32>
    %27 = arith.addf %25, %26 : vector<8x128xf32>
    %cst_13 = arith.constant 0.000000e+00 : f32
    %28 = vector.broadcast %cst_13 : f32 to vector<8x128xf32>
    %29 = arith.maximumf %27, %28 : vector<8x128xf32>
    %c0_14 = arith.constant 0 : index
    %c0_15 = arith.constant 0 : index
    %30 = vector.load %arg4[%c0_14, %c0_15] : memref<8x128xf32, #tpu.memory_space<vmem>>, vector<8x128xf32>
    tpu.vector_store %arg4[%c0_14, %c0_15], %29 {strides = array<i32>} : memref<8x128xf32, #tpu.memory_space<vmem>>, vector<8x128xf32>,
    return
  }
}

module attributes {stable_mosaic.version = 11 : i64} {
  func.func @_conv_bn_kernel(%arg0: memref<72x32xbf16, #tpu.memory_space<vmem>>, %arg1: memref<16x72xbf16, #tpu.memory_space<vmem>>, %arg2: memref<16x1xf32, #tpu.memory_space<vmem>>, %arg3: memref<16x1xf32, #tpu.memory_space<vmem>>, %arg4: memref<16x32xf32, #tpu.memory_space<vmem>>) attributes {dimension_semantics = [], scalar_prefetch = 0 : i64, scratch_operands = 0 : i64, tpu.core_type = #tpu.core_type<tc>} {
    %c0 = arith.constant 0 : index
    %c0_0 = arith.constant 0 : index
    %0 = vector.load %arg1[%c0, %c0_0] : memref<16x72xbf16, #tpu.memory_space<vmem>>, vector<16x72xbf16>
    %c0_1 = arith.constant 0 : index
    %c0_2 = arith.constant 0 : index
    %1 = vector.load %arg0[%c0_1, %c0_2] : memref<72x32xbf16, #tpu.memory_space<vmem>>, vector<72x32xbf16>
    %cst = arith.constant dense<0.000000e+00> : vector<16x32xf32>
    %2 = tpu.matmul %0, %1, %cst {dimension_numbers = #tpu.dot_dimension_numbers<[1], [0], [0], [1], [0, 0, 1, 1], [], []>} : vector<16x72xbf16>, vector<72x32xbf16>, vector<16x32xf32> -> vector<16x32xf32>
    %c0_3 = arith.constant 0 : index
    %c0_4 = arith.constant 0 : index
    %3 = vector.load %arg2[%c0_3, %c0_4] : memref<16x1xf32, #tpu.memory_space<vmem>>, vector<16x1xf32>
    %c0_5 = arith.constant 0 : index
    %c0_6 = arith.constant 0 : index
    %4 = vector.load %arg3[%c0_5, %c0_6] : memref<16x1xf32, #tpu.memory_space<vmem>>, vector<16x1xf32>
    %cst_7 = arith.constant dense<0.000000e+00> : vector<16xf32>
    %5 = vector.multi_reduction <add>, %2, %cst_7 [1] : vector<16x32xf32> to vector<16xf32>
    %6 = vector.shape_cast %5 : vector<16xf32> to vector<16x1xf32>
    %cst_8 = arith.constant 3.200000e+01 : f32
    %7 = vector.broadcast %cst_8 : f32 to vector<16x1xf32>
    %8 = arith.divf %6, %7 : vector<16x1xf32>
    %9 = arith.mulf %2, %2 : vector<16x32xf32>
    %cst_9 = arith.constant dense<0.000000e+00> : vector<16xf32>
    %10 = vector.multi_reduction <add>, %9, %cst_9 [1] : vector<16x32xf32> to vector<16xf32>
    %11 = vector.shape_cast %10 : vector<16xf32> to vector<16x1xf32>
    %cst_10 = arith.constant 3.200000e+01 : f32
    %12 = vector.broadcast %cst_10 : f32 to vector<16x1xf32>
    %13 = arith.divf %11, %12 : vector<16x1xf32>
    %14 = arith.mulf %8, %8 : vector<16x1xf32>
    %15 = arith.subf %13, %14 : vector<16x1xf32>
    %cst_11 = arith.constant 0.000000e+00 : f32
    %16 = vector.broadcast %cst_11 : f32 to vector<16x1xf32>
    %17 = arith.maximumf %15, %16 : vector<16x1xf32>
    %cst_12 = arith.constant 9.99999974E-6 : f32
    %18 = vector.broadcast %cst_12 : f32 to vector<16x1xf32>
    %19 = arith.addf %17, %18 : vector<16x1xf32>
    %20 = math.rsqrt %19 : vector<16x1xf32>
    %21 = arith.mulf %3, %20 : vector<16x1xf32>
    %22 = arith.mulf %8, %21 : vector<16x1xf32>
    %23 = arith.subf %4, %22 : vector<16x1xf32>
    %24 = vector.broadcast %21 : vector<16x1xf32> to vector<16x32xf32>
    %25 = arith.mulf %2, %24 : vector<16x32xf32>
    %26 = vector.broadcast %23 : vector<16x1xf32> to vector<16x32xf32>
    %27 = arith.addf %25, %26 : vector<16x32xf32>
    %cst_13 = arith.constant 0.000000e+00 : f32
    %28 = vector.broadcast %cst_13 : f32 to vector<16x32xf32>
    %29 = arith.maximumf %27, %28 : vector<16x32xf32>
    %c0_14 = arith.constant 0 : index
    %c0_15 = arith.constant 0 : index
    %30 = vector.load %arg4[%c0_14, %c0_15] : memref<16x32xf32, #tpu.memory_space<vmem>>, vector<16x32xf32>
    tpu.vector_store %arg4[%c0_14, %c0_15], %29 {strides = array<i32>} : memref<16x32xf32, #tpu.memory_space<vmem>>, vector<16x32xf32>,
    return
  }
}

module attributes {stable_mosaic.version = 11 : i64} {
  func.func @_conv_bn_add_relu_kernel(%arg0: memref<144x32xbf16, #tpu.memory_space<vmem>>, %arg1: memref<16x144xbf16, #tpu.memory_space<vmem>>, %arg2: memref<16x1xf32, #tpu.memory_space<vmem>>, %arg3: memref<16x1xf32, #tpu.memory_space<vmem>>, %arg4: memref<16x32xf32, #tpu.memory_space<vmem>>, %arg5: memref<16x32xf32, #tpu.memory_space<vmem>>) attributes {dimension_semantics = [], scalar_prefetch = 0 : i64, scratch_operands = 0 : i64, tpu.core_type = #tpu.core_type<tc>} {
    %c0 = arith.constant 0 : index
    %c0_0 = arith.constant 0 : index
    %0 = vector.load %arg1[%c0, %c0_0] : memref<16x144xbf16, #tpu.memory_space<vmem>>, vector<16x144xbf16>
    %c0_1 = arith.constant 0 : index
    %c0_2 = arith.constant 0 : index
    %1 = vector.load %arg0[%c0_1, %c0_2] : memref<144x32xbf16, #tpu.memory_space<vmem>>, vector<144x32xbf16>
    %cst = arith.constant dense<0.000000e+00> : vector<16x32xf32>
    %2 = tpu.matmul %0, %1, %cst {dimension_numbers = #tpu.dot_dimension_numbers<[1], [0], [0], [1], [0, 0, 1, 1], [], []>} : vector<16x144xbf16>, vector<144x32xbf16>, vector<16x32xf32> -> vector<16x32xf32>
    %c0_3 = arith.constant 0 : index
    %c0_4 = arith.constant 0 : index
    %3 = vector.load %arg2[%c0_3, %c0_4] : memref<16x1xf32, #tpu.memory_space<vmem>>, vector<16x1xf32>
    %c0_5 = arith.constant 0 : index
    %c0_6 = arith.constant 0 : index
    %4 = vector.load %arg3[%c0_5, %c0_6] : memref<16x1xf32, #tpu.memory_space<vmem>>, vector<16x1xf32>
    %cst_7 = arith.constant dense<0.000000e+00> : vector<16xf32>
    %5 = vector.multi_reduction <add>, %2, %cst_7 [1] : vector<16x32xf32> to vector<16xf32>
    %6 = vector.shape_cast %5 : vector<16xf32> to vector<16x1xf32>
    %cst_8 = arith.constant 3.200000e+01 : f32
    %7 = vector.broadcast %cst_8 : f32 to vector<16x1xf32>
    %8 = arith.divf %6, %7 : vector<16x1xf32>
    %9 = arith.mulf %2, %2 : vector<16x32xf32>
    %cst_9 = arith.constant dense<0.000000e+00> : vector<16xf32>
    %10 = vector.multi_reduction <add>, %9, %cst_9 [1] : vector<16x32xf32> to vector<16xf32>
    %11 = vector.shape_cast %10 : vector<16xf32> to vector<16x1xf32>
    %cst_10 = arith.constant 3.200000e+01 : f32
    %12 = vector.broadcast %cst_10 : f32 to vector<16x1xf32>
    %13 = arith.divf %11, %12 : vector<16x1xf32>
    %14 = arith.mulf %8, %8 : vector<16x1xf32>
    %15 = arith.subf %13, %14 : vector<16x1xf32>
    %cst_11 = arith.constant 0.000000e+00 : f32
    %16 = vector.broadcast %cst_11 : f32 to vector<16x1xf32>
    %17 = arith.maximumf %15, %16 : vector<16x1xf32>
    %cst_12 = arith.constant 9.99999974E-6 : f32
    %18 = vector.broadcast %cst_12 : f32 to vector<16x1xf32>
    %19 = arith.addf %17, %18 : vector<16x1xf32>
    %20 = math.rsqrt %19 : vector<16x1xf32>
    %21 = arith.mulf %3, %20 : vector<16x1xf32>
    %22 = arith.mulf %8, %21 : vector<16x1xf32>
    %23 = arith.subf %4, %22 : vector<16x1xf32>
    %24 = vector.broadcast %21 : vector<16x1xf32> to vector<16x32xf32>
    %25 = arith.mulf %2, %24 : vector<16x32xf32>
    %26 = vector.broadcast %23 : vector<16x1xf32> to vector<16x32xf32>
    %27 = arith.addf %25, %26 : vector<16x32xf32>
    %c0_13 = arith.constant 0 : index
    %c0_14 = arith.constant 0 : index
    %28 = vector.load %arg4[%c0_13, %c0_14] : memref<16x32xf32, #tpu.memory_space<vmem>>, vector<16x32xf32>
    %29 = arith.addf %27, %28 : vector<16x32xf32>
    %cst_15 = arith.constant 0.000000e+00 : f32
    %30 = vector.broadcast %cst_15 : f32 to vector<16x32xf32>
    %31 = arith.maximumf %29, %30 : vector<16x32xf32>
    %c0_16 = arith.constant 0 : index
    %c0_17 = arith.constant 0 : index
    %32 = vector.load %arg5[%c0_16, %c0_17] : memref<16x32xf32, #tpu.memory_space<vmem>>, vector<16x32xf32>
    tpu.vector_store %arg5[%c0_16, %c0_17], %31 {strides = array<i32>} : memref<16x32xf32, #tpu.memory_space<vmem>>, vector<16x32xf32>,
    return
  }
}

module attributes {stable_mosaic.version = 11 : i64} {
  func.func @_conv_bn_kernel(%arg0: memref<144x32xbf16, #tpu.memory_space<vmem>>, %arg1: memref<16x144xbf16, #tpu.memory_space<vmem>>, %arg2: memref<16x1xf32, #tpu.memory_space<vmem>>, %arg3: memref<16x1xf32, #tpu.memory_space<vmem>>, %arg4: memref<16x32xf32, #tpu.memory_space<vmem>>) attributes {dimension_semantics = [], scalar_prefetch = 0 : i64, scratch_operands = 0 : i64, tpu.core_type = #tpu.core_type<tc>} {
    %c0 = arith.constant 0 : index
    %c0_0 = arith.constant 0 : index
    %0 = vector.load %arg1[%c0, %c0_0] : memref<16x144xbf16, #tpu.memory_space<vmem>>, vector<16x144xbf16>
    %c0_1 = arith.constant 0 : index
    %c0_2 = arith.constant 0 : index
    %1 = vector.load %arg0[%c0_1, %c0_2] : memref<144x32xbf16, #tpu.memory_space<vmem>>, vector<144x32xbf16>
    %cst = arith.constant dense<0.000000e+00> : vector<16x32xf32>
    %2 = tpu.matmul %0, %1, %cst {dimension_numbers = #tpu.dot_dimension_numbers<[1], [0], [0], [1], [0, 0, 1, 1], [], []>} : vector<16x144xbf16>, vector<144x32xbf16>, vector<16x32xf32> -> vector<16x32xf32>
    %c0_3 = arith.constant 0 : index
    %c0_4 = arith.constant 0 : index
    %3 = vector.load %arg2[%c0_3, %c0_4] : memref<16x1xf32, #tpu.memory_space<vmem>>, vector<16x1xf32>
    %c0_5 = arith.constant 0 : index
    %c0_6 = arith.constant 0 : index
    %4 = vector.load %arg3[%c0_5, %c0_6] : memref<16x1xf32, #tpu.memory_space<vmem>>, vector<16x1xf32>
    %cst_7 = arith.constant dense<0.000000e+00> : vector<16xf32>
    %5 = vector.multi_reduction <add>, %2, %cst_7 [1] : vector<16x32xf32> to vector<16xf32>
    %6 = vector.shape_cast %5 : vector<16xf32> to vector<16x1xf32>
    %cst_8 = arith.constant 3.200000e+01 : f32
    %7 = vector.broadcast %cst_8 : f32 to vector<16x1xf32>
    %8 = arith.divf %6, %7 : vector<16x1xf32>
    %9 = arith.mulf %2, %2 : vector<16x32xf32>
    %cst_9 = arith.constant dense<0.000000e+00> : vector<16xf32>
    %10 = vector.multi_reduction <add>, %9, %cst_9 [1] : vector<16x32xf32> to vector<16xf32>
    %11 = vector.shape_cast %10 : vector<16xf32> to vector<16x1xf32>
    %cst_10 = arith.constant 3.200000e+01 : f32
    %12 = vector.broadcast %cst_10 : f32 to vector<16x1xf32>
    %13 = arith.divf %11, %12 : vector<16x1xf32>
    %14 = arith.mulf %8, %8 : vector<16x1xf32>
    %15 = arith.subf %13, %14 : vector<16x1xf32>
    %cst_11 = arith.constant 0.000000e+00 : f32
    %16 = vector.broadcast %cst_11 : f32 to vector<16x1xf32>
    %17 = arith.maximumf %15, %16 : vector<16x1xf32>
    %cst_12 = arith.constant 9.99999974E-6 : f32
    %18 = vector.broadcast %cst_12 : f32 to vector<16x1xf32>
    %19 = arith.addf %17, %18 : vector<16x1xf32>
    %20 = math.rsqrt %19 : vector<16x1xf32>
    %21 = arith.mulf %3, %20 : vector<16x1xf32>
    %22 = arith.mulf %8, %21 : vector<16x1xf32>
    %23 = arith.subf %4, %22 : vector<16x1xf32>
    %24 = vector.broadcast %21 : vector<16x1xf32> to vector<16x32xf32>
    %25 = arith.mulf %2, %24 : vector<16x32xf32>
    %26 = vector.broadcast %23 : vector<16x1xf32> to vector<16x32xf32>
    %27 = arith.addf %25, %26 : vector<16x32xf32>
    %cst_13 = arith.constant 0.000000e+00 : f32
    %28 = vector.broadcast %cst_13 : f32 to vector<16x32xf32>
    %29 = arith.maximumf %27, %28 : vector<16x32xf32>
    %c0_14 = arith.constant 0 : index
    %c0_15 = arith.constant 0 : index
    %30 = vector.load %arg4[%c0_14, %c0_15] : memref<16x32xf32, #tpu.memory_space<vmem>>, vector<16x32xf32>
    tpu.vector_store %arg4[%c0_14, %c0_15], %29 {strides = array<i32>} : memref<16x32xf32, #tpu.memory_space<vmem>>, vector<16x32xf32>,
    return
  }
}

module attributes {stable_mosaic.version = 11 : i64} {
  func.func @_conv_bn_add_sc_kernel(%arg0: memref<144x32xbf16, #tpu.memory_space<vmem>>, %arg1: memref<16x144xbf16, #tpu.memory_space<vmem>>, %arg2: memref<16x1xf32, #tpu.memory_space<vmem>>, %arg3: memref<16x1xf32, #tpu.memory_space<vmem>>, %arg4: memref<8x32xbf16, #tpu.memory_space<vmem>>, %arg5: memref<16x8xbf16, #tpu.memory_space<vmem>>, %arg6: memref<16x1xf32, #tpu.memory_space<vmem>>, %arg7: memref<16x1xf32, #tpu.memory_space<vmem>>, %arg8: memref<16x32xf32, #tpu.memory_space<vmem>>) attributes {dimension_semantics = [], scalar_prefetch = 0 : i64, scratch_operands = 0 : i64, tpu.core_type = #tpu.core_type<tc>} {
    %c0 = arith.constant 0 : index
    %c0_0 = arith.constant 0 : index
    %0 = vector.load %arg1[%c0, %c0_0] : memref<16x144xbf16, #tpu.memory_space<vmem>>, vector<16x144xbf16>
    %c0_1 = arith.constant 0 : index
    %c0_2 = arith.constant 0 : index
    %1 = vector.load %arg0[%c0_1, %c0_2] : memref<144x32xbf16, #tpu.memory_space<vmem>>, vector<144x32xbf16>
    %cst = arith.constant dense<0.000000e+00> : vector<16x32xf32>
    %2 = tpu.matmul %0, %1, %cst {dimension_numbers = #tpu.dot_dimension_numbers<[1], [0], [0], [1], [0, 0, 1, 1], [], []>} : vector<16x144xbf16>, vector<144x32xbf16>, vector<16x32xf32> -> vector<16x32xf32>
    %c0_3 = arith.constant 0 : index
    %c0_4 = arith.constant 0 : index
    %3 = vector.load %arg5[%c0_3, %c0_4] : memref<16x8xbf16, #tpu.memory_space<vmem>>, vector<16x8xbf16>
    %c0_5 = arith.constant 0 : index
    %c0_6 = arith.constant 0 : index
    %4 = vector.load %arg4[%c0_5, %c0_6] : memref<8x32xbf16, #tpu.memory_space<vmem>>, vector<8x32xbf16>
    %cst_7 = arith.constant dense<0.000000e+00> : vector<16x32xf32>
    %5 = tpu.matmul %3, %4, %cst_7 {dimension_numbers = #tpu.dot_dimension_numbers<[1], [0], [0], [1], [0, 0, 1, 1], [], []>} : vector<16x8xbf16>, vector<8x32xbf16>, vector<16x32xf32> -> vector<16x32xf32>
    %c0_8 = arith.constant 0 : index
    %c0_9 = arith.constant 0 : index
    %6 = vector.load %arg2[%c0_8, %c0_9] : memref<16x1xf32, #tpu.memory_space<vmem>>, vector<16x1xf32>
    %c0_10 = arith.constant 0 : index
    %c0_11 = arith.constant 0 : index
    %7 = vector.load %arg3[%c0_10, %c0_11] : memref<16x1xf32, #tpu.memory_space<vmem>>, vector<16x1xf32>
    %cst_12 = arith.constant dense<0.000000e+00> : vector<16xf32>
    %8 = vector.multi_reduction <add>, %2, %cst_12 [1] : vector<16x32xf32> to vector<16xf32>
    %9 = vector.shape_cast %8 : vector<16xf32> to vector<16x1xf32>
    %cst_13 = arith.constant 3.200000e+01 : f32
    %10 = vector.broadcast %cst_13 : f32 to vector<16x1xf32>
    %11 = arith.divf %9, %10 : vector<16x1xf32>
    %12 = arith.mulf %2, %2 : vector<16x32xf32>
    %cst_14 = arith.constant dense<0.000000e+00> : vector<16xf32>
    %13 = vector.multi_reduction <add>, %12, %cst_14 [1] : vector<16x32xf32> to vector<16xf32>
    %14 = vector.shape_cast %13 : vector<16xf32> to vector<16x1xf32>
    %cst_15 = arith.constant 3.200000e+01 : f32
    %15 = vector.broadcast %cst_15 : f32 to vector<16x1xf32>
    %16 = arith.divf %14, %15 : vector<16x1xf32>
    %17 = arith.mulf %11, %11 : vector<16x1xf32>
    %18 = arith.subf %16, %17 : vector<16x1xf32>
    %cst_16 = arith.constant 0.000000e+00 : f32
    %19 = vector.broadcast %cst_16 : f32 to vector<16x1xf32>
    %20 = arith.maximumf %18, %19 : vector<16x1xf32>
    %cst_17 = arith.constant 9.99999974E-6 : f32
    %21 = vector.broadcast %cst_17 : f32 to vector<16x1xf32>
    %22 = arith.addf %20, %21 : vector<16x1xf32>
    %23 = math.rsqrt %22 : vector<16x1xf32>
    %24 = arith.mulf %6, %23 : vector<16x1xf32>
    %25 = arith.mulf %11, %24 : vector<16x1xf32>
    %26 = arith.subf %7, %25 : vector<16x1xf32>
    %27 = vector.broadcast %24 : vector<16x1xf32> to vector<16x32xf32>
    %28 = arith.mulf %2, %27 : vector<16x32xf32>
    %29 = vector.broadcast %26 : vector<16x1xf32> to vector<16x32xf32>
    %30 = arith.addf %28, %29 : vector<16x32xf32>
    %c0_18 = arith.constant 0 : index
    %c0_19 = arith.constant 0 : index
    %31 = vector.load %arg6[%c0_18, %c0_19] : memref<16x1xf32, #tpu.memory_space<vmem>>, vector<16x1xf32>
    %c0_20 = arith.constant 0 : index
    %c0_21 = arith.constant 0 : index
    %32 = vector.load %arg7[%c0_20, %c0_21] : memref<16x1xf32, #tpu.memory_space<vmem>>, vector<16x1xf32>
    %cst_22 = arith.constant dense<0.000000e+00> : vector<16xf32>
    %33 = vector.multi_reduction <add>, %5, %cst_22 [1] : vector<16x32xf32> to vector<16xf32>
    %34 = vector.shape_cast %33 : vector<16xf32> to vector<16x1xf32>
    %cst_23 = arith.constant 3.200000e+01 : f32
    %35 = vector.broadcast %cst_23 : f32 to vector<16x1xf32>
    %36 = arith.divf %34, %35 : vector<16x1xf32>
    %37 = arith.mulf %5, %5 : vector<16x32xf32>
    %cst_24 = arith.constant dense<0.000000e+00> : vector<16xf32>
    %38 = vector.multi_reduction <add>, %37, %cst_24 [1] : vector<16x32xf32> to vector<16xf32>
    %39 = vector.shape_cast %38 : vector<16xf32> to vector<16x1xf32>
    %cst_25 = arith.constant 3.200000e+01 : f32
    %40 = vector.broadcast %cst_25 : f32 to vector<16x1xf32>
    %41 = arith.divf %39, %40 : vector<16x1xf32>
    %42 = arith.mulf %36, %36 : vector<16x1xf32>
    %43 = arith.subf %41, %42 : vector<16x1xf32>
    %cst_26 = arith.constant 0.000000e+00 : f32
    %44 = vector.broadcast %cst_26 : f32 to vector<16x1xf32>
    %45 = arith.maximumf %43, %44 : vector<16x1xf32>
    %cst_27 = arith.constant 9.99999974E-6 : f32
    %46 = vector.broadcast %cst_27 : f32 to vector<16x1xf32>
    %47 = arith.addf %45, %46 : vector<16x1xf32>
    %48 = math.rsqrt %47 : vector<16x1xf32>
    %49 = arith.mulf %31, %48 : vector<16x1xf32>
    %50 = arith.mulf %36, %49 : vector<16x1xf32>
    %51 = arith.subf %32, %50 : vector<16x1xf32>
    %52 = vector.broadcast %49 : vector<16x1xf32> to vector<16x32xf32>
    %53 = arith.mulf %5, %52 : vector<16x32xf32>
    %54 = vector.broadcast %51 : vector<16x1xf32> to vector<16x32xf32>
    %55 = arith.addf %53, %54 : vector<16x32xf32>
    %56 = arith.addf %30, %55 : vector<16x32xf32>
    %cst_28 = arith.constant 0.000000e+00 : f32
    %57 = vector.broadcast %cst_28 : f32 to vector<16x32xf32>
    %58 = arith.maximumf %56, %57 : vector<16x32xf32>
    %c0_29 = arith.constant 0 : index
    %c0_30 = arith.constant 0 : index
    %59 = vector.load %arg8[%c0_29, %c0_30] : memref<16x32xf32, #tpu.memory_space<vmem>>, vector<16x32xf32>
    tpu.vector_store %arg8[%c0_29, %c0_30], %58 {strides = array<i32>} : memref<16x32xf32, #tpu.memory_space<vmem>>, vector<16x32xf32>,
    return
  }
}

module attributes {stable_mosaic.version = 11 : i64} {
  func.func @_conv_bn_kernel(%arg0: memref<144x8xbf16, #tpu.memory_space<vmem>>, %arg1: memref<32x144xbf16, #tpu.memory_space<vmem>>, %arg2: memref<32x1xf32, #tpu.memory_space<vmem>>, %arg3: memref<32x1xf32, #tpu.memory_space<vmem>>, %arg4: memref<32x8xf32, #tpu.memory_space<vmem>>) attributes {dimension_semantics = [], scalar_prefetch = 0 : i64, scratch_operands = 0 : i64, tpu.core_type = #tpu.core_type<tc>} {
    %c0 = arith.constant 0 : index
    %c0_0 = arith.constant 0 : index
    %0 = vector.load %arg1[%c0, %c0_0] : memref<32x144xbf16, #tpu.memory_space<vmem>>, vector<32x144xbf16>
    %c0_1 = arith.constant 0 : index
    %c0_2 = arith.constant 0 : index
    %1 = vector.load %arg0[%c0_1, %c0_2] : memref<144x8xbf16, #tpu.memory_space<vmem>>, vector<144x8xbf16>
    %cst = arith.constant dense<0.000000e+00> : vector<32x8xf32>
    %2 = tpu.matmul %0, %1, %cst {dimension_numbers = #tpu.dot_dimension_numbers<[1], [0], [0], [1], [0, 0, 1, 1], [], []>} : vector<32x144xbf16>, vector<144x8xbf16>, vector<32x8xf32> -> vector<32x8xf32>
    %c0_3 = arith.constant 0 : index
    %c0_4 = arith.constant 0 : index
    %3 = vector.load %arg2[%c0_3, %c0_4] : memref<32x1xf32, #tpu.memory_space<vmem>>, vector<32x1xf32>
    %c0_5 = arith.constant 0 : index
    %c0_6 = arith.constant 0 : index
    %4 = vector.load %arg3[%c0_5, %c0_6] : memref<32x1xf32, #tpu.memory_space<vmem>>, vector<32x1xf32>
    %cst_7 = arith.constant dense<0.000000e+00> : vector<32xf32>
    %5 = vector.multi_reduction <add>, %2, %cst_7 [1] : vector<32x8xf32> to vector<32xf32>
    %6 = vector.shape_cast %5 : vector<32xf32> to vector<32x1xf32>
    %cst_8 = arith.constant 8.000000e+00 : f32
    %7 = vector.broadcast %cst_8 : f32 to vector<32x1xf32>
    %8 = arith.divf %6, %7 : vector<32x1xf32>
    %9 = arith.mulf %2, %2 : vector<32x8xf32>
    %cst_9 = arith.constant dense<0.000000e+00> : vector<32xf32>
    %10 = vector.multi_reduction <add>, %9, %cst_9 [1] : vector<32x8xf32> to vector<32xf32>
    %11 = vector.shape_cast %10 : vector<32xf32> to vector<32x1xf32>
    %cst_10 = arith.constant 8.000000e+00 : f32
    %12 = vector.broadcast %cst_10 : f32 to vector<32x1xf32>
    %13 = arith.divf %11, %12 : vector<32x1xf32>
    %14 = arith.mulf %8, %8 : vector<32x1xf32>
    %15 = arith.subf %13, %14 : vector<32x1xf32>
    %cst_11 = arith.constant 0.000000e+00 : f32
    %16 = vector.broadcast %cst_11 : f32 to vector<32x1xf32>
    %17 = arith.maximumf %15, %16 : vector<32x1xf32>
    %cst_12 = arith.constant 9.99999974E-6 : f32
    %18 = vector.broadcast %cst_12 : f32 to vector<32x1xf32>
    %19 = arith.addf %17, %18 : vector<32x1xf32>
    %20 = math.rsqrt %19 : vector<32x1xf32>
    %21 = arith.mulf %3, %20 : vector<32x1xf32>
    %22 = arith.mulf %8, %21 : vector<32x1xf32>
    %23 = arith.subf %4, %22 : vector<32x1xf32>
    %24 = vector.broadcast %21 : vector<32x1xf32> to vector<32x8xf32>
    %25 = arith.mulf %2, %24 : vector<32x8xf32>
    %26 = vector.broadcast %23 : vector<32x1xf32> to vector<32x8xf32>
    %27 = arith.addf %25, %26 : vector<32x8xf32>
    %cst_13 = arith.constant 0.000000e+00 : f32
    %28 = vector.broadcast %cst_13 : f32 to vector<32x8xf32>
    %29 = arith.maximumf %27, %28 : vector<32x8xf32>
    %c0_14 = arith.constant 0 : index
    %c0_15 = arith.constant 0 : index
    %30 = vector.load %arg4[%c0_14, %c0_15] : memref<32x8xf32, #tpu.memory_space<vmem>>, vector<32x8xf32>
    tpu.vector_store %arg4[%c0_14, %c0_15], %29 {strides = array<i32>} : memref<32x8xf32, #tpu.memory_space<vmem>>, vector<32x8xf32>,
    return
  }
}

module attributes {stable_mosaic.version = 11 : i64} {
  func.func @_conv_bn_kernel(%arg0: memref<288x8xbf16, #tpu.memory_space<vmem>>, %arg1: memref<32x288xbf16, #tpu.memory_space<vmem>>, %arg2: memref<32x1xf32, #tpu.memory_space<vmem>>, %arg3: memref<32x1xf32, #tpu.memory_space<vmem>>, %arg4: memref<32x8xf32, #tpu.memory_space<vmem>>) attributes {dimension_semantics = [], scalar_prefetch = 0 : i64, scratch_operands = 0 : i64, tpu.core_type = #tpu.core_type<tc>} {
    %c0 = arith.constant 0 : index
    %c0_0 = arith.constant 0 : index
    %0 = vector.load %arg1[%c0, %c0_0] : memref<32x288xbf16, #tpu.memory_space<vmem>>, vector<32x288xbf16>
    %c0_1 = arith.constant 0 : index
    %c0_2 = arith.constant 0 : index
    %1 = vector.load %arg0[%c0_1, %c0_2] : memref<288x8xbf16, #tpu.memory_space<vmem>>, vector<288x8xbf16>
    %cst = arith.constant dense<0.000000e+00> : vector<32x8xf32>
    %2 = tpu.matmul %0, %1, %cst {dimension_numbers = #tpu.dot_dimension_numbers<[1], [0], [0], [1], [0, 0, 1, 1], [], []>} : vector<32x288xbf16>, vector<288x8xbf16>, vector<32x8xf32> -> vector<32x8xf32>
    %c0_3 = arith.constant 0 : index
    %c0_4 = arith.constant 0 : index
    %3 = vector.load %arg2[%c0_3, %c0_4] : memref<32x1xf32, #tpu.memory_space<vmem>>, vector<32x1xf32>
    %c0_5 = arith.constant 0 : index
    %c0_6 = arith.constant 0 : index
    %4 = vector.load %arg3[%c0_5, %c0_6] : memref<32x1xf32, #tpu.memory_space<vmem>>, vector<32x1xf32>
    %cst_7 = arith.constant dense<0.000000e+00> : vector<32xf32>
    %5 = vector.multi_reduction <add>, %2, %cst_7 [1] : vector<32x8xf32> to vector<32xf32>
    %6 = vector.shape_cast %5 : vector<32xf32> to vector<32x1xf32>
    %cst_8 = arith.constant 8.000000e+00 : f32
    %7 = vector.broadcast %cst_8 : f32 to vector<32x1xf32>
    %8 = arith.divf %6, %7 : vector<32x1xf32>
    %9 = arith.mulf %2, %2 : vector<32x8xf32>
    %cst_9 = arith.constant dense<0.000000e+00> : vector<32xf32>
    %10 = vector.multi_reduction <add>, %9, %cst_9 [1] : vector<32x8xf32> to vector<32xf32>
    %11 = vector.shape_cast %10 : vector<32xf32> to vector<32x1xf32>
    %cst_10 = arith.constant 8.000000e+00 : f32
    %12 = vector.broadcast %cst_10 : f32 to vector<32x1xf32>
    %13 = arith.divf %11, %12 : vector<32x1xf32>
    %14 = arith.mulf %8, %8 : vector<32x1xf32>
    %15 = arith.subf %13, %14 : vector<32x1xf32>
    %cst_11 = arith.constant 0.000000e+00 : f32
    %16 = vector.broadcast %cst_11 : f32 to vector<32x1xf32>
    %17 = arith.maximumf %15, %16 : vector<32x1xf32>
    %cst_12 = arith.constant 9.99999974E-6 : f32
    %18 = vector.broadcast %cst_12 : f32 to vector<32x1xf32>
    %19 = arith.addf %17, %18 : vector<32x1xf32>
    %20 = math.rsqrt %19 : vector<32x1xf32>
    %21 = arith.mulf %3, %20 : vector<32x1xf32>
    %22 = arith.mulf %8, %21 : vector<32x1xf32>
    %23 = arith.subf %4, %22 : vector<32x1xf32>
    %24 = vector.broadcast %21 : vector<32x1xf32> to vector<32x8xf32>
    %25 = arith.mulf %2, %24 : vector<32x8xf32>
    %26 = vector.broadcast %23 : vector<32x1xf32> to vector<32x8xf32>
    %27 = arith.addf %25, %26 : vector<32x8xf32>
    %cst_13 = arith.constant 0.000000e+00 : f32
    %28 = vector.broadcast %cst_13 : f32 to vector<32x8xf32>
    %29 = arith.maximumf %27, %28 : vector<32x8xf32>
    %c0_14 = arith.constant 0 : index
    %c0_15 = arith.constant 0 : index
    %30 = vector.load %arg4[%c0_14, %c0_15] : memref<32x8xf32, #tpu.memory_space<vmem>>, vector<32x8xf32>
    tpu.vector_store %arg4[%c0_14, %c0_15], %29 {strides = array<i32>} : memref<32x8xf32, #tpu.memory_space<vmem>>, vector<32x8xf32>,
    return
  }
}

module attributes {stable_mosaic.version = 11 : i64} {
  func.func @_conv_bn_add_relu_kernel(%arg0: memref<288x8xbf16, #tpu.memory_space<vmem>>, %arg1: memref<32x288xbf16, #tpu.memory_space<vmem>>, %arg2: memref<32x1xf32, #tpu.memory_space<vmem>>, %arg3: memref<32x1xf32, #tpu.memory_space<vmem>>, %arg4: memref<32x8xf32, #tpu.memory_space<vmem>>, %arg5: memref<32x8xf32, #tpu.memory_space<vmem>>) attributes {dimension_semantics = [], scalar_prefetch = 0 : i64, scratch_operands = 0 : i64, tpu.core_type = #tpu.core_type<tc>} {
    %c0 = arith.constant 0 : index
    %c0_0 = arith.constant 0 : index
    %0 = vector.load %arg1[%c0, %c0_0] : memref<32x288xbf16, #tpu.memory_space<vmem>>, vector<32x288xbf16>
    %c0_1 = arith.constant 0 : index
    %c0_2 = arith.constant 0 : index
    %1 = vector.load %arg0[%c0_1, %c0_2] : memref<288x8xbf16, #tpu.memory_space<vmem>>, vector<288x8xbf16>
    %cst = arith.constant dense<0.000000e+00> : vector<32x8xf32>
    %2 = tpu.matmul %0, %1, %cst {dimension_numbers = #tpu.dot_dimension_numbers<[1], [0], [0], [1], [0, 0, 1, 1], [], []>} : vector<32x288xbf16>, vector<288x8xbf16>, vector<32x8xf32> -> vector<32x8xf32>
    %c0_3 = arith.constant 0 : index
    %c0_4 = arith.constant 0 : index
    %3 = vector.load %arg2[%c0_3, %c0_4] : memref<32x1xf32, #tpu.memory_space<vmem>>, vector<32x1xf32>
    %c0_5 = arith.constant 0 : index
    %c0_6 = arith.constant 0 : index
    %4 = vector.load %arg3[%c0_5, %c0_6] : memref<32x1xf32, #tpu.memory_space<vmem>>, vector<32x1xf32>
    %cst_7 = arith.constant dense<0.000000e+00> : vector<32xf32>
    %5 = vector.multi_reduction <add>, %2, %cst_7 [1] : vector<32x8xf32> to vector<32xf32>
    %6 = vector.shape_cast %5 : vector<32xf32> to vector<32x1xf32>
    %cst_8 = arith.constant 8.000000e+00 : f32
    %7 = vector.broadcast %cst_8 : f32 to vector<32x1xf32>
    %8 = arith.divf %6, %7 : vector<32x1xf32>
    %9 = arith.mulf %2, %2 : vector<32x8xf32>
    %cst_9 = arith.constant dense<0.000000e+00> : vector<32xf32>
    %10 = vector.multi_reduction <add>, %9, %cst_9 [1] : vector<32x8xf32> to vector<32xf32>
    %11 = vector.shape_cast %10 : vector<32xf32> to vector<32x1xf32>
    %cst_10 = arith.constant 8.000000e+00 : f32
    %12 = vector.broadcast %cst_10 : f32 to vector<32x1xf32>
    %13 = arith.divf %11, %12 : vector<32x1xf32>
    %14 = arith.mulf %8, %8 : vector<32x1xf32>
    %15 = arith.subf %13, %14 : vector<32x1xf32>
    %cst_11 = arith.constant 0.000000e+00 : f32
    %16 = vector.broadcast %cst_11 : f32 to vector<32x1xf32>
    %17 = arith.maximumf %15, %16 : vector<32x1xf32>
    %cst_12 = arith.constant 9.99999974E-6 : f32
    %18 = vector.broadcast %cst_12 : f32 to vector<32x1xf32>
    %19 = arith.addf %17, %18 : vector<32x1xf32>
    %20 = math.rsqrt %19 : vector<32x1xf32>
    %21 = arith.mulf %3, %20 : vector<32x1xf32>
    %22 = arith.mulf %8, %21 : vector<32x1xf32>
    %23 = arith.subf %4, %22 : vector<32x1xf32>
    %24 = vector.broadcast %21 : vector<32x1xf32> to vector<32x8xf32>
    %25 = arith.mulf %2, %24 : vector<32x8xf32>
    %26 = vector.broadcast %23 : vector<32x1xf32> to vector<32x8xf32>
    %27 = arith.addf %25, %26 : vector<32x8xf32>
    %c0_13 = arith.constant 0 : index
    %c0_14 = arith.constant 0 : index
    %28 = vector.load %arg4[%c0_13, %c0_14] : memref<32x8xf32, #tpu.memory_space<vmem>>, vector<32x8xf32>
    %29 = arith.addf %27, %28 : vector<32x8xf32>
    %cst_15 = arith.constant 0.000000e+00 : f32
    %30 = vector.broadcast %cst_15 : f32 to vector<32x8xf32>
    %31 = arith.maximumf %29, %30 : vector<32x8xf32>
    %c0_16 = arith.constant 0 : index
    %c0_17 = arith.constant 0 : index
    %32 = vector.load %arg5[%c0_16, %c0_17] : memref<32x8xf32, #tpu.memory_space<vmem>>, vector<32x8xf32>
    tpu.vector_store %arg5[%c0_16, %c0_17], %31 {strides = array<i32>} : memref<32x8xf32, #tpu.memory_space<vmem>>, vector<32x8xf32>,
    return
  }
}

module attributes {stable_mosaic.version = 11 : i64} {
  func.func @_conv_bn_add_sc_kernel(%arg0: memref<288x8xbf16, #tpu.memory_space<vmem>>, %arg1: memref<32x288xbf16, #tpu.memory_space<vmem>>, %arg2: memref<32x1xf32, #tpu.memory_space<vmem>>, %arg3: memref<32x1xf32, #tpu.memory_space<vmem>>, %arg4: memref<16x8xbf16, #tpu.memory_space<vmem>>, %arg5: memref<32x16xbf16, #tpu.memory_space<vmem>>, %arg6: memref<32x1xf32, #tpu.memory_space<vmem>>, %arg7: memref<32x1xf32, #tpu.memory_space<vmem>>, %arg8: memref<32x8xf32, #tpu.memory_space<vmem>>) attributes {dimension_semantics = [], scalar_prefetch = 0 : i64, scratch_operands = 0 : i64, tpu.core_type = #tpu.core_type<tc>} {
    %c0 = arith.constant 0 : index
    %c0_0 = arith.constant 0 : index
    %0 = vector.load %arg1[%c0, %c0_0] : memref<32x288xbf16, #tpu.memory_space<vmem>>, vector<32x288xbf16>
    %c0_1 = arith.constant 0 : index
    %c0_2 = arith.constant 0 : index
    %1 = vector.load %arg0[%c0_1, %c0_2] : memref<288x8xbf16, #tpu.memory_space<vmem>>, vector<288x8xbf16>
    %cst = arith.constant dense<0.000000e+00> : vector<32x8xf32>
    %2 = tpu.matmul %0, %1, %cst {dimension_numbers = #tpu.dot_dimension_numbers<[1], [0], [0], [1], [0, 0, 1, 1], [], []>} : vector<32x288xbf16>, vector<288x8xbf16>, vector<32x8xf32> -> vector<32x8xf32>
    %c0_3 = arith.constant 0 : index
    %c0_4 = arith.constant 0 : index
    %3 = vector.load %arg5[%c0_3, %c0_4] : memref<32x16xbf16, #tpu.memory_space<vmem>>, vector<32x16xbf16>
    %c0_5 = arith.constant 0 : index
    %c0_6 = arith.constant 0 : index
    %4 = vector.load %arg4[%c0_5, %c0_6] : memref<16x8xbf16, #tpu.memory_space<vmem>>, vector<16x8xbf16>
    %cst_7 = arith.constant dense<0.000000e+00> : vector<32x8xf32>
    %5 = tpu.matmul %3, %4, %cst_7 {dimension_numbers = #tpu.dot_dimension_numbers<[1], [0], [0], [1], [0, 0, 1, 1], [], []>} : vector<32x16xbf16>, vector<16x8xbf16>, vector<32x8xf32> -> vector<32x8xf32>
    %c0_8 = arith.constant 0 : index
    %c0_9 = arith.constant 0 : index
    %6 = vector.load %arg2[%c0_8, %c0_9] : memref<32x1xf32, #tpu.memory_space<vmem>>, vector<32x1xf32>
    %c0_10 = arith.constant 0 : index
    %c0_11 = arith.constant 0 : index
    %7 = vector.load %arg3[%c0_10, %c0_11] : memref<32x1xf32, #tpu.memory_space<vmem>>, vector<32x1xf32>
    %cst_12 = arith.constant dense<0.000000e+00> : vector<32xf32>
    %8 = vector.multi_reduction <add>, %2, %cst_12 [1] : vector<32x8xf32> to vector<32xf32>
    %9 = vector.shape_cast %8 : vector<32xf32> to vector<32x1xf32>
    %cst_13 = arith.constant 8.000000e+00 : f32
    %10 = vector.broadcast %cst_13 : f32 to vector<32x1xf32>
    %11 = arith.divf %9, %10 : vector<32x1xf32>
    %12 = arith.mulf %2, %2 : vector<32x8xf32>
    %cst_14 = arith.constant dense<0.000000e+00> : vector<32xf32>
    %13 = vector.multi_reduction <add>, %12, %cst_14 [1] : vector<32x8xf32> to vector<32xf32>
    %14 = vector.shape_cast %13 : vector<32xf32> to vector<32x1xf32>
    %cst_15 = arith.constant 8.000000e+00 : f32
    %15 = vector.broadcast %cst_15 : f32 to vector<32x1xf32>
    %16 = arith.divf %14, %15 : vector<32x1xf32>
    %17 = arith.mulf %11, %11 : vector<32x1xf32>
    %18 = arith.subf %16, %17 : vector<32x1xf32>
    %cst_16 = arith.constant 0.000000e+00 : f32
    %19 = vector.broadcast %cst_16 : f32 to vector<32x1xf32>
    %20 = arith.maximumf %18, %19 : vector<32x1xf32>
    %cst_17 = arith.constant 9.99999974E-6 : f32
    %21 = vector.broadcast %cst_17 : f32 to vector<32x1xf32>
    %22 = arith.addf %20, %21 : vector<32x1xf32>
    %23 = math.rsqrt %22 : vector<32x1xf32>
    %24 = arith.mulf %6, %23 : vector<32x1xf32>
    %25 = arith.mulf %11, %24 : vector<32x1xf32>
    %26 = arith.subf %7, %25 : vector<32x1xf32>
    %27 = vector.broadcast %24 : vector<32x1xf32> to vector<32x8xf32>
    %28 = arith.mulf %2, %27 : vector<32x8xf32>
    %29 = vector.broadcast %26 : vector<32x1xf32> to vector<32x8xf32>
    %30 = arith.addf %28, %29 : vector<32x8xf32>
    %c0_18 = arith.constant 0 : index
    %c0_19 = arith.constant 0 : index
    %31 = vector.load %arg6[%c0_18, %c0_19] : memref<32x1xf32, #tpu.memory_space<vmem>>, vector<32x1xf32>
    %c0_20 = arith.constant 0 : index
    %c0_21 = arith.constant 0 : index
    %32 = vector.load %arg7[%c0_20, %c0_21] : memref<32x1xf32, #tpu.memory_space<vmem>>, vector<32x1xf32>
    %cst_22 = arith.constant dense<0.000000e+00> : vector<32xf32>
    %33 = vector.multi_reduction <add>, %5, %cst_22 [1] : vector<32x8xf32> to vector<32xf32>
    %34 = vector.shape_cast %33 : vector<32xf32> to vector<32x1xf32>
    %cst_23 = arith.constant 8.000000e+00 : f32
    %35 = vector.broadcast %cst_23 : f32 to vector<32x1xf32>
    %36 = arith.divf %34, %35 : vector<32x1xf32>
    %37 = arith.mulf %5, %5 : vector<32x8xf32>
    %cst_24 = arith.constant dense<0.000000e+00> : vector<32xf32>
    %38 = vector.multi_reduction <add>, %37, %cst_24 [1] : vector<32x8xf32> to vector<32xf32>
    %39 = vector.shape_cast %38 : vector<32xf32> to vector<32x1xf32>
    %cst_25 = arith.constant 8.000000e+00 : f32
    %40 = vector.broadcast %cst_25 : f32 to vector<32x1xf32>
    %41 = arith.divf %39, %40 : vector<32x1xf32>
    %42 = arith.mulf %36, %36 : vector<32x1xf32>
    %43 = arith.subf %41, %42 : vector<32x1xf32>
    %cst_26 = arith.constant 0.000000e+00 : f32
    %44 = vector.broadcast %cst_26 : f32 to vector<32x1xf32>
    %45 = arith.maximumf %43, %44 : vector<32x1xf32>
    %cst_27 = arith.constant 9.99999974E-6 : f32
    %46 = vector.broadcast %cst_27 : f32 to vector<32x1xf32>
    %47 = arith.addf %45, %46 : vector<32x1xf32>
    %48 = math.rsqrt %47 : vector<32x1xf32>
    %49 = arith.mulf %31, %48 : vector<32x1xf32>
    %50 = arith.mulf %36, %49 : vector<32x1xf32>
    %51 = arith.subf %32, %50 : vector<32x1xf32>
    %52 = vector.broadcast %49 : vector<32x1xf32> to vector<32x8xf32>
    %53 = arith.mulf %5, %52 : vector<32x8xf32>
    %54 = vector.broadcast %51 : vector<32x1xf32> to vector<32x8xf32>
    %55 = arith.addf %53, %54 : vector<32x8xf32>
    %56 = arith.addf %30, %55 : vector<32x8xf32>
    %cst_28 = arith.constant 0.000000e+00 : f32
    %57 = vector.broadcast %cst_28 : f32 to vector<32x8xf32>
    %58 = arith.maximumf %56, %57 : vector<32x8xf32>
    %c0_29 = arith.constant 0 : index
    %c0_30 = arith.constant 0 : index
    %59 = vector.load %arg8[%c0_29, %c0_30] : memref<32x8xf32, #tpu.memory_space<vmem>>, vector<32x8xf32>
    tpu.vector_store %arg8[%c0_29, %c0_30], %58 {strides = array<i32>} : memref<32x8xf32, #tpu.memory_space<vmem>>, vector<32x8xf32>,
    return
  }
}

module attributes {stable_mosaic.version = 11 : i64} {
  func.func @_linear_kernel(%arg0: memref<2x128xbf16, #tpu.memory_space<vmem>>, %arg1: memref<128x10xbf16, #tpu.memory_space<vmem>>, %arg2: memref<1x10xf32, #tpu.memory_space<vmem>>, %arg3: memref<2x10xf32, #tpu.memory_space<vmem>>) attributes {dimension_semantics = [], scalar_prefetch = 0 : i64, scratch_operands = 0 : i64, tpu.core_type = #tpu.core_type<tc>} {
    %c0 = arith.constant 0 : index
    %c0_0 = arith.constant 0 : index
    %0 = vector.load %arg0[%c0, %c0_0] : memref<2x128xbf16, #tpu.memory_space<vmem>>, vector<2x128xbf16>
    %c0_1 = arith.constant 0 : index
    %c0_2 = arith.constant 0 : index
    %1 = vector.load %arg1[%c0_1, %c0_2] : memref<128x10xbf16, #tpu.memory_space<vmem>>, vector<128x10xbf16>
    %cst = arith.constant dense<0.000000e+00> : vector<2x10xf32>
    %2 = tpu.matmul %0, %1, %cst {dimension_numbers = #tpu.dot_dimension_numbers<[1], [0], [0], [1], [0, 0, 1, 1], [], []>} : vector<2x128xbf16>, vector<128x10xbf16>, vector<2x10xf32> -> vector<2x10xf32>
    %c0_3 = arith.constant 0 : index
    %c0_4 = arith.constant 0 : index
    %3 = vector.load %arg2[%c0_3, %c0_4] : memref<1x10xf32, #tpu.memory_space<vmem>>, vector<1x10xf32>
    %4 = vector.broadcast %3 : vector<1x10xf32> to vector<2x10xf32>
    %5 = arith.addf %2, %4 : vector<2x10xf32>
    %c0_5 = arith.constant 0 : index
    %c0_6 = arith.constant 0 : index
    %6 = vector.load %arg3[%c0_5, %c0_6] : memref<2x10xf32, #tpu.memory_space<vmem>>, vector<2x10xf32>
    tpu.vector_store %arg3[%c0_5, %c0_6], %5 {strides = array<i32>} : memref<2x10xf32, #tpu.memory_space<vmem>>, vector<2x10xf32>,
    return
  }
}

</mosaic_0001>

<llo_original>
// kernel: _lambda_.18
$region0: #{_lambda_.18}
  #allocation0 [shape = 'u32[]', space=smem, size = 0x4, offset = 0x4, fixed_abs, tag = 'smem constant byte address 0x4 - core index']
  #allocation1 [shape = 'u32[72,128]{1,0:T(1,128)}', space=vmem, size = 0x9000, scoped, tag = 'internal scratch']
  %s0 = inlined_call_operand.vmem [shape: bf16[27,512], index: 0, kind: input, shape index: {}]
  %s1 = inlined_call_operand.vmem [shape: bf16[4,27], index: 1, kind: input, shape index: {}]
  %s2 = inlined_call_operand.vmem [shape: f32[4,1], index: 2, kind: input, shape index: {}]
  %s3 = inlined_call_operand.vmem [shape: f32[4,1], index: 3, kind: input, shape index: {}]
  %s4 = inlined_call_operand.vmem [shape: f32[4,512], index: 4, kind: output, shape index: {}]
  %s5 = sld [smem:[#allocation0]]
  $region26: #{_lambda_.18} parent=0
    _
  %s7 = ssub.s32 1, %s5
  %s8 = scalar_select 0, %s7, %s5
  // Predicated region
  $region2: #{_lambda_.18} parent=0 // pred_check
    _
  $region3: #{_lambda_.18} parent=0 // pred_check_branch
    %10 = sbr.rel (0) target = $region5
  $region4: #{_lambda_.18} parent=0 // pred_region
    _
  $region5: #{_lambda_.18} parent=0 // pred_fallthru
    _
  // Predicated region
  $region6: #{_lambda_.18} parent=0 // pred_check
    _
  $region7: #{_lambda_.18} parent=0 // pred_check_branch
    %12 = sbr.rel (0) target = $region9
  $region8: #{_lambda_.18} parent=0 // pred_region
    _
  $region9: #{_lambda_.18} parent=0 // pred_fallthru
    _
  // Predicated region
  $region10: #{_lambda_.18} parent=0 // pred_check
    _
  $region11: #{_lambda_.18} parent=0 // pred_check_branch
    %14 = sbr.rel (0) target = $region13
  $region12: #{_lambda_.18} parent=0 // pred_region
    _
  $region13: #{_lambda_.18} parent=0 // pred_fallthru
    _
  // Predicated region
  $region14: #{_lambda_.18} parent=0 // pred_check
    _
  $region15: #{_lambda_.18} parent=0 // pred_check_branch
    %16 = sbr.rel (0) target = $region17
  $region16: #{_lambda_.18} parent=0 // pred_region
    _
  $region17: #{_lambda_.18} parent=0 // pred_fallthru
    _
  %v18 = vld [vmem:[%s1] sm:$0x3]
  %v19 = vld [vmem:[%s0] sm:$0xff]
  %v20 = vld [vmem:[%s0 + $0x8] sm:$0xff]
  %v21 = vld [vmem:[%s0 + $0x10] sm:$0xff]
  %v22 = vld [vmem:[%s0 + $0x18] sm:$0xff]
  %v23 = vld [vmem:[%s0 + $0x20] sm:$0xff]
  %v24 = vld [vmem:[%s0 + $0x28] sm:$0xff]
  %v25 = vld [vmem:[%s0 + $0x30] sm:$0x33]
  %v26 = vld [vmem:[%s0 + $0x38] sm:$0x33]
  %v35 = vunpack.c.l.b16 %v19
  %v36 = vunpack.c.h.b16 %v19
  %v37 = vunpack.c.l.b16 %v20
  %v38 = vunpack.c.h.b16 %v20
  %v39 = vunpack.c.l.b16 %v21
  %v40 = vunpack.c.h.b16 %v21
  %v41 = vunpack.c.l.b16 %v22
  %v42 = vunpack.c.h.b16 %v22
  %v43 = vunpack.c.l.b16 %v23
  %v44 = vunpack.c.h.b16 %v23
  %v45 = vunpack.c.l.b16 %v24
  %v46 = vunpack.c.h.b16 %v24
  %v47 = vunpack.c.l.b16 %v25
  %v48 = vunpack.c.h.b16 %v25
  %v49 = vunpack.c.l.b16 %v26
  %v50 = vunpack.c.h.b16 %v26
  %v51 = vpack.c.b16 %v39, %v35
  %v52 = vpack.c.b16 %v40, %v36
  %v53 = vpack.c.b16 %v41, %v37
  %v54 = vpack.c.b16 %v42, %v38
  %v55 = vpack.c.b16 %v47, %v43
  %v56 = vpack.c.b16 %v48, %v44
  %v57 = vpack.c.b16 %v49, %v45
  %v58 = vpack.c.b16 %v50, %v46
  %vm63 = vcmask 220160
  %v65 = vsel %vm63, %v18, 0
  %vm67 = vcmask 1044480
  %vm68 = vcmask 1045504
  %v69 = vsel %vm67, 4294967295, 65535
  %v70 = vsel %vm68, %v69, 0
  %v72 = vand.u32 %v55, %v70
  %v75 = vand.u32 %v56, %v70
  %v78 = vand.u32 %v57, %v70
  %v81 = vand.u32 %v58, %v70
  %83 = vmatpush.bf16.msra.mxu0 0
  %84 = vmatpush.bf16.msra.mxu0 0
  %85 = vmatpush.bf16.msra.mxu0 0
  %86 = vmatpush.bf16.msra.mxu0 0
  %87 = vmatpush.bf16.msra.mxu0 0
  %88 = vmatpush.bf16.msra.mxu0 0
  %89 = vmatpush.bf16.msra.mxu0 %v72
  %90 = vmatpush.bf16.msra.mxu0 %v51
  %91 = vmatmul.bf16.gmra.mxu0 %v65
  %v92 = vpop.f32.mrf.mxu0
  %v93 = vadd.f32 0.0, %v92
  %v94 = vpop.f32.mrf.mxu0
  %95 = vdwg.mxu0
  %96 = vmatpush.bf16.msra.mxu0 0
  %97 = vmatpush.bf16.msra.mxu0 0
  %98 = vmatpush.bf16.msra.mxu0 0
  %99 = vmatpush.bf16.msra.mxu0 0
  %100 = vmatpush.bf16.msra.mxu0 0
  %101 = vmatpush.bf16.msra.mxu0 0
  %102 = vmatpush.bf16.msra.mxu0 %v75
  %103 = vmatpush.bf16.msra.mxu0 %v52
  %104 = vmatmul.bf16.gmra.mxu0 %v65
  %v105 = vpop.f32.mrf.mxu0
  %v106 = vadd.f32 0.0, %v105
  %v107 = vpop.f32.mrf.mxu0
  %108 = vdwg.mxu0
  %109 = vmatpush.bf16.msra.mxu0 0
  %110 = vmatpush.bf16.msra.mxu0 0
  %111 = vmatpush.bf16.msra.mxu0 0
  %112 = vmatpush.bf16.msra.mxu0 0
  %113 = vmatpush.bf16.msra.mxu0 0
  %114 = vmatpush.bf16.msra.mxu0 0
  %115 = vmatpush.bf16.msra.mxu0 %v78
  %116 = vmatpush.bf16.msra.mxu0 %v53
  %117 = vmatmul.bf16.gmra.mxu0 %v65
  %v118 = vpop.f32.mrf.mxu0
  %v119 = vadd.f32 0.0, %v118
  %v120 = vpop.f32.mrf.mxu0
  %121 = vdwg.mxu0
  %122 = vmatpush.bf16.msra.mxu0 0
  %123 = vmatpush.bf16.msra.mxu0 0
  %124 = vmatpush.bf16.msra.mxu0 0
  %125 = vmatpush.bf16.msra.mxu0 0
  %126 = vmatpush.bf16.msra.mxu0 0
  %127 = vmatpush.bf16.msra.mxu0 0
  %128 = vmatpush.bf16.msra.mxu0 %v81
  %129 = vmatpush.bf16.msra.mxu0 %v54
  %130 = vmatmul.bf16.gmra.mxu0 %v65
  %v131 = vpop.f32.mrf.mxu0
  %v132 = vadd.f32 0.0, %v131
  %v133 = vpop.f32.mrf.mxu0
  %134 = vdwg.mxu0
  %v135 = vld [vmem:[%s2] sm:$0xf]
  %v136 = vld [vmem:[%s3] sm:$0xf]
  %vm137 = vcmask 1043456
  %v138 = vsel %vm137, %v93, 0.0
  %v139 = vsel %vm137, %v106, 0.0
  %v140 = vadd.f32 %v138, %v139
  %v141 = vsel %vm137, %v119, 0.0
  %v142 = vadd.f32 %v140, %v141
  %v143 = vsel %vm137, %v132, 0.0
  %v144 = vadd.f32 %v142, %v143
  %145 = vadd.xlane.f32.xlu0 %v144
  %v146 = vpop.xlane.xlu0 %145
  %v147 = vrcp.pop 512.0
  %v148 = vmul.f32 512.0, %v147
  %v149 = vsub.f32 1.0, %v148
  %v150 = vmul.f32 %v147, %v149
  %v151 = vadd.f32 %v147, %v150
  %vm152 = vweird.f32 %v147
  %v153 = vsel %vm152, %v147, %v151
  %v154 = vmul.f32 %v146, %v153
  %v155 = vmul.f32 %v93, %v93
  %v156 = vmul.f32 %v106, %v106
  %v157 = vmul.f32 %v119, %v119
  %v158 = vmul.f32 %v132, %v132
  %v159 = vsel %vm137, %v155, 0.0
  %v160 = vsel %vm137, %v156, 0.0
  %v161 = vadd.f32 %v159, %v160
  %v162 = vsel %vm137, %v157, 0.0
  %v163 = vadd.f32 %v161, %v162
  %v164 = vsel %vm137, %v158, 0.0
  %v165 = vadd.f32 %v163, %v164
  %166 = vadd.xlane.f32.xlu0 %v165
  %v167 = vpop.xlane.xlu0 %166
  %v168 = vmul.f32 %v167, %v153
  %v169 = vmul.f32 %v154, %v154
  %v170 = vsub.f32 %v168, %v169
  %v171 = vmax.f32 %v170, 0.0
  %v172 = vadd.f32 %v171, 1e-05
  %v173 = vrsqrt.pop %v172
  %v174 = vmul.f32 %v173, %v172
  %v175 = vmul.f32 %v174, %v173
  %v176 = vmul.f32 0.5, %v175
  %v177 = vsub.f32 1.5, %v176
  %v178 = vmul.f32 %v173, %v177
  %vm179 = vweird.f32 %v172
  %vm180 = vweird.f32 %v173
  %vm181 = vmor %vm179, %vm180
  %v182 = vsel %vm181, %v173, %v178
  %v183 = vmul.f32 %v135, %v182
  %v184 = vmul.f32 %v154, %v183
  %v185 = vsub.f32 %v136, %v184
  %187 = vset.pattern.permute.xlu0 0
  %188 = vperm.xlu0 %187, %v183
  %v189 = vpop.permute.xlu0 %188
  %v191 = vmul.f32 %v93, %v189
  %v192 = vmul.f32 %v106, %v189
  %v193 = vmul.f32 %v119, %v189
  %v194 = vmul.f32 %v132, %v189
  %196 = vset.pattern.permute.xlu0 0
  %197 = vperm.xlu0 %196, %v185
  %v198 = vpop.permute.xlu0 %197
  %v200 = vadd.f32 %v191, %v198
  %v201 = vadd.f32 %v192, %v198
  %v202 = vadd.f32 %v193, %v198
  %v203 = vadd.f32 %v194, %v198
  %v204 = vmax.f32 %v200, 0.0
  %v205 = vmax.f32 %v201, 0.0
  %v206 = vmax.f32 %v202, 0.0
  %v207 = vmax.f32 %v203, 0.0
  %v212 = vrot.slane %v205, 4
  %v213 = vrot.slane %v207, 4
  %v214 = vsel %vm137, %v204, %v212
  %v215 = vsel %vm137, %v206, %v213
  %218 = vst [vmem:[%s4] sm:$0xff] %v214
  %219 = vst [vmem:[%s4 + $0x8] sm:$0xff] %v215
  // Predicated region
  $region18: #{_lambda_.18} parent=0 // pred_check
    _
  $region19: #{_lambda_.18} parent=0 // pred_check_branch
    %221 = sbr.rel (0) target = $region21
  $region20: #{_lambda_.18} parent=0 // pred_region
    _
  $region21: #{_lambda_.18} parent=0 // pred_fallthru
    _
  // Predicated region
  $region22: #{_lambda_.18} parent=0 // pred_check
    _
  $region23: #{_lambda_.18} parent=0 // pred_check_branch
    %223 = sbr.rel (0) target = $region25
  $region24: #{_lambda_.18} parent=0 // pred_region
    _
  $region25: #{_lambda_.18} parent=0 // pred_fallthru
    _

// kernel: _lambda_.19
$region0: #{_lambda_.19}
  #allocation0 [shape = 'u32[]', space=smem, size = 0x4, offset = 0x4, fixed_abs, tag = 'smem constant byte address 0x4 - core index']
  #allocation1 [shape = 'u32[72,128]{1,0:T(1,128)}', space=vmem, size = 0x9000, scoped, tag = 'internal scratch']
  %s0 = inlined_call_operand.vmem [shape: bf16[36,512], index: 0, kind: input, shape index: {}]
  %s1 = inlined_call_operand.vmem [shape: bf16[4,36], index: 1, kind: input, shape index: {}]
  %s2 = inlined_call_operand.vmem [shape: f32[4,1], index: 2, kind: input, shape index: {}]
  %s3 = inlined_call_operand.vmem [shape: f32[4,1], index: 3, kind: input, shape index: {}]
  %s4 = inlined_call_operand.vmem [shape: f32[4,512], index: 4, kind: output, shape index: {}]
  %s5 = sld [smem:[#allocation0]]
  $region26: #{_lambda_.19} parent=0
    _
  %s7 = ssub.s32 1, %s5
  %s8 = scalar_select 0, %s7, %s5
  // Predicated region
  $region2: #{_lambda_.19} parent=0 // pred_check
    _
  $region3: #{_lambda_.19} parent=0 // pred_check_branch
    %10 = sbr.rel (0) target = $region5
  $region4: #{_lambda_.19} parent=0 // pred_region
    _
  $region5: #{_lambda_.19} parent=0 // pred_fallthru
    _
  // Predicated region
  $region6: #{_lambda_.19} parent=0 // pred_check
    _
  $region7: #{_lambda_.19} parent=0 // pred_check_branch
    %12 = sbr.rel (0) target = $region9
  $region8: #{_lambda_.19} parent=0 // pred_region
    _
  $region9: #{_lambda_.19} parent=0 // pred_fallthru
    _
  // Predicated region
  $region10: #{_lambda_.19} parent=0 // pred_check
    _
  $region11: #{_lambda_.19} parent=0 // pred_check_branch
    %14 = sbr.rel (0) target = $region13
  $region12: #{_lambda_.19} parent=0 // pred_region
    _
  $region13: #{_lambda_.19} parent=0 // pred_fallthru
    _
  // Predicated region
  $region14: #{_lambda_.19} parent=0 // pred_check
    _
  $region15: #{_lambda_.19} parent=0 // pred_check_branch
    %16 = sbr.rel (0) target = $region17
  $region16: #{_lambda_.19} parent=0 // pred_region
    _
  $region17: #{_lambda_.19} parent=0 // pred_fallthru
    _
  %v18 = vld [vmem:[%s1] sm:$0x3]
  %v19 = vld [vmem:[%s0] sm:$0xff]
  %v20 = vld [vmem:[%s0 + $0x8] sm:$0xff]
  %v21 = vld [vmem:[%s0 + $0x10] sm:$0xff]
  %v22 = vld [vmem:[%s0 + $0x18] sm:$0xff]
  %v23 = vld [vmem:[%s0 + $0x20] sm:$0xff]
  %v24 = vld [vmem:[%s0 + $0x28] sm:$0xff]
  %v25 = vld [vmem:[%s0 + $0x30] sm:$0xff]
  %v26 = vld [vmem:[%s0 + $0x38] sm:$0xff]
  %v27 = vld [vmem:[%s0 + $0x40] sm:$0x33]
  %v28 = vld [vmem:[%s0 + $0x48] sm:$0x33]
  %v39 = vunpack.c.l.b16 %v19
  %v40 = vunpack.c.h.b16 %v19
  %v41 = vunpack.c.l.b16 %v20
  %v42 = vunpack.c.h.b16 %v20
  %v43 = vunpack.c.l.b16 %v21
  %v44 = vunpack.c.h.b16 %v21
  %v45 = vunpack.c.l.b16 %v22
  %v46 = vunpack.c.h.b16 %v22
  %v47 = vunpack.c.l.b16 %v23
  %v48 = vunpack.c.h.b16 %v23
  %v49 = vunpack.c.l.b16 %v24
  %v50 = vunpack.c.h.b16 %v24
  %v51 = vunpack.c.l.b16 %v25
  %v52 = vunpack.c.h.b16 %v25
  %v53 = vunpack.c.l.b16 %v26
  %v54 = vunpack.c.h.b16 %v26
  %v55 = vunpack.c.l.b16 %v27
  %v56 = vunpack.c.h.b16 %v27
  %v57 = vunpack.c.l.b16 %v28
  %v58 = vunpack.c.h.b16 %v28
  %v59 = vpack.c.b16 %v43, %v39
  %v60 = vpack.c.b16 %v44, %v40
  %v61 = vpack.c.b16 %v45, %v41
  %v62 = vpack.c.b16 %v46, %v42
  %v63 = vpack.c.b16 %v51, %v47
  %v64 = vpack.c.b16 %v52, %v48
  %v65 = vpack.c.b16 %v53, %v49
  %v66 = vpack.c.b16 %v54, %v50
  %v67 = vpack.c.b16 %v55, %v55
  %v68 = vpack.c.b16 %v56, %v56
  %v69 = vpack.c.b16 %v57, %v57
  %v70 = vpack.c.b16 %v58, %v58
  %vm79 = vcmask 293888
  %v81 = vsel %vm79, %v18, 0
  %vm83 = vcmask 1041408
  %v85 = vsel %vm83, %v67, 0
  %v88 = vsel %vm83, %v68, 0
  %v91 = vsel %vm83, %v69, 0
  %v94 = vsel %vm83, %v70, 0
  %96 = vmatpush.bf16.msra.mxu0 0
  %97 = vmatpush.bf16.msra.mxu0 0
  %98 = vmatpush.bf16.msra.mxu0 0
  %99 = vmatpush.bf16.msra.mxu0 0
  %100 = vmatpush.bf16.msra.mxu0 0
  %101 = vmatpush.bf16.msra.mxu0 %v85
  %102 = vmatpush.bf16.msra.mxu0 %v63
  %103 = vmatpush.bf16.msra.mxu0 %v59
  %104 = vmatmul.bf16.gmra.mxu0 %v81
  %v105 = vpop.f32.mrf.mxu0
  %v106 = vadd.f32 0.0, %v105
  %v107 = vpop.f32.mrf.mxu0
  %108 = vdwg.mxu0
  %109 = vmatpush.bf16.msra.mxu0 0
  %110 = vmatpush.bf16.msra.mxu0 0
  %111 = vmatpush.bf16.msra.mxu0 0
  %112 = vmatpush.bf16.msra.mxu0 0
  %113 = vmatpush.bf16.msra.mxu0 0
  %114 = vmatpush.bf16.msra.mxu0 %v88
  %115 = vmatpush.bf16.msra.mxu0 %v64
  %116 = vmatpush.bf16.msra.mxu0 %v60
  %117 = vmatmul.bf16.gmra.mxu0 %v81
  %v118 = vpop.f32.mrf.mxu0
  %v119 = vadd.f32 0.0, %v118
  %v120 = vpop.f32.mrf.mxu0
  %121 = vdwg.mxu0
  %122 = vmatpush.bf16.msra.mxu0 0
  %123 = vmatpush.bf16.msra.mxu0 0
  %124 = vmatpush.bf16.msra.mxu0 0
  %125 = vmatpush.bf16.msra.mxu0 0
  %126 = vmatpush.bf16.msra.mxu0 0
  %127 = vmatpush.bf16.msra.mxu0 %v91
  %128 = vmatpush.bf16.msra.mxu0 %v65
  %129 = vmatpush.bf16.msra.mxu0 %v61
  %130 = vmatmul.bf16.gmra.mxu0 %v81
  %v131 = vpop.f32.mrf.mxu0
  %v132 = vadd.f32 0.0, %v131
  %v133 = vpop.f32.mrf.mxu0
  %134 = vdwg.mxu0
  %135 = vmatpush.bf16.msra.mxu0 0
  %136 = vmatpush.bf16.msra.mxu0 0
  %137 = vmatpush.bf16.msra.mxu0 0
  %138 = vmatpush.bf16.msra.mxu0 0
  %139 = vmatpush.bf16.msra.mxu0 0
  %140 = vmatpush.bf16.msra.mxu0 %v94
  %141 = vmatpush.bf16.msra.mxu0 %v66
  %142 = vmatpush.bf16.msra.mxu0 %v62
  %143 = vmatmul.bf16.gmra.mxu0 %v81
  %v144 = vpop.f32.mrf.mxu0
  %v145 = vadd.f32 0.0, %v144
  %v146 = vpop.f32.mrf.mxu0
  %147 = vdwg.mxu0
  %v148 = vld [vmem:[%s2] sm:$0xf]
  %v149 = vld [vmem:[%s3] sm:$0xf]
  %vm150 = vcmask 1043456
  %v151 = vsel %vm150, %v106, 0.0
  %v152 = vsel %vm150, %v119, 0.0
  %v153 = vadd.f32 %v151, %v152
  %v154 = vsel %vm150, %v132, 0.0
  %v155 = vadd.f32 %v153, %v154
  %v156 = vsel %vm150, %v145, 0.0
  %v157 = vadd.f32 %v155, %v156
  %158 = vadd.xlane.f32.xlu0 %v157
  %v159 = vpop.xlane.xlu0 %158
  %v160 = vrcp.pop 512.0
  %v161 = vmul.f32 512.0, %v160
  %v162 = vsub.f32 1.0, %v161
  %v163 = vmul.f32 %v160, %v162
  %v164 = vadd.f32 %v160, %v163
  %vm165 = vweird.f32 %v160
  %v166 = vsel %vm165, %v160, %v164
  %v167 = vmul.f32 %v159, %v166
  %v168 = vmul.f32 %v106, %v106
  %v169 = vmul.f32 %v119, %v119
  %v170 = vmul.f32 %v132, %v132
  %v171 = vmul.f32 %v145, %v145
  %v172 = vsel %vm150, %v168, 0.0
  %v173 = vsel %vm150, %v169, 0.0
  %v174 = vadd.f32 %v172, %v173
  %v175 = vsel %vm150, %v170, 0.0
  %v176 = vadd.f32 %v174, %v175
  %v177 = vsel %vm150, %v171, 0.0
  %v178 = vadd.f32 %v176, %v177
  %179 = vadd.xlane.f32.xlu0 %v178
  %v180 = vpop.xlane.xlu0 %179
  %v181 = vmul.f32 %v180, %v166
  %v182 = vmul.f32 %v167, %v167
  %v183 = vsub.f32 %v181, %v182
  %v184 = vmax.f32 %v183, 0.0
  %v185 = vadd.f32 %v184, 1e-05
  %v186 = vrsqrt.pop %v185
  %v187 = vmul.f32 %v186, %v185
  %v188 = vmul.f32 %v187, %v186
  %v189 = vmul.f32 0.5, %v188
  %v190 = vsub.f32 1.5, %v189
  %v191 = vmul.f32 %v186, %v190
  %vm192 = vweird.f32 %v185
  %vm193 = vweird.f32 %v186
  %vm194 = vmor %vm192, %vm193
  %v195 = vsel %vm194, %v186, %v191
  %v196 = vmul.f32 %v148, %v195
  %v197 = vmul.f32 %v167, %v196
  %v198 = vsub.f32 %v149, %v197
  %200 = vset.pattern.permute.xlu0 0
  %201 = vperm.xlu0 %200, %v196
  %v202 = vpop.permute.xlu0 %201
  %v204 = vmul.f32 %v106, %v202
  %v205 = vmul.f32 %v119, %v202
  %v206 = vmul.f32 %v132, %v202
  %v207 = vmul.f32 %v145, %v202
  %209 = vset.pattern.permute.xlu0 0
  %210 = vperm.xlu0 %209, %v198
  %v211 = vpop.permute.xlu0 %210
  %v213 = vadd.f32 %v204, %v211
  %v214 = vadd.f32 %v205, %v211
  %v215 = vadd.f32 %v206, %v211
  %v216 = vadd.f32 %v207, %v211
  %v217 = vmax.f32 %v213, 0.0
  %v218 = vmax.f32 %v214, 0.0
  %v219 = vmax.f32 %v215, 0.0
  %v220 = vmax.f32 %v216, 0.0
  %v225 = vrot.slane %v218, 4
  %v226 = vrot.slane %v220, 4
  %v227 = vsel %vm150, %v217, %v225
  %v228 = vsel %vm150, %v219, %v226
  %231 = vst [vmem:[%s4] sm:$0xff] %v227
  %232 = vst [vmem:[%s4 + $0x8] sm:$0xff] %v228
  // Predicated region
  $region18: #{_lambda_.19} parent=0 // pred_check
    _
  $region19: #{_lambda_.19} parent=0 // pred_check_branch
    %234 = sbr.rel (0) target = $region21
  $region20: #{_lambda_.19} parent=0 // pred_region
    _
  $region21: #{_lambda_.19} parent=0 // pred_fallthru
    _
  // Predicated region
  $region22: #{_lambda_.19} parent=0 // pred_check
    _
  $region23: #{_lambda_.19} parent=0 // pred_check_branch
    %236 = sbr.rel (0) target = $region25
  $region24: #{_lambda_.19} parent=0 // pred_region
    _
  $region25: #{_lambda_.19} parent=0 // pred_fallthru
    _

// kernel: _lambda_.20
$region0: #{_lambda_.20}
  #allocation0 [shape = 'u32[]', space=smem, size = 0x4, offset = 0x4, fixed_abs, tag = 'smem constant byte address 0x4 - core index']
  #allocation1 [shape = 'u32[72,128]{1,0:T(1,128)}', space=vmem, size = 0x9000, scoped, tag = 'internal scratch']
  %s0 = inlined_call_operand.vmem [shape: bf16[36,512], index: 0, kind: input, shape index: {}]
  %s1 = inlined_call_operand.vmem [shape: bf16[4,36], index: 1, kind: input, shape index: {}]
  %s2 = inlined_call_operand.vmem [shape: f32[4,1], index: 2, kind: input, shape index: {}]
  %s3 = inlined_call_operand.vmem [shape: f32[4,1], index: 3, kind: input, shape index: {}]
  %s4 = inlined_call_operand.vmem [shape: f32[4,512], index: 4, kind: input, shape index: {}]
  %s5 = inlined_call_operand.vmem [shape: f32[4,512], index: 5, kind: output, shape index: {}]
  %s6 = sld [smem:[#allocation0]]
  $region30: #{_lambda_.20} parent=0
    _
  %s8 = ssub.s32 1, %s6
  %s9 = scalar_select 0, %s8, %s6
  // Predicated region
  $region2: #{_lambda_.20} parent=0 // pred_check
    _
  $region3: #{_lambda_.20} parent=0 // pred_check_branch
    %11 = sbr.rel (0) target = $region5
  $region4: #{_lambda_.20} parent=0 // pred_region
    _
  $region5: #{_lambda_.20} parent=0 // pred_fallthru
    _
  // Predicated region
  $region6: #{_lambda_.20} parent=0 // pred_check
    _
  $region7: #{_lambda_.20} parent=0 // pred_check_branch
    %13 = sbr.rel (0) target = $region9
  $region8: #{_lambda_.20} parent=0 // pred_region
    _
  $region9: #{_lambda_.20} parent=0 // pred_fallthru
    _
  // Predicated region
  $region10: #{_lambda_.20} parent=0 // pred_check
    _
  $region11: #{_lambda_.20} parent=0 // pred_check_branch
    %15 = sbr.rel (0) target = $region13
  $region12: #{_lambda_.20} parent=0 // pred_region
    _
  $region13: #{_lambda_.20} parent=0 // pred_fallthru
    _
  // Predicated region
  $region14: #{_lambda_.20} parent=0 // pred_check
    _
  $region15: #{_lambda_.20} parent=0 // pred_check_branch
    %17 = sbr.rel (0) target = $region17
  $region16: #{_lambda_.20} parent=0 // pred_region
    _
  $region17: #{_lambda_.20} parent=0 // pred_fallthru
    _
  // Predicated region
  $region18: #{_lambda_.20} parent=0 // pred_check
    _
  $region19: #{_lambda_.20} parent=0 // pred_check_branch
    %19 = sbr.rel (0) target = $region21
  $region20: #{_lambda_.20} parent=0 // pred_region
    _
  $region21: #{_lambda_.20} parent=0 // pred_fallthru
    _
  %v21 = vld [vmem:[%s1] sm:$0x3]
  %v22 = vld [vmem:[%s0] sm:$0xff]
  %v23 = vld [vmem:[%s0 + $0x8] sm:$0xff]
  %v24 = vld [vmem:[%s0 + $0x10] sm:$0xff]
  %v25 = vld [vmem:[%s0 + $0x18] sm:$0xff]
  %v26 = vld [vmem:[%s0 + $0x20] sm:$0xff]
  %v27 = vld [vmem:[%s0 + $0x28] sm:$0xff]
  %v28 = vld [vmem:[%s0 + $0x30] sm:$0xff]
  %v29 = vld [vmem:[%s0 + $0x38] sm:$0xff]
  %v30 = vld [vmem:[%s0 + $0x40] sm:$0x33]
  %v31 = vld [vmem:[%s0 + $0x48] sm:$0x33]
  %v42 = vunpack.c.l.b16 %v22
  %v43 = vunpack.c.h.b16 %v22
  %v44 = vunpack.c.l.b16 %v23
  %v45 = vunpack.c.h.b16 %v23
  %v46 = vunpack.c.l.b16 %v24
  %v47 = vunpack.c.h.b16 %v24
  %v48 = vunpack.c.l.b16 %v25
  %v49 = vunpack.c.h.b16 %v25
  %v50 = vunpack.c.l.b16 %v26
  %v51 = vunpack.c.h.b16 %v26
  %v52 = vunpack.c.l.b16 %v27
  %v53 = vunpack.c.h.b16 %v27
  %v54 = vunpack.c.l.b16 %v28
  %v55 = vunpack.c.h.b16 %v28
  %v56 = vunpack.c.l.b16 %v29
  %v57 = vunpack.c.h.b16 %v29
  %v58 = vunpack.c.l.b16 %v30
  %v59 = vunpack.c.h.b16 %v30
  %v60 = vunpack.c.l.b16 %v31
  %v61 = vunpack.c.h.b16 %v31
  %v62 = vpack.c.b16 %v46, %v42
  %v63 = vpack.c.b16 %v47, %v43
  %v64 = vpack.c.b16 %v48, %v44
  %v65 = vpack.c.b16 %v49, %v45
  %v66 = vpack.c.b16 %v54, %v50
  %v67 = vpack.c.b16 %v55, %v51
  %v68 = vpack.c.b16 %v56, %v52
  %v69 = vpack.c.b16 %v57, %v53
  %v70 = vpack.c.b16 %v58, %v58
  %v71 = vpack.c.b16 %v59, %v59
  %v72 = vpack.c.b16 %v60, %v60
  %v73 = vpack.c.b16 %v61, %v61
  %vm82 = vcmask 293888
  %v84 = vsel %vm82, %v21, 0
  %vm86 = vcmask 1041408
  %v88 = vsel %vm86, %v70, 0
  %v91 = vsel %vm86, %v71, 0
  %v94 = vsel %vm86, %v72, 0
  %v97 = vsel %vm86, %v73, 0
  %99 = vmatpush.bf16.msra.mxu0 0
  %100 = vmatpush.bf16.msra.mxu0 0
  %101 = vmatpush.bf16.msra.mxu0 0
  %102 = vmatpush.bf16.msra.mxu0 0
  %103 = vmatpush.bf16.msra.mxu0 0
  %104 = vmatpush.bf16.msra.mxu0 %v88
  %105 = vmatpush.bf16.msra.mxu0 %v66
  %106 = vmatpush.bf16.msra.mxu0 %v62
  %107 = vmatmul.bf16.gmra.mxu0 %v84
  %v108 = vpop.f32.mrf.mxu0
  %v109 = vadd.f32 0.0, %v108
  %v110 = vpop.f32.mrf.mxu0
  %111 = vdwg.mxu0
  %112 = vmatpush.bf16.msra.mxu0 0
  %113 = vmatpush.bf16.msra.mxu0 0
  %114 = vmatpush.bf16.msra.mxu0 0
  %115 = vmatpush.bf16.msra.mxu0 0
  %116 = vmatpush.bf16.msra.mxu0 0
  %117 = vmatpush.bf16.msra.mxu0 %v91
  %118 = vmatpush.bf16.msra.mxu0 %v67
  %119 = vmatpush.bf16.msra.mxu0 %v63
  %120 = vmatmul.bf16.gmra.mxu0 %v84
  %v121 = vpop.f32.mrf.mxu0
  %v122 = vadd.f32 0.0, %v121
  %v123 = vpop.f32.mrf.mxu0
  %124 = vdwg.mxu0
  %125 = vmatpush.bf16.msra.mxu0 0
  %126 = vmatpush.bf16.msra.mxu0 0
  %127 = vmatpush.bf16.msra.mxu0 0
  %128 = vmatpush.bf16.msra.mxu0 0
  %129 = vmatpush.bf16.msra.mxu0 0
  %130 = vmatpush.bf16.msra.mxu0 %v94
  %131 = vmatpush.bf16.msra.mxu0 %v68
  %132 = vmatpush.bf16.msra.mxu0 %v64
  %133 = vmatmul.bf16.gmra.mxu0 %v84
  %v134 = vpop.f32.mrf.mxu0
  %v135 = vadd.f32 0.0, %v134
  %v136 = vpop.f32.mrf.mxu0
  %137 = vdwg.mxu0
  %138 = vmatpush.bf16.msra.mxu0 0
  %139 = vmatpush.bf16.msra.mxu0 0
  %140 = vmatpush.bf16.msra.mxu0 0
  %141 = vmatpush.bf16.msra.mxu0 0
  %142 = vmatpush.bf16.msra.mxu0 0
  %143 = vmatpush.bf16.msra.mxu0 %v97
  %144 = vmatpush.bf16.msra.mxu0 %v69
  %145 = vmatpush.bf16.msra.mxu0 %v65
  %146 = vmatmul.bf16.gmra.mxu0 %v84
  %v147 = vpop.f32.mrf.mxu0
  %v148 = vadd.f32 0.0, %v147
  %v149 = vpop.f32.mrf.mxu0
  %150 = vdwg.mxu0
  %v151 = vld [vmem:[%s2] sm:$0xf]
  %v152 = vld [vmem:[%s3] sm:$0xf]
  %vm153 = vcmask 1043456
  %v154 = vsel %vm153, %v109, 0.0
  %v155 = vsel %vm153, %v122, 0.0
  %v156 = vadd.f32 %v154, %v155
  %v157 = vsel %vm153, %v135, 0.0
  %v158 = vadd.f32 %v156, %v157
  %v159 = vsel %vm153, %v148, 0.0
  %v160 = vadd.f32 %v158, %v159
  %161 = vadd.xlane.f32.xlu0 %v160
  %v162 = vpop.xlane.xlu0 %161
  %v163 = vrcp.pop 512.0
  %v164 = vmul.f32 512.0, %v163
  %v165 = vsub.f32 1.0, %v164
  %v166 = vmul.f32 %v163, %v165
  %v167 = vadd.f32 %v163, %v166
  %vm168 = vweird.f32 %v163
  %v169 = vsel %vm168, %v163, %v167
  %v170 = vmul.f32 %v162, %v169
  %v171 = vmul.f32 %v109, %v109
  %v172 = vmul.f32 %v122, %v122
  %v173 = vmul.f32 %v135, %v135
  %v174 = vmul.f32 %v148, %v148
  %v175 = vsel %vm153, %v171, 0.0
  %v176 = vsel %vm153, %v172, 0.0
  %v177 = vadd.f32 %v175, %v176
  %v178 = vsel %vm153, %v173, 0.0
  %v179 = vadd.f32 %v177, %v178
  %v180 = vsel %vm153, %v174, 0.0
  %v181 = vadd.f32 %v179, %v180
  %182 = vadd.xlane.f32.xlu0 %v181
  %v183 = vpop.xlane.xlu0 %182
  %v184 = vmul.f32 %v183, %v169
  %v185 = vmul.f32 %v170, %v170
  %v186 = vsub.f32 %v184, %v185
  %v187 = vmax.f32 %v186, 0.0
  %v188 = vadd.f32 %v187, 1e-05
  %v189 = vrsqrt.pop %v188
  %v190 = vmul.f32 %v189, %v188
  %v191 = vmul.f32 %v190, %v189
  %v192 = vmul.f32 0.5, %v191
  %v193 = vsub.f32 1.5, %v192
  %v194 = vmul.f32 %v189, %v193
  %vm195 = vweird.f32 %v188
  %vm196 = vweird.f32 %v189
  %vm197 = vmor %vm195, %vm196
  %v198 = vsel %vm197, %v189, %v194
  %v199 = vmul.f32 %v151, %v198
  %v200 = vmul.f32 %v170, %v199
  %v201 = vsub.f32 %v152, %v200
  %203 = vset.pattern.permute.xlu0 0
  %204 = vperm.xlu0 %203, %v199
  %v205 = vpop.permute.xlu0 %204
  %v207 = vmul.f32 %v109, %v205
  %v208 = vmul.f32 %v122, %v205
  %v209 = vmul.f32 %v135, %v205
  %v210 = vmul.f32 %v148, %v205
  %212 = vset.pattern.permute.xlu0 0
  %213 = vperm.xlu0 %212, %v201
  %v214 = vpop.permute.xlu0 %213
  %v216 = vadd.f32 %v207, %v214
  %v217 = vadd.f32 %v208, %v214
  %v218 = vadd.f32 %v209, %v214
  %v219 = vadd.f32 %v210, %v214
  %v220 = vld [vmem:[%s4] sm:$0xff]
  %v221 = vld [vmem:[%s4 + $0x8] sm:$0xff]
  %224 = vst [vmem:[#allocation1] ss:$2 sm:$0xff] %v220
  %s225 = scalar_lea.vmem [#allocation1], 16
  %226 = vst [vmem:[%s225] ss:$2 sm:$0xff] %v221
  %v227 = vld.sshfl [vmem:[#allocation1] sm:$0xff pattern:$0x75316420]
  %v228 = vld.sshfl [vmem:[#allocation1 + $0x8] sm:$0xff pattern:$0x75316420]
  %v229 = vld.sshfl [vmem:[#allocation1 + $0x10] sm:$0xff pattern:$0x75316420]
  %v230 = vld.sshfl [vmem:[#allocation1 + $0x18] sm:$0xff pattern:$0x75316420]
  %v235 = vadd.f32 %v216, %v227
  %v236 = vadd.f32 %v217, %v228
  %v237 = vadd.f32 %v218, %v229
  %v238 = vadd.f32 %v219, %v230
  %v239 = vmax.f32 %v235, 0.0
  %v240 = vmax.f32 %v236, 0.0
  %v241 = vmax.f32 %v237, 0.0
  %v242 = vmax.f32 %v238, 0.0
  %v247 = vrot.slane %v240, 4
  %v248 = vrot.slane %v242, 4
  %v249 = vsel %vm153, %v239, %v247
  %v250 = vsel %vm153, %v241, %v248
  %253 = vst [vmem:[%s5] sm:$0xff] %v249
  %254 = vst [vmem:[%s5 + $0x8] sm:$0xff] %v250
  // Predicated region
  $region22: #{_lambda_.20} parent=0 // pred_check
    _
  $region23: #{_lambda_.20} parent=0 // pred_check_branch
    %256 = sbr.rel (0) target = $region25
  $region24: #{_lambda_.20} parent=0 // pred_region
    _
  $region25: #{_lambda_.20} parent=0 // pred_fallthru
    _
  // Predicated region
  $region26: #{_lambda_.20} parent=0 // pred_check
    _
  $region27: #{_lambda_.20} parent=0 // pred_check_branch
    %258 = sbr.rel (0) target = $region29
  $region28: #{_lambda_.20} parent=0 // pred_region
    _
  $region29: #{_lambda_.20} parent=0 // pred_fallthru
    _

// kernel: _lambda_.23
$region0: #{_lambda_.23}
  #allocation0 [shape = 'u32[]', space=smem, size = 0x4, offset = 0x4, fixed_abs, tag = 'smem constant byte address 0x4 - core index']
  #allocation1 [shape = 'u32[72,128]{1,0:T(1,128)}', space=vmem, size = 0x9000, scoped, tag = 'internal scratch']
  %s0 = inlined_call_operand.vmem [shape: bf16[36,128], index: 0, kind: input, shape index: {}]
  %s1 = inlined_call_operand.vmem [shape: bf16[8,36], index: 1, kind: input, shape index: {}]
  %s2 = inlined_call_operand.vmem [shape: f32[8,1], index: 2, kind: input, shape index: {}]
  %s3 = inlined_call_operand.vmem [shape: f32[8,1], index: 3, kind: input, shape index: {}]
  %s4 = inlined_call_operand.vmem [shape: f32[8,128], index: 4, kind: output, shape index: {}]
  %s5 = sld [smem:[#allocation0]]
  $region26: #{_lambda_.23} parent=0
    _
  %s7 = ssub.s32 1, %s5
  %s8 = scalar_select 0, %s7, %s5
  // Predicated region
  $region2: #{_lambda_.23} parent=0 // pred_check
    _
  $region3: #{_lambda_.23} parent=0 // pred_check_branch
    %10 = sbr.rel (0) target = $region5
  $region4: #{_lambda_.23} parent=0 // pred_region
    _
  $region5: #{_lambda_.23} parent=0 // pred_fallthru
    _
  // Predicated region
  $region6: #{_lambda_.23} parent=0 // pred_check
    _
  $region7: #{_lambda_.23} parent=0 // pred_check_branch
    %12 = sbr.rel (0) target = $region9
  $region8: #{_lambda_.23} parent=0 // pred_region
    _
  $region9: #{_lambda_.23} parent=0 // pred_fallthru
    _
  // Predicated region
  $region10: #{_lambda_.23} parent=0 // pred_check
    _
  $region11: #{_lambda_.23} parent=0 // pred_check_branch
    %14 = sbr.rel (0) target = $region13
  $region12: #{_lambda_.23} parent=0 // pred_region
    _
  $region13: #{_lambda_.23} parent=0 // pred_fallthru
    _
  // Predicated region
  $region14: #{_lambda_.23} parent=0 // pred_check
    _
  $region15: #{_lambda_.23} parent=0 // pred_check_branch
    %16 = sbr.rel (0) target = $region17
  $region16: #{_lambda_.23} parent=0 // pred_region
    _
  $region17: #{_lambda_.23} parent=0 // pred_fallthru
    _
  %v18 = vld [vmem:[%s1] sm:$0xf]
  %v19 = vld [vmem:[%s0] sm:$0xf]
  %v20 = vld [vmem:[%s0 + $0x4] sm:$0xf]
  %v21 = vld [vmem:[%s0 + $0x8] sm:$0xf]
  %v22 = vld [vmem:[%s0 + $0xc] sm:$0xf]
  %v23 = vld [vmem:[%s0 + $0x10] sm:$0x3]
  %v29 = vunpack.c.l.b16 %v19
  %v30 = vunpack.c.l.b16 %v20
  %v31 = vunpack.c.l.b16 %v21
  %v32 = vunpack.c.l.b16 %v22
  %v33 = vunpack.c.l.b16 %v23
  %v34 = vpack.c.b16 %v30, %v29
  %v35 = vpack.c.b16 %v32, %v31
  %v36 = vpack.c.b16 %v33, %v33
  %vm39 = vcmask 293888
  %v41 = vsel %vm39, %v18, 0
  %vm43 = vcmask 1041408
  %v45 = vsel %vm43, %v36, 0
  %47 = vmatpush.bf16.msra.mxu0 0
  %48 = vmatpush.bf16.msra.mxu0 0
  %49 = vmatpush.bf16.msra.mxu0 0
  %50 = vmatpush.bf16.msra.mxu0 0
  %51 = vmatpush.bf16.msra.mxu0 0
  %52 = vmatpush.bf16.msra.mxu0 %v45
  %53 = vmatpush.bf16.msra.mxu0 %v35
  %54 = vmatpush.bf16.msra.mxu0 %v34
  %55 = vmatmul.bf16.gmra.mxu0 %v41
  %v56 = vpop.f32.mrf.mxu0
  %v57 = vadd.f32 0.0, %v56
  %v58 = vpop.f32.mrf.mxu0
  %59 = vdwg.mxu0
  %v60 = vld [vmem:[%s2] sm:$0xff]
  %v61 = vld [vmem:[%s3] sm:$0xff]
  %62 = vadd.xlane.f32.xlu0 %v57
  %v63 = vpop.xlane.xlu0 %62
  %v64 = vrcp.pop 128.0
  %v65 = vmul.f32 128.0, %v64
  %v66 = vsub.f32 1.0, %v65
  %v67 = vmul.f32 %v64, %v66
  %v68 = vadd.f32 %v64, %v67
  %vm69 = vweird.f32 %v64
  %v70 = vsel %vm69, %v64, %v68
  %v71 = vmul.f32 %v63, %v70
  %v72 = vmul.f32 %v57, %v57
  %73 = vadd.xlane.f32.xlu0 %v72
  %v74 = vpop.xlane.xlu0 %73
  %v75 = vmul.f32 %v74, %v70
  %v76 = vmul.f32 %v71, %v71
  %v77 = vsub.f32 %v75, %v76
  %v78 = vmax.f32 %v77, 0.0
  %v79 = vadd.f32 %v78, 1e-05
  %v80 = vrsqrt.pop %v79
  %v81 = vmul.f32 %v80, %v79
  %v82 = vmul.f32 %v81, %v80
  %v83 = vmul.f32 0.5, %v82
  %v84 = vsub.f32 1.5, %v83
  %v85 = vmul.f32 %v80, %v84
  %vm86 = vweird.f32 %v79
  %vm87 = vweird.f32 %v80
  %vm88 = vmor %vm86, %vm87
  %v89 = vsel %vm88, %v80, %v85
  %v90 = vmul.f32 %v60, %v89
  %v91 = vmul.f32 %v71, %v90
  %v92 = vsub.f32 %v61, %v91
  %94 = vset.pattern.permute.xlu0 0
  %95 = vperm.xlu0 %94, %v90
  %v96 = vpop.permute.xlu0 %95
  %v98 = vmul.f32 %v57, %v96
  %100 = vset.pattern.permute.xlu0 0
  %101 = vperm.xlu0 %100, %v92
  %v102 = vpop.permute.xlu0 %101
  %v104 = vadd.f32 %v98, %v102
  %v105 = vmax.f32 %v104, 0.0
  %106 = vst [vmem:[%s4] sm:$0xff] %v105
  // Predicated region
  $region18: #{_lambda_.23} parent=0 // pred_check
    _
  $region19: #{_lambda_.23} parent=0 // pred_check_branch
    %108 = sbr.rel (0) target = $region21
  $region20: #{_lambda_.23} parent=0 // pred_region
    _
  $region21: #{_lambda_.23} parent=0 // pred_fallthru
    _
  // Predicated region
  $region22: #{_lambda_.23} parent=0 // pred_check
    _
  $region23: #{_lambda_.23} parent=0 // pred_check_branch
    %110 = sbr.rel (0) target = $region25
  $region24: #{_lambda_.23} parent=0 // pred_region
    _
  $region25: #{_lambda_.23} parent=0 // pred_fallthru
    _

// kernel: _lambda_.26
$region0: #{_lambda_.26}
  #allocation0 [shape = 'u32[]', space=smem, size = 0x4, offset = 0x4, fixed_abs, tag = 'smem constant byte address 0x4 - core index']
  #allocation1 [shape = 'u32[72,128]{1,0:T(1,128)}', space=vmem, size = 0x9000, scoped, tag = 'internal scratch']
  %s0 = inlined_call_operand.vmem [shape: bf16[72,128], index: 0, kind: input, shape index: {}]
  %s1 = inlined_call_operand.vmem [shape: bf16[8,72], index: 1, kind: input, shape index: {}]
  %s2 = inlined_call_operand.vmem [shape: f32[8,1], index: 2, kind: input, shape index: {}]
  %s3 = inlined_call_operand.vmem [shape: f32[8,1], index: 3, kind: input, shape index: {}]
  %s4 = inlined_call_operand.vmem [shape: f32[8,128], index: 4, kind: input, shape index: {}]
  %s5 = inlined_call_operand.vmem [shape: f32[8,128], index: 5, kind: output, shape index: {}]
  %s6 = sld [smem:[#allocation0]]
  $region30: #{_lambda_.26} parent=0
    _
  %s8 = ssub.s32 1, %s6
  %s9 = scalar_select 0, %s8, %s6
  // Predicated region
  $region2: #{_lambda_.26} parent=0 // pred_check
    _
  $region3: #{_lambda_.26} parent=0 // pred_check_branch
    %11 = sbr.rel (0) target = $region5
  $region4: #{_lambda_.26} parent=0 // pred_region
    _
  $region5: #{_lambda_.26} parent=0 // pred_fallthru
    _
  // Predicated region
  $region6: #{_lambda_.26} parent=0 // pred_check
    _
  $region7: #{_lambda_.26} parent=0 // pred_check_branch
    %13 = sbr.rel (0) target = $region9
  $region8: #{_lambda_.26} parent=0 // pred_region
    _
  $region9: #{_lambda_.26} parent=0 // pred_fallthru
    _
  // Predicated region
  $region10: #{_lambda_.26} parent=0 // pred_check
    _
  $region11: #{_lambda_.26} parent=0 // pred_check_branch
    %15 = sbr.rel (0) target = $region13
  $region12: #{_lambda_.26} parent=0 // pred_region
    _
  $region13: #{_lambda_.26} parent=0 // pred_fallthru
    _
  // Predicated region
  $region14: #{_lambda_.26} parent=0 // pred_check
    _
  $region15: #{_lambda_.26} parent=0 // pred_check_branch
    %17 = sbr.rel (0) target = $region17
  $region16: #{_lambda_.26} parent=0 // pred_region
    _
  $region17: #{_lambda_.26} parent=0 // pred_fallthru
    _
  // Predicated region
  $region18: #{_lambda_.26} parent=0 // pred_check
    _
  $region19: #{_lambda_.26} parent=0 // pred_check_branch
    %19 = sbr.rel (0) target = $region21
  $region20: #{_lambda_.26} parent=0 // pred_region
    _
  $region21: #{_lambda_.26} parent=0 // pred_fallthru
    _
  %v21 = vld [vmem:[%s1] sm:$0xf]
  %v22 = vld [vmem:[%s0] sm:$0xf]
  %v23 = vld [vmem:[%s0 + $0x4] sm:$0xf]
  %v24 = vld [vmem:[%s0 + $0x8] sm:$0xf]
  %v25 = vld [vmem:[%s0 + $0xc] sm:$0xf]
  %v26 = vld [vmem:[%s0 + $0x10] sm:$0xf]
  %v27 = vld [vmem:[%s0 + $0x14] sm:$0xf]
  %v28 = vld [vmem:[%s0 + $0x18] sm:$0xf]
  %v29 = vld [vmem:[%s0 + $0x1c] sm:$0xf]
  %v30 = vld [vmem:[%s0 + $0x20] sm:$0xf]
  %v40 = vunpack.c.l.b16 %v22
  %v41 = vunpack.c.l.b16 %v23
  %v42 = vunpack.c.l.b16 %v24
  %v43 = vunpack.c.l.b16 %v25
  %v44 = vunpack.c.l.b16 %v26
  %v45 = vunpack.c.l.b16 %v27
  %v46 = vunpack.c.l.b16 %v28
  %v47 = vunpack.c.l.b16 %v29
  %v48 = vunpack.c.l.b16 %v30
  %v49 = vpack.c.b16 %v41, %v40
  %v50 = vpack.c.b16 %v43, %v42
  %v51 = vpack.c.b16 %v45, %v44
  %v52 = vpack.c.b16 %v47, %v46
  %v53 = vpack.c.b16 %v48, %v48
  %vm58 = vcmask 588800
  %v60 = vsel %vm58, %v21, 0
  %vm62 = vcmask 1043456
  %v64 = vsel %vm62, %v53, 0
  %66 = vmatpush.bf16.msra.mxu0 0
  %67 = vmatpush.bf16.msra.mxu0 0
  %68 = vmatpush.bf16.msra.mxu0 0
  %69 = vmatpush.bf16.msra.mxu0 %v64
  %70 = vmatpush.bf16.msra.mxu0 %v52
  %71 = vmatpush.bf16.msra.mxu0 %v51
  %72 = vmatpush.bf16.msra.mxu0 %v50
  %73 = vmatpush.bf16.msra.mxu0 %v49
  %74 = vmatmul.bf16.gmra.mxu0 %v60
  %v75 = vpop.f32.mrf.mxu0
  %v76 = vadd.f32 0.0, %v75
  %v77 = vpop.f32.mrf.mxu0
  %78 = vdwg.mxu0
  %v79 = vld [vmem:[%s2] sm:$0xff]
  %v80 = vld [vmem:[%s3] sm:$0xff]
  %81 = vadd.xlane.f32.xlu0 %v76
  %v82 = vpop.xlane.xlu0 %81
  %v83 = vrcp.pop 128.0
  %v84 = vmul.f32 128.0, %v83
  %v85 = vsub.f32 1.0, %v84
  %v86 = vmul.f32 %v83, %v85
  %v87 = vadd.f32 %v83, %v86
  %vm88 = vweird.f32 %v83
  %v89 = vsel %vm88, %v83, %v87
  %v90 = vmul.f32 %v82, %v89
  %v91 = vmul.f32 %v76, %v76
  %92 = vadd.xlane.f32.xlu0 %v91
  %v93 = vpop.xlane.xlu0 %92
  %v94 = vmul.f32 %v93, %v89
  %v95 = vmul.f32 %v90, %v90
  %v96 = vsub.f32 %v94, %v95
  %v97 = vmax.f32 %v96, 0.0
  %v98 = vadd.f32 %v97, 1e-05
  %v99 = vrsqrt.pop %v98
  %v100 = vmul.f32 %v99, %v98
  %v101 = vmul.f32 %v100, %v99
  %v102 = vmul.f32 0.5, %v101
  %v103 = vsub.f32 1.5, %v102
  %v104 = vmul.f32 %v99, %v103
  %vm105 = vweird.f32 %v98
  %vm106 = vweird.f32 %v99
  %vm107 = vmor %vm105, %vm106
  %v108 = vsel %vm107, %v99, %v104
  %v109 = vmul.f32 %v79, %v108
  %v110 = vmul.f32 %v90, %v109
  %v111 = vsub.f32 %v80, %v110
  %113 = vset.pattern.permute.xlu0 0
  %114 = vperm.xlu0 %113, %v109
  %v115 = vpop.permute.xlu0 %114
  %v117 = vmul.f32 %v76, %v115
  %119 = vset.pattern.permute.xlu0 0
  %120 = vperm.xlu0 %119, %v111
  %v121 = vpop.permute.xlu0 %120
  %v123 = vadd.f32 %v117, %v121
  %v124 = vld [vmem:[%s4] sm:$0xff]
  %v125 = vadd.f32 %v123, %v124
  %v126 = vmax.f32 %v125, 0.0
  %127 = vst [vmem:[%s5] sm:$0xff] %v126
  // Predicated region
  $region22: #{_lambda_.26} parent=0 // pred_check
    _
  $region23: #{_lambda_.26} parent=0 // pred_check_branch
    %129 = sbr.rel (0) target = $region25
  $region24: #{_lambda_.26} parent=0 // pred_region
    _
  $region25: #{_lambda_.26} parent=0 // pred_fallthru
    _
  // Predicated region
  $region26: #{_lambda_.26} parent=0 // pred_check
    _
  $region27: #{_lambda_.26} parent=0 // pred_check_branch
    %131 = sbr.rel (0) target = $region29
  $region28: #{_lambda_.26} parent=0 // pred_region
    _
  $region29: #{_lambda_.26} parent=0 // pred_fallthru
    _

// kernel: _lambda_.25
$region0: #{_lambda_.25}
  #allocation0 [shape = 'u32[]', space=smem, size = 0x4, offset = 0x4, fixed_abs, tag = 'smem constant byte address 0x4 - core index']
  #allocation1 [shape = 'u32[72,128]{1,0:T(1,128)}', space=vmem, size = 0x9000, scoped, tag = 'internal scratch']
  %s0 = inlined_call_operand.vmem [shape: bf16[72,128], index: 0, kind: input, shape index: {}]
  %s1 = inlined_call_operand.vmem [shape: bf16[8,72], index: 1, kind: input, shape index: {}]
  %s2 = inlined_call_operand.vmem [shape: f32[8,1], index: 2, kind: input, shape index: {}]
  %s3 = inlined_call_operand.vmem [shape: f32[8,1], index: 3, kind: input, shape index: {}]
  %s4 = inlined_call_operand.vmem [shape: f32[8,128], index: 4, kind: output, shape index: {}]
  %s5 = sld [smem:[#allocation0]]
  $region26: #{_lambda_.25} parent=0
    _
  %s7 = ssub.s32 1, %s5
  %s8 = scalar_select 0, %s7, %s5
  // Predicated region
  $region2: #{_lambda_.25} parent=0 // pred_check
    _
  $region3: #{_lambda_.25} parent=0 // pred_check_branch
    %10 = sbr.rel (0) target = $region5
  $region4: #{_lambda_.25} parent=0 // pred_region
    _
  $region5: #{_lambda_.25} parent=0 // pred_fallthru
    _
  // Predicated region
  $region6: #{_lambda_.25} parent=0 // pred_check
    _
  $region7: #{_lambda_.25} parent=0 // pred_check_branch
    %12 = sbr.rel (0) target = $region9
  $region8: #{_lambda_.25} parent=0 // pred_region
    _
  $region9: #{_lambda_.25} parent=0 // pred_fallthru
    _
  // Predicated region
  $region10: #{_lambda_.25} parent=0 // pred_check
    _
  $region11: #{_lambda_.25} parent=0 // pred_check_branch
    %14 = sbr.rel (0) target = $region13
  $region12: #{_lambda_.25} parent=0 // pred_region
    _
  $region13: #{_lambda_.25} parent=0 // pred_fallthru
    _
  // Predicated region
  $region14: #{_lambda_.25} parent=0 // pred_check
    _
  $region15: #{_lambda_.25} parent=0 // pred_check_branch
    %16 = sbr.rel (0) target = $region17
  $region16: #{_lambda_.25} parent=0 // pred_region
    _
  $region17: #{_lambda_.25} parent=0 // pred_fallthru
    _
  %v18 = vld [vmem:[%s1] sm:$0xf]
  %v19 = vld [vmem:[%s0] sm:$0xf]
  %v20 = vld [vmem:[%s0 + $0x4] sm:$0xf]
  %v21 = vld [vmem:[%s0 + $0x8] sm:$0xf]
  %v22 = vld [vmem:[%s0 + $0xc] sm:$0xf]
  %v23 = vld [vmem:[%s0 + $0x10] sm:$0xf]
  %v24 = vld [vmem:[%s0 + $0x14] sm:$0xf]
  %v25 = vld [vmem:[%s0 + $0x18] sm:$0xf]
  %v26 = vld [vmem:[%s0 + $0x1c] sm:$0xf]
  %v27 = vld [vmem:[%s0 + $0x20] sm:$0xf]
  %v37 = vunpack.c.l.b16 %v19
  %v38 = vunpack.c.l.b16 %v20
  %v39 = vunpack.c.l.b16 %v21
  %v40 = vunpack.c.l.b16 %v22
  %v41 = vunpack.c.l.b16 %v23
  %v42 = vunpack.c.l.b16 %v24
  %v43 = vunpack.c.l.b16 %v25
  %v44 = vunpack.c.l.b16 %v26
  %v45 = vunpack.c.l.b16 %v27
  %v46 = vpack.c.b16 %v38, %v37
  %v47 = vpack.c.b16 %v40, %v39
  %v48 = vpack.c.b16 %v42, %v41
  %v49 = vpack.c.b16 %v44, %v43
  %v50 = vpack.c.b16 %v45, %v45
  %vm55 = vcmask 588800
  %v57 = vsel %vm55, %v18, 0
  %vm59 = vcmask 1043456
  %v61 = vsel %vm59, %v50, 0
  %63 = vmatpush.bf16.msra.mxu0 0
  %64 = vmatpush.bf16.msra.mxu0 0
  %65 = vmatpush.bf16.msra.mxu0 0
  %66 = vmatpush.bf16.msra.mxu0 %v61
  %67 = vmatpush.bf16.msra.mxu0 %v49
  %68 = vmatpush.bf16.msra.mxu0 %v48
  %69 = vmatpush.bf16.msra.mxu0 %v47
  %70 = vmatpush.bf16.msra.mxu0 %v46
  %71 = vmatmul.bf16.gmra.mxu0 %v57
  %v72 = vpop.f32.mrf.mxu0
  %v73 = vadd.f32 0.0, %v72
  %v74 = vpop.f32.mrf.mxu0
  %75 = vdwg.mxu0
  %v76 = vld [vmem:[%s2] sm:$0xff]
  %v77 = vld [vmem:[%s3] sm:$0xff]
  %78 = vadd.xlane.f32.xlu0 %v73
  %v79 = vpop.xlane.xlu0 %78
  %v80 = vrcp.pop 128.0
  %v81 = vmul.f32 128.0, %v80
  %v82 = vsub.f32 1.0, %v81
  %v83 = vmul.f32 %v80, %v82
  %v84 = vadd.f32 %v80, %v83
  %vm85 = vweird.f32 %v80
  %v86 = vsel %vm85, %v80, %v84
  %v87 = vmul.f32 %v79, %v86
  %v88 = vmul.f32 %v73, %v73
  %89 = vadd.xlane.f32.xlu0 %v88
  %v90 = vpop.xlane.xlu0 %89
  %v91 = vmul.f32 %v90, %v86
  %v92 = vmul.f32 %v87, %v87
  %v93 = vsub.f32 %v91, %v92
  %v94 = vmax.f32 %v93, 0.0
  %v95 = vadd.f32 %v94, 1e-05
  %v96 = vrsqrt.pop %v95
  %v97 = vmul.f32 %v96, %v95
  %v98 = vmul.f32 %v97, %v96
  %v99 = vmul.f32 0.5, %v98
  %v100 = vsub.f32 1.5, %v99
  %v101 = vmul.f32 %v96, %v100
  %vm102 = vweird.f32 %v95
  %vm103 = vweird.f32 %v96
  %vm104 = vmor %vm102, %vm103
  %v105 = vsel %vm104, %v96, %v101
  %v106 = vmul.f32 %v76, %v105
  %v107 = vmul.f32 %v87, %v106
  %v108 = vsub.f32 %v77, %v107
  %110 = vset.pattern.permute.xlu0 0
  %111 = vperm.xlu0 %110, %v106
  %v112 = vpop.permute.xlu0 %111
  %v114 = vmul.f32 %v73, %v112
  %116 = vset.pattern.permute.xlu0 0
  %117 = vperm.xlu0 %116, %v108
  %v118 = vpop.permute.xlu0 %117
  %v120 = vadd.f32 %v114, %v118
  %v121 = vmax.f32 %v120, 0.0
  %122 = vst [vmem:[%s4] sm:$0xff] %v121
  // Predicated region
  $region18: #{_lambda_.25} parent=0 // pred_check
    _
  $region19: #{_lambda_.25} parent=0 // pred_check_branch
    %124 = sbr.rel (0) target = $region21
  $region20: #{_lambda_.25} parent=0 // pred_region
    _
  $region21: #{_lambda_.25} parent=0 // pred_fallthru
    _
  // Predicated region
  $region22: #{_lambda_.25} parent=0 // pred_check
    _
  $region23: #{_lambda_.25} parent=0 // pred_check_branch
    %126 = sbr.rel (0) target = $region25
  $region24: #{_lambda_.25} parent=0 // pred_region
    _
  $region25: #{_lambda_.25} parent=0 // pred_fallthru
    _

// kernel: _lambda_.24
$region0: #{_lambda_.24}
  #allocation0 [shape = 'u32[]', space=smem, size = 0x4, offset = 0x4, fixed_abs, tag = 'smem constant byte address 0x4 - core index']
  #allocation1 [shape = 'u32[72,128]{1,0:T(1,128)}', space=vmem, size = 0x9000, scoped, tag = 'internal scratch']
  %s0 = inlined_call_operand.vmem [shape: bf16[72,128], index: 0, kind: input, shape index: {}]
  %s1 = inlined_call_operand.vmem [shape: bf16[8,72], index: 1, kind: input, shape index: {}]
  %s2 = inlined_call_operand.vmem [shape: f32[8,1], index: 2, kind: input, shape index: {}]
  %s3 = inlined_call_operand.vmem [shape: f32[8,1], index: 3, kind: input, shape index: {}]
  %s4 = inlined_call_operand.vmem [shape: bf16[4,128], index: 4, kind: input, shape index: {}]
  %s5 = inlined_call_operand.vmem [shape: bf16[8,4], index: 5, kind: input, shape index: {}]
  %s6 = inlined_call_operand.vmem [shape: f32[8,1], index: 6, kind: input, shape index: {}]
  %s7 = inlined_call_operand.vmem [shape: f32[8,1], index: 7, kind: input, shape index: {}]
  %s8 = inlined_call_operand.vmem [shape: f32[8,128], index: 8, kind: output, shape index: {}]
  %s9 = sld [smem:[#allocation0]]
  $region42: #{_lambda_.24} parent=0
    _
  %s11 = ssub.s32 1, %s9
  %s12 = scalar_select 0, %s11, %s9
  // Predicated region
  $region2: #{_lambda_.24} parent=0 // pred_check
    _
  $region3: #{_lambda_.24} parent=0 // pred_check_branch
    %14 = sbr.rel (0) target = $region5
  $region4: #{_lambda_.24} parent=0 // pred_region
    _
  $region5: #{_lambda_.24} parent=0 // pred_fallthru
    _
  // Predicated region
  $region6: #{_lambda_.24} parent=0 // pred_check
    _
  $region7: #{_lambda_.24} parent=0 // pred_check_branch
    %16 = sbr.rel (0) target = $region9
  $region8: #{_lambda_.24} parent=0 // pred_region
    _
  $region9: #{_lambda_.24} parent=0 // pred_fallthru
    _
  // Predicated region
  $region10: #{_lambda_.24} parent=0 // pred_check
    _
  $region11: #{_lambda_.24} parent=0 // pred_check_branch
    %18 = sbr.rel (0) target = $region13
  $region12: #{_lambda_.24} parent=0 // pred_region
    _
  $region13: #{_lambda_.24} parent=0 // pred_fallthru
    _
  // Predicated region
  $region14: #{_lambda_.24} parent=0 // pred_check
    _
  $region15: #{_lambda_.24} parent=0 // pred_check_branch
    %20 = sbr.rel (0) target = $region17
  $region16: #{_lambda_.24} parent=0 // pred_region
    _
  $region17: #{_lambda_.24} parent=0 // pred_fallthru
    _
  // Predicated region
  $region18: #{_lambda_.24} parent=0 // pred_check
    _
  $region19: #{_lambda_.24} parent=0 // pred_check_branch
    %22 = sbr.rel (0) target = $region21
  $region20: #{_lambda_.24} parent=0 // pred_region
    _
  $region21: #{_lambda_.24} parent=0 // pred_fallthru
    _
  // Predicated region
  $region22: #{_lambda_.24} parent=0 // pred_check
    _
  $region23: #{_lambda_.24} parent=0 // pred_check_branch
    %24 = sbr.rel (0) target = $region25
  $region24: #{_lambda_.24} parent=0 // pred_region
    _
  $region25: #{_lambda_.24} parent=0 // pred_fallthru
    _
  // Predicated region
  $region26: #{_lambda_.24} parent=0 // pred_check
    _
  $region27: #{_lambda_.24} parent=0 // pred_check_branch
    %26 = sbr.rel (0) target = $region29
  $region28: #{_lambda_.24} parent=0 // pred_region
    _
  $region29: #{_lambda_.24} parent=0 // pred_fallthru
    _
  // Predicated region
  $region30: #{_lambda_.24} parent=0 // pred_check
    _
  $region31: #{_lambda_.24} parent=0 // pred_check_branch
    %28 = sbr.rel (0) target = $region33
  $region32: #{_lambda_.24} parent=0 // pred_region
    _
  $region33: #{_lambda_.24} parent=0 // pred_fallthru
    _
  %v30 = vld [vmem:[%s1] sm:$0xf]
  %v31 = vld [vmem:[%s0] sm:$0xf]
  %v32 = vld [vmem:[%s0 + $0x4] sm:$0xf]
  %v33 = vld [vmem:[%s0 + $0x8] sm:$0xf]
  %v34 = vld [vmem:[%s0 + $0xc] sm:$0xf]
  %v35 = vld [vmem:[%s0 + $0x10] sm:$0xf]
  %v36 = vld [vmem:[%s0 + $0x14] sm:$0xf]
  %v37 = vld [vmem:[%s0 + $0x18] sm:$0xf]
  %v38 = vld [vmem:[%s0 + $0x1c] sm:$0xf]
  %v39 = vld [vmem:[%s0 + $0x20] sm:$0xf]
  %v49 = vunpack.c.l.b16 %v31
  %v50 = vunpack.c.l.b16 %v32
  %v51 = vunpack.c.l.b16 %v33
  %v52 = vunpack.c.l.b16 %v34
  %v53 = vunpack.c.l.b16 %v35
  %v54 = vunpack.c.l.b16 %v36
  %v55 = vunpack.c.l.b16 %v37
  %v56 = vunpack.c.l.b16 %v38
  %v57 = vunpack.c.l.b16 %v39
  %v58 = vpack.c.b16 %v50, %v49
  %v59 = vpack.c.b16 %v52, %v51
  %v60 = vpack.c.b16 %v54, %v53
  %v61 = vpack.c.b16 %v56, %v55
  %v62 = vpack.c.b16 %v57, %v57
  %vm67 = vcmask 588800
  %v69 = vsel %vm67, %v30, 0
  %vm71 = vcmask 1043456
  %v73 = vsel %vm71, %v62, 0
  %75 = vmatpush.bf16.msra.mxu0 0
  %76 = vmatpush.bf16.msra.mxu0 0
  %77 = vmatpush.bf16.msra.mxu0 0
  %78 = vmatpush.bf16.msra.mxu0 %v73
  %79 = vmatpush.bf16.msra.mxu0 %v61
  %80 = vmatpush.bf16.msra.mxu0 %v60
  %81 = vmatpush.bf16.msra.mxu0 %v59
  %82 = vmatpush.bf16.msra.mxu0 %v58
  %83 = vmatmul.bf16.gmra.mxu0 %v69
  %v84 = vpop.f32.mrf.mxu0
  %v85 = vadd.f32 0.0, %v84
  %v86 = vpop.f32.mrf.mxu0
  %87 = vdwg.mxu0
  %v88 = vld [vmem:[%s5] sm:$0xf]
  %v89 = vld [vmem:[%s4] sm:$0x3]
  %vm90 = vcmask 31744
  %v92 = vsel %vm90, %v88, 0
  %vm94 = vcmask 1041408
  %v96 = vsel %vm94, %v89, 0
  %98 = vmatpush.bf16.msra.mxu0 0
  %99 = vmatpush.bf16.msra.mxu0 0
  %100 = vmatpush.bf16.msra.mxu0 0
  %101 = vmatpush.bf16.msra.mxu0 0
  %102 = vmatpush.bf16.msra.mxu0 0
  %103 = vmatpush.bf16.msra.mxu0 0
  %104 = vmatpush.bf16.msra.mxu0 0
  %105 = vmatpush.bf16.msra.mxu0 %v96
  %106 = vmatmul.bf16.gmra.mxu0 %v92
  %v107 = vpop.f32.mrf.mxu0
  %v108 = vadd.f32 0.0, %v107
  %v109 = vpop.f32.mrf.mxu0
  %110 = vdwg.mxu0
  %v111 = vld [vmem:[%s2] sm:$0xff]
  %v112 = vld [vmem:[%s3] sm:$0xff]
  %113 = vadd.xlane.f32.xlu0 %v85
  %v114 = vpop.xlane.xlu0 %113
  %v115 = vrcp.pop 128.0
  %v116 = vmul.f32 128.0, %v115
  %v117 = vsub.f32 1.0, %v116
  %v118 = vmul.f32 %v115, %v117
  %v119 = vadd.f32 %v115, %v118
  %vm120 = vweird.f32 %v115
  %v121 = vsel %vm120, %v115, %v119
  %v122 = vmul.f32 %v114, %v121
  %v123 = vmul.f32 %v85, %v85
  %124 = vadd.xlane.f32.xlu0 %v123
  %v125 = vpop.xlane.xlu0 %124
  %v126 = vmul.f32 %v125, %v121
  %v127 = vmul.f32 %v122, %v122
  %v128 = vsub.f32 %v126, %v127
  %v129 = vmax.f32 %v128, 0.0
  %v130 = vadd.f32 %v129, 1e-05
  %v131 = vrsqrt.pop %v130
  %v132 = vmul.f32 %v131, %v130
  %v133 = vmul.f32 %v132, %v131
  %v134 = vmul.f32 0.5, %v133
  %v135 = vsub.f32 1.5, %v134
  %v136 = vmul.f32 %v131, %v135
  %vm137 = vweird.f32 %v130
  %vm138 = vweird.f32 %v131
  %vm139 = vmor %vm137, %vm138
  %v140 = vsel %vm139, %v131, %v136
  %v141 = vmul.f32 %v111, %v140
  %v142 = vmul.f32 %v122, %v141
  %v143 = vsub.f32 %v112, %v142
  %145 = vset.pattern.permute.xlu0 0
  %146 = vperm.xlu0 %145, %v141
  %v147 = vpop.permute.xlu0 %146
  %v149 = vmul.f32 %v85, %v147
  %151 = vset.pattern.permute.xlu0 0
  %152 = vperm.xlu0 %151, %v143
  %v153 = vpop.permute.xlu0 %152
  %v155 = vadd.f32 %v149, %v153
  %v156 = vld [vmem:[%s6] sm:$0xff]
  %v157 = vld [vmem:[%s7] sm:$0xff]
  %158 = vadd.xlane.f32.xlu0 %v108
  %v159 = vpop.xlane.xlu0 %158
  %v160 = vmul.f32 %v159, %v121
  %v161 = vmul.f32 %v108, %v108
  %162 = vadd.xlane.f32.xlu0 %v161
  %v163 = vpop.xlane.xlu0 %162
  %v164 = vmul.f32 %v163, %v121
  %v165 = vmul.f32 %v160, %v160
  %v166 = vsub.f32 %v164, %v165
  %v167 = vmax.f32 %v166, 0.0
  %v168 = vadd.f32 %v167, 1e-05
  %v169 = vrsqrt.pop %v168
  %v170 = vmul.f32 %v169, %v168
  %v171 = vmul.f32 %v170, %v169
  %v172 = vmul.f32 0.5, %v171
  %v173 = vsub.f32 1.5, %v172
  %v174 = vmul.f32 %v169, %v173
  %vm175 = vweird.f32 %v168
  %vm176 = vweird.f32 %v169
  %vm177 = vmor %vm175, %vm176
  %v178 = vsel %vm177, %v169, %v174
  %v179 = vmul.f32 %v156, %v178
  %v180 = vmul.f32 %v160, %v179
  %v181 = vsub.f32 %v157, %v180
  %183 = vset.pattern.permute.xlu0 0
  %184 = vperm.xlu0 %183, %v179
  %v185 = vpop.permute.xlu0 %184
  %v187 = vmul.f32 %v108, %v185
  %189 = vset.pattern.permute.xlu0 0
  %190 = vperm.xlu0 %189, %v181
  %v191 = vpop.permute.xlu0 %190
  %v193 = vadd.f32 %v187, %v191
  %v194 = vadd.f32 %v155, %v193
  %v195 = vmax.f32 %v194, 0.0
  %196 = vst [vmem:[%s8] sm:$0xff] %v195
  // Predicated region
  $region34: #{_lambda_.24} parent=0 // pred_check
    _
  $region35: #{_lambda_.24} parent=0 // pred_check_branch
    %198 = sbr.rel (0) target = $region37
  $region36: #{_lambda_.24} parent=0 // pred_region
    _
  $region37: #{_lambda_.24} parent=0 // pred_fallthru
    _
  // Predicated region
  $region38: #{_lambda_.24} parent=0 // pred_check
    _
  $region39: #{_lambda_.24} parent=0 // pred_check_branch
    %200 = sbr.rel (0) target = $region41
  $region40: #{_lambda_.24} parent=0 // pred_region
    _
  $region41: #{_lambda_.24} parent=0 // pred_fallthru
    _

// kernel: _lambda_.27
$region0: #{_lambda_.27}
  #allocation0 [shape = 'u32[]', space=smem, size = 0x4, offset = 0x4, fixed_abs, tag = 'smem constant byte address 0x4 - core index']
  #allocation1 [shape = 'u32[72,128]{1,0:T(1,128)}', space=vmem, size = 0x9000, scoped, tag = 'internal scratch']
  %s0 = inlined_call_operand.vmem [shape: bf16[72,32], index: 0, kind: input, shape index: {}]
  %s1 = inlined_call_operand.vmem [shape: bf16[16,72], index: 1, kind: input, shape index: {}]
  %s2 = inlined_call_operand.vmem [shape: f32[16,1], index: 2, kind: input, shape index: {}]
  %s3 = inlined_call_operand.vmem [shape: f32[16,1], index: 3, kind: input, shape index: {}]
  %s4 = inlined_call_operand.vmem [shape: f32[16,32], index: 4, kind: output, shape index: {}]
  %s5 = sld [smem:[#allocation0]]
  $region26: #{_lambda_.27} parent=0
    _
  %s7 = ssub.s32 1, %s5
  %s8 = scalar_select 0, %s7, %s5
  // Predicated region
  $region2: #{_lambda_.27} parent=0 // pred_check
    _
  $region3: #{_lambda_.27} parent=0 // pred_check_branch
    %10 = sbr.rel (0) target = $region5
  $region4: #{_lambda_.27} parent=0 // pred_region
    _
  $region5: #{_lambda_.27} parent=0 // pred_fallthru
    _
  // Predicated region
  $region6: #{_lambda_.27} parent=0 // pred_check
    _
  $region7: #{_lambda_.27} parent=0 // pred_check_branch
    %12 = sbr.rel (0) target = $region9
  $region8: #{_lambda_.27} parent=0 // pred_region
    _
  $region9: #{_lambda_.27} parent=0 // pred_fallthru
    _
  // Predicated region
  $region10: #{_lambda_.27} parent=0 // pred_check
    _
  $region11: #{_lambda_.27} parent=0 // pred_check_branch
    %14 = sbr.rel (0) target = $region13
  $region12: #{_lambda_.27} parent=0 // pred_region
    _
  $region13: #{_lambda_.27} parent=0 // pred_fallthru
    _
  // Predicated region
  $region14: #{_lambda_.27} parent=0 // pred_check
    _
  $region15: #{_lambda_.27} parent=0 // pred_check_branch
    %16 = sbr.rel (0) target = $region17
  $region16: #{_lambda_.27} parent=0 // pred_region
    _
  $region17: #{_lambda_.27} parent=0 // pred_fallthru
    _
  %v18 = vld [vmem:[%s1] sm:$0xf]
  %v19 = vld [vmem:[%s1 + $0x4] sm:$0xf]
  %v20 = vld [vmem:[%s0] sm:$0xf]
  %v21 = vld [vmem:[%s0 + $0x4] sm:$0xf]
  %v22 = vld [vmem:[%s0 + $0x8] sm:$0xf]
  %v23 = vld [vmem:[%s0 + $0xc] sm:$0xf]
  %v24 = vld [vmem:[%s0 + $0x10] sm:$0xf]
  %v25 = vld [vmem:[%s0 + $0x14] sm:$0xf]
  %v26 = vld [vmem:[%s0 + $0x18] sm:$0xf]
  %v27 = vld [vmem:[%s0 + $0x1c] sm:$0xf]
  %v28 = vld [vmem:[%s0 + $0x20] sm:$0xf]
  %v31 = vunpack.c.l.b16 %v18
  %v32 = vunpack.c.l.b16 %v19
  %v33 = vpack.c.b16 %v32, %v31
  %v43 = vunpack.c.l.b16 %v20
  %v44 = vunpack.c.l.b16 %v21
  %v45 = vunpack.c.l.b16 %v22
  %v46 = vunpack.c.l.b16 %v23
  %v47 = vunpack.c.l.b16 %v24
  %v48 = vunpack.c.l.b16 %v25
  %v49 = vunpack.c.l.b16 %v26
  %v50 = vunpack.c.l.b16 %v27
  %v51 = vunpack.c.l.b16 %v28
  %v52 = vpack.c.b16 %v44, %v43
  %v53 = vpack.c.b16 %v46, %v45
  %v54 = vpack.c.b16 %v48, %v47
  %v55 = vpack.c.b16 %v50, %v49
  %v56 = vpack.c.b16 %v51, %v51
  %vm61 = vcmask 588800
  %v63 = vsel %vm61, %v33, 0
  %vm65 = vcmask 1043456
  %v67 = vsel %vm65, %v56, 0
  %69 = vmatpush.bf16.msra.mxu0 0
  %70 = vmatpush.bf16.msra.mxu0 0
  %71 = vmatpush.bf16.msra.mxu0 0
  %72 = vmatpush.bf16.msra.mxu0 %v67
  %73 = vmatpush.bf16.msra.mxu0 %v55
  %74 = vmatpush.bf16.msra.mxu0 %v54
  %75 = vmatpush.bf16.msra.mxu0 %v53
  %76 = vmatpush.bf16.msra.mxu0 %v52
  %77 = vmatmul.bf16.gmra.mxu0 %v63
  %v78 = vpop.f32.mrf.mxu0
  %v79 = vadd.f32 0.0, %v78
  %v80 = vpop.f32.mrf.mxu0
  %v81 = vadd.f32 0.0, %v80
  %82 = vdwg.mxu0
  %v83 = vld [vmem:[%s2] sm:$0xff]
  %v84 = vld [vmem:[%s2 + $0x8] sm:$0xff]
  %v85 = vld [vmem:[%s3] sm:$0xff]
  %v86 = vld [vmem:[%s3 + $0x8] sm:$0xff]
  %vm87 = vcmask 261120
  %v88 = vsel %vm87, %v79, 0.0
  %89 = vadd.xlane.f32.xlu0 %v88
  %v90 = vpop.xlane.xlu0 %89
  %v91 = vsel %vm87, %v81, 0.0
  %92 = vadd.xlane.f32.xlu0 %v91
  %v93 = vpop.xlane.xlu0 %92
  %v94 = vrcp.pop 32.0
  %v95 = vmul.f32 32.0, %v94
  %v96 = vsub.f32 1.0, %v95
  %v97 = vmul.f32 %v94, %v96
  %v98 = vadd.f32 %v94, %v97
  %vm99 = vweird.f32 %v94
  %v100 = vsel %vm99, %v94, %v98
  %v101 = vmul.f32 %v90, %v100
  %v102 = vmul.f32 %v93, %v100
  %v103 = vmul.f32 %v79, %v79
  %v104 = vmul.f32 %v81, %v81
  %v105 = vsel %vm87, %v103, 0.0
  %106 = vadd.xlane.f32.xlu0 %v105
  %v107 = vpop.xlane.xlu0 %106
  %v108 = vsel %vm87, %v104, 0.0
  %109 = vadd.xlane.f32.xlu0 %v108
  %v110 = vpop.xlane.xlu0 %109
  %v111 = vmul.f32 %v107, %v100
  %v112 = vmul.f32 %v110, %v100
  %v113 = vmul.f32 %v101, %v101
  %v114 = vmul.f32 %v102, %v102
  %v115 = vsub.f32 %v111, %v113
  %v116 = vsub.f32 %v112, %v114
  %v117 = vmax.f32 %v115, 0.0
  %v118 = vmax.f32 %v116, 0.0
  %v119 = vadd.f32 %v117, 1e-05
  %v120 = vadd.f32 %v118, 1e-05
  %v121 = vrsqrt.pop %v119
  %v122 = vmul.f32 %v121, %v119
  %v123 = vmul.f32 %v122, %v121
  %v124 = vmul.f32 0.5, %v123
  %v125 = vsub.f32 1.5, %v124
  %v126 = vmul.f32 %v121, %v125
  %vm127 = vweird.f32 %v119
  %vm128 = vweird.f32 %v121
  %vm129 = vmor %vm127, %vm128
  %v130 = vsel %vm129, %v121, %v126
  %v131 = vrsqrt.pop %v120
  %v132 = vmul.f32 %v131, %v120
  %v133 = vmul.f32 %v132, %v131
  %v134 = vmul.f32 0.5, %v133
  %v135 = vsub.f32 1.5, %v134
  %v136 = vmul.f32 %v131, %v135
  %vm137 = vweird.f32 %v120
  %vm138 = vweird.f32 %v131
  %vm139 = vmor %vm137, %vm138
  %v140 = vsel %vm139, %v131, %v136
  %v141 = vmul.f32 %v83, %v130
  %v142 = vmul.f32 %v84, %v140
  %v143 = vmul.f32 %v101, %v141
  %v144 = vmul.f32 %v102, %v142
  %v145 = vsub.f32 %v85, %v143
  %v146 = vsub.f32 %v86, %v144
  %148 = vset.pattern.permute.xlu0 0
  %149 = vperm.xlu0 %148, %v141
  %v150 = vpop.permute.xlu0 %149
  %153 = vset.pattern.permute.xlu0 0
  %154 = vperm.xlu0 %153, %v142
  %v155 = vpop.permute.xlu0 %154
  %v157 = vmul.f32 %v79, %v150
  %v158 = vmul.f32 %v81, %v155
  %160 = vset.pattern.permute.xlu0 0
  %161 = vperm.xlu0 %160, %v145
  %v162 = vpop.permute.xlu0 %161
  %165 = vset.pattern.permute.xlu0 0
  %166 = vperm.xlu0 %165, %v146
  %v167 = vpop.permute.xlu0 %166
  %v169 = vadd.f32 %v157, %v162
  %v170 = vadd.f32 %v158, %v167
  %v171 = vmax.f32 %v169, 0.0
  %v172 = vmax.f32 %v170, 0.0
  %173 = vst.msk [vmem:[%s4] sm:$0xff] %vm87, %v171
  %174 = vst.msk [vmem:[%s4 + $0x8] sm:$0xff] %vm87, %v172
  // Predicated region
  $region18: #{_lambda_.27} parent=0 // pred_check
    _
  $region19: #{_lambda_.27} parent=0 // pred_check_branch
    %176 = sbr.rel (0) target = $region21
  $region20: #{_lambda_.27} parent=0 // pred_region
    _
  $region21: #{_lambda_.27} parent=0 // pred_fallthru
    _
  // Predicated region
  $region22: #{_lambda_.27} parent=0 // pred_check
    _
  $region23: #{_lambda_.27} parent=0 // pred_check_branch
    %178 = sbr.rel (0) target = $region25
  $region24: #{_lambda_.27} parent=0 // pred_region
    _
  $region25: #{_lambda_.27} parent=0 // pred_fallthru
    _

// kernel: _lambda_.29
$region0: #{_lambda_.29}
  #allocation0 [shape = 'u32[]', space=smem, size = 0x4, offset = 0x4, fixed_abs, tag = 'smem constant byte address 0x4 - core index']
  #allocation1 [shape = 'u32[72,128]{1,0:T(1,128)}', space=vmem, size = 0x9000, scoped, tag = 'internal scratch']
  %s0 = inlined_call_operand.vmem [shape: bf16[144,32], index: 0, kind: input, shape index: {}]
  %s1 = inlined_call_operand.vmem [shape: bf16[16,144], index: 1, kind: input, shape index: {}]
  %s2 = inlined_call_operand.vmem [shape: f32[16,1], index: 2, kind: input, shape index: {}]
  %s3 = inlined_call_operand.vmem [shape: f32[16,1], index: 3, kind: input, shape index: {}]
  %s4 = inlined_call_operand.vmem [shape: f32[16,32], index: 4, kind: output, shape index: {}]
  %s5 = sld [smem:[#allocation0]]
  $region26: #{_lambda_.29} parent=0
    _
  %s7 = ssub.s32 1, %s5
  %s8 = scalar_select 0, %s7, %s5
  // Predicated region
  $region2: #{_lambda_.29} parent=0 // pred_check
    _
  $region3: #{_lambda_.29} parent=0 // pred_check_branch
    %10 = sbr.rel (0) target = $region5
  $region4: #{_lambda_.29} parent=0 // pred_region
    _
  $region5: #{_lambda_.29} parent=0 // pred_fallthru
    _
  // Predicated region
  $region6: #{_lambda_.29} parent=0 // pred_check
    _
  $region7: #{_lambda_.29} parent=0 // pred_check_branch
    %12 = sbr.rel (0) target = $region9
  $region8: #{_lambda_.29} parent=0 // pred_region
    _
  $region9: #{_lambda_.29} parent=0 // pred_fallthru
    _
  // Predicated region
  $region10: #{_lambda_.29} parent=0 // pred_check
    _
  $region11: #{_lambda_.29} parent=0 // pred_check_branch
    %14 = sbr.rel (0) target = $region13
  $region12: #{_lambda_.29} parent=0 // pred_region
    _
  $region13: #{_lambda_.29} parent=0 // pred_fallthru
    _
  // Predicated region
  $region14: #{_lambda_.29} parent=0 // pred_check
    _
  $region15: #{_lambda_.29} parent=0 // pred_check_branch
    %16 = sbr.rel (0) target = $region17
  $region16: #{_lambda_.29} parent=0 // pred_region
    _
  $region17: #{_lambda_.29} parent=0 // pred_fallthru
    _
  %v18 = vld [vmem:[%s1] sm:$0xff]
  %v19 = vld [vmem:[%s1 + $0x8] sm:$0xff]
  %v20 = vld [vmem:[%s0] sm:$0xf]
  %v21 = vld [vmem:[%s0 + $0x4] sm:$0xf]
  %v22 = vld [vmem:[%s0 + $0x8] sm:$0xf]
  %v23 = vld [vmem:[%s0 + $0xc] sm:$0xf]
  %v24 = vld [vmem:[%s0 + $0x10] sm:$0xf]
  %v25 = vld [vmem:[%s0 + $0x14] sm:$0xf]
  %v26 = vld [vmem:[%s0 + $0x18] sm:$0xf]
  %v27 = vld [vmem:[%s0 + $0x1c] sm:$0xf]
  %v28 = vld [vmem:[%s0 + $0x20] sm:$0xf]
  %v29 = vld [vmem:[%s0 + $0x24] sm:$0xf]
  %v30 = vld [vmem:[%s0 + $0x28] sm:$0xf]
  %v31 = vld [vmem:[%s0 + $0x2c] sm:$0xf]
  %v32 = vld [vmem:[%s0 + $0x30] sm:$0xf]
  %v33 = vld [vmem:[%s0 + $0x34] sm:$0xf]
  %v34 = vld [vmem:[%s0 + $0x38] sm:$0xf]
  %v35 = vld [vmem:[%s0 + $0x3c] sm:$0xf]
  %v36 = vld [vmem:[%s0 + $0x40] sm:$0xf]
  %v37 = vld [vmem:[%s0 + $0x44] sm:$0xf]
  %v40 = vunpack.c.l.b16 %v18
  %v41 = vunpack.c.h.b16 %v18
  %v42 = vunpack.c.l.b16 %v19
  %v43 = vunpack.c.h.b16 %v19
  %v44 = vpack.c.b16 %v42, %v40
  %v45 = vpack.c.b16 %v43, %v41
  %v65 = vunpack.c.l.b16 %v20
  %v66 = vunpack.c.l.b16 %v21
  %v67 = vunpack.c.l.b16 %v22
  %v68 = vunpack.c.l.b16 %v23
  %v69 = vunpack.c.l.b16 %v24
  %v70 = vunpack.c.l.b16 %v25
  %v71 = vunpack.c.l.b16 %v26
  %v72 = vunpack.c.l.b16 %v27
  %v73 = vunpack.c.l.b16 %v28
  %v74 = vunpack.c.l.b16 %v29
  %v75 = vunpack.c.l.b16 %v30
  %v76 = vunpack.c.l.b16 %v31
  %v77 = vunpack.c.l.b16 %v32
  %v78 = vunpack.c.l.b16 %v33
  %v79 = vunpack.c.l.b16 %v34
  %v80 = vunpack.c.l.b16 %v35
  %v81 = vunpack.c.l.b16 %v36
  %v82 = vunpack.c.l.b16 %v37
  %v83 = vpack.c.b16 %v66, %v65
  %v84 = vpack.c.b16 %v68, %v67
  %v85 = vpack.c.b16 %v70, %v69
  %v86 = vpack.c.b16 %v72, %v71
  %v87 = vpack.c.b16 %v74, %v73
  %v88 = vpack.c.b16 %v76, %v75
  %v89 = vpack.c.b16 %v78, %v77
  %v90 = vpack.c.b16 %v80, %v79
  %v91 = vpack.c.b16 %v82, %v81
  %vm101 = vcmask 130048
  %v103 = vsel %vm101, %v45, 0
  %105 = vmatpush.bf16.msra.mxu0 %v90
  %106 = vmatpush.bf16.msra.mxu0 %v89
  %107 = vmatpush.bf16.msra.mxu0 %v88
  %108 = vmatpush.bf16.msra.mxu0 %v87
  %109 = vmatpush.bf16.msra.mxu0 %v86
  %110 = vmatpush.bf16.msra.mxu0 %v85
  %111 = vmatpush.bf16.msra.mxu0 %v84
  %112 = vmatpush.bf16.msra.mxu0 %v83
  %113 = vmatmul.bf16.gmra.mxu0 %v44
  %v114 = vpop.f32.mrf.mxu0
  %v115 = vadd.f32 0.0, %v114
  %v116 = vpop.f32.mrf.mxu0
  %v117 = vadd.f32 0.0, %v116
  %118 = vdwg.mxu0
  %119 = vmatpush.bf16.msra.mxu0 0
  %120 = vmatpush.bf16.msra.mxu0 0
  %121 = vmatpush.bf16.msra.mxu0 0
  %122 = vmatpush.bf16.msra.mxu0 0
  %123 = vmatpush.bf16.msra.mxu0 0
  %124 = vmatpush.bf16.msra.mxu0 0
  %125 = vmatpush.bf16.msra.mxu0 0
  %126 = vmatpush.bf16.msra.mxu0 %v91
  %127 = vmatmul.bf16.gmra.mxu0 %v103
  %v128 = vpop.f32.mrf.mxu0
  %v129 = vadd.f32 %v115, %v128
  %v130 = vpop.f32.mrf.mxu0
  %v131 = vadd.f32 %v117, %v130
  %132 = vdwg.mxu0
  %v133 = vld [vmem:[%s2] sm:$0xff]
  %v134 = vld [vmem:[%s2 + $0x8] sm:$0xff]
  %v135 = vld [vmem:[%s3] sm:$0xff]
  %v136 = vld [vmem:[%s3 + $0x8] sm:$0xff]
  %vm137 = vcmask 261120
  %v138 = vsel %vm137, %v129, 0.0
  %139 = vadd.xlane.f32.xlu0 %v138
  %v140 = vpop.xlane.xlu0 %139
  %v141 = vsel %vm137, %v131, 0.0
  %142 = vadd.xlane.f32.xlu0 %v141
  %v143 = vpop.xlane.xlu0 %142
  %v144 = vrcp.pop 32.0
  %v145 = vmul.f32 32.0, %v144
  %v146 = vsub.f32 1.0, %v145
  %v147 = vmul.f32 %v144, %v146
  %v148 = vadd.f32 %v144, %v147
  %vm149 = vweird.f32 %v144
  %v150 = vsel %vm149, %v144, %v148
  %v151 = vmul.f32 %v140, %v150
  %v152 = vmul.f32 %v143, %v150
  %v153 = vmul.f32 %v129, %v129
  %v154 = vmul.f32 %v131, %v131
  %v155 = vsel %vm137, %v153, 0.0
  %156 = vadd.xlane.f32.xlu0 %v155
  %v157 = vpop.xlane.xlu0 %156
  %v158 = vsel %vm137, %v154, 0.0
  %159 = vadd.xlane.f32.xlu0 %v158
  %v160 = vpop.xlane.xlu0 %159
  %v161 = vmul.f32 %v157, %v150
  %v162 = vmul.f32 %v160, %v150
  %v163 = vmul.f32 %v151, %v151
  %v164 = vmul.f32 %v152, %v152
  %v165 = vsub.f32 %v161, %v163
  %v166 = vsub.f32 %v162, %v164
  %v167 = vmax.f32 %v165, 0.0
  %v168 = vmax.f32 %v166, 0.0
  %v169 = vadd.f32 %v167, 1e-05
  %v170 = vadd.f32 %v168, 1e-05
  %v171 = vrsqrt.pop %v169
  %v172 = vmul.f32 %v171, %v169
  %v173 = vmul.f32 %v172, %v171
  %v174 = vmul.f32 0.5, %v173
  %v175 = vsub.f32 1.5, %v174
  %v176 = vmul.f32 %v171, %v175
  %vm177 = vweird.f32 %v169
  %vm178 = vweird.f32 %v171
  %vm179 = vmor %vm177, %vm178
  %v180 = vsel %vm179, %v171, %v176
  %v181 = vrsqrt.pop %v170
  %v182 = vmul.f32 %v181, %v170
  %v183 = vmul.f32 %v182, %v181
  %v184 = vmul.f32 0.5, %v183
  %v185 = vsub.f32 1.5, %v184
  %v186 = vmul.f32 %v181, %v185
  %vm187 = vweird.f32 %v170
  %vm188 = vweird.f32 %v181
  %vm189 = vmor %vm187, %vm188
  %v190 = vsel %vm189, %v181, %v186
  %v191 = vmul.f32 %v133, %v180
  %v192 = vmul.f32 %v134, %v190
  %v193 = vmul.f32 %v151, %v191
  %v194 = vmul.f32 %v152, %v192
  %v195 = vsub.f32 %v135, %v193
  %v196 = vsub.f32 %v136, %v194
  %198 = vset.pattern.permute.xlu0 0
  %199 = vperm.xlu0 %198, %v191
  %v200 = vpop.permute.xlu0 %199
  %203 = vset.pattern.permute.xlu0 0
  %204 = vperm.xlu0 %203, %v192
  %v205 = vpop.permute.xlu0 %204
  %v207 = vmul.f32 %v129, %v200
  %v208 = vmul.f32 %v131, %v205
  %210 = vset.pattern.permute.xlu0 0
  %211 = vperm.xlu0 %210, %v195
  %v212 = vpop.permute.xlu0 %211
  %215 = vset.pattern.permute.xlu0 0
  %216 = vperm.xlu0 %215, %v196
  %v217 = vpop.permute.xlu0 %216
  %v219 = vadd.f32 %v207, %v212
  %v220 = vadd.f32 %v208, %v217
  %v221 = vmax.f32 %v219, 0.0
  %v222 = vmax.f32 %v220, 0.0
  %223 = vst.msk [vmem:[%s4] sm:$0xff] %vm137, %v221
  %224 = vst.msk [vmem:[%s4 + $0x8] sm:$0xff] %vm137, %v222
  // Predicated region
  $region18: #{_lambda_.29} parent=0 // pred_check
    _
  $region19: #{_lambda_.29} parent=0 // pred_check_branch
    %226 = sbr.rel (0) target = $region21
  $region20: #{_lambda_.29} parent=0 // pred_region
    _
  $region21: #{_lambda_.29} parent=0 // pred_fallthru
    _
  // Predicated region
  $region22: #{_lambda_.29} parent=0 // pred_check
    _
  $region23: #{_lambda_.29} parent=0 // pred_check_branch
    %228 = sbr.rel (0) target = $region25
  $region24: #{_lambda_.29} parent=0 // pred_region
    _
  $region25: #{_lambda_.29} parent=0 // pred_fallthru
    _

// kernel: _lambda_.30
$region0: #{_lambda_.30}
  #allocation0 [shape = 'u32[]', space=smem, size = 0x4, offset = 0x4, fixed_abs, tag = 'smem constant byte address 0x4 - core index']
  #allocation1 [shape = 'u32[72,128]{1,0:T(1,128)}', space=vmem, size = 0x9000, scoped, tag = 'internal scratch']
  %s0 = inlined_call_operand.vmem [shape: bf16[144,32], index: 0, kind: input, shape index: {}]
  %s1 = inlined_call_operand.vmem [shape: bf16[16,144], index: 1, kind: input, shape index: {}]
  %s2 = inlined_call_operand.vmem [shape: f32[16,1], index: 2, kind: input, shape index: {}]
  %s3 = inlined_call_operand.vmem [shape: f32[16,1], index: 3, kind: input, shape index: {}]
  %s4 = inlined_call_operand.vmem [shape: f32[16,32], index: 4, kind: input, shape index: {}]
  %s5 = inlined_call_operand.vmem [shape: f32[16,32], index: 5, kind: output, shape index: {}]
  %s6 = sld [smem:[#allocation0]]
  $region30: #{_lambda_.30} parent=0
    _
  %s8 = ssub.s32 1, %s6
  %s9 = scalar_select 0, %s8, %s6
  // Predicated region
  $region2: #{_lambda_.30} parent=0 // pred_check
    _
  $region3: #{_lambda_.30} parent=0 // pred_check_branch
    %11 = sbr.rel (0) target = $region5
  $region4: #{_lambda_.30} parent=0 // pred_region
    _
  $region5: #{_lambda_.30} parent=0 // pred_fallthru
    _
  // Predicated region
  $region6: #{_lambda_.30} parent=0 // pred_check
    _
  $region7: #{_lambda_.30} parent=0 // pred_check_branch
    %13 = sbr.rel (0) target = $region9
  $region8: #{_lambda_.30} parent=0 // pred_region
    _
  $region9: #{_lambda_.30} parent=0 // pred_fallthru
    _
  // Predicated region
  $region10: #{_lambda_.30} parent=0 // pred_check
    _
  $region11: #{_lambda_.30} parent=0 // pred_check_branch
    %15 = sbr.rel (0) target = $region13
  $region12: #{_lambda_.30} parent=0 // pred_region
    _
  $region13: #{_lambda_.30} parent=0 // pred_fallthru
    _
  // Predicated region
  $region14: #{_lambda_.30} parent=0 // pred_check
    _
  $region15: #{_lambda_.30} parent=0 // pred_check_branch
    %17 = sbr.rel (0) target = $region17
  $region16: #{_lambda_.30} parent=0 // pred_region
    _
  $region17: #{_lambda_.30} parent=0 // pred_fallthru
    _
  // Predicated region
  $region18: #{_lambda_.30} parent=0 // pred_check
    _
  $region19: #{_lambda_.30} parent=0 // pred_check_branch
    %19 = sbr.rel (0) target = $region21
  $region20: #{_lambda_.30} parent=0 // pred_region
    _
  $region21: #{_lambda_.30} parent=0 // pred_fallthru
    _
  %v21 = vld [vmem:[%s1] sm:$0xff]
  %v22 = vld [vmem:[%s1 + $0x8] sm:$0xff]
  %v23 = vld [vmem:[%s0] sm:$0xf]
  %v24 = vld [vmem:[%s0 + $0x4] sm:$0xf]
  %v25 = vld [vmem:[%s0 + $0x8] sm:$0xf]
  %v26 = vld [vmem:[%s0 + $0xc] sm:$0xf]
  %v27 = vld [vmem:[%s0 + $0x10] sm:$0xf]
  %v28 = vld [vmem:[%s0 + $0x14] sm:$0xf]
  %v29 = vld [vmem:[%s0 + $0x18] sm:$0xf]
  %v30 = vld [vmem:[%s0 + $0x1c] sm:$0xf]
  %v31 = vld [vmem:[%s0 + $0x20] sm:$0xf]
  %v32 = vld [vmem:[%s0 + $0x24] sm:$0xf]
  %v33 = vld [vmem:[%s0 + $0x28] sm:$0xf]
  %v34 = vld [vmem:[%s0 + $0x2c] sm:$0xf]
  %v35 = vld [vmem:[%s0 + $0x30] sm:$0xf]
  %v36 = vld [vmem:[%s0 + $0x34] sm:$0xf]
  %v37 = vld [vmem:[%s0 + $0x38] sm:$0xf]
  %v38 = vld [vmem:[%s0 + $0x3c] sm:$0xf]
  %v39 = vld [vmem:[%s0 + $0x40] sm:$0xf]
  %v40 = vld [vmem:[%s0 + $0x44] sm:$0xf]
  %v43 = vunpack.c.l.b16 %v21
  %v44 = vunpack.c.h.b16 %v21
  %v45 = vunpack.c.l.b16 %v22
  %v46 = vunpack.c.h.b16 %v22
  %v47 = vpack.c.b16 %v45, %v43
  %v48 = vpack.c.b16 %v46, %v44
  %v68 = vunpack.c.l.b16 %v23
  %v69 = vunpack.c.l.b16 %v24
  %v70 = vunpack.c.l.b16 %v25
  %v71 = vunpack.c.l.b16 %v26
  %v72 = vunpack.c.l.b16 %v27
  %v73 = vunpack.c.l.b16 %v28
  %v74 = vunpack.c.l.b16 %v29
  %v75 = vunpack.c.l.b16 %v30
  %v76 = vunpack.c.l.b16 %v31
  %v77 = vunpack.c.l.b16 %v32
  %v78 = vunpack.c.l.b16 %v33
  %v79 = vunpack.c.l.b16 %v34
  %v80 = vunpack.c.l.b16 %v35
  %v81 = vunpack.c.l.b16 %v36
  %v82 = vunpack.c.l.b16 %v37
  %v83 = vunpack.c.l.b16 %v38
  %v84 = vunpack.c.l.b16 %v39
  %v85 = vunpack.c.l.b16 %v40
  %v86 = vpack.c.b16 %v69, %v68
  %v87 = vpack.c.b16 %v71, %v70
  %v88 = vpack.c.b16 %v73, %v72
  %v89 = vpack.c.b16 %v75, %v74
  %v90 = vpack.c.b16 %v77, %v76
  %v91 = vpack.c.b16 %v79, %v78
  %v92 = vpack.c.b16 %v81, %v80
  %v93 = vpack.c.b16 %v83, %v82
  %v94 = vpack.c.b16 %v85, %v84
  %vm104 = vcmask 130048
  %v106 = vsel %vm104, %v48, 0
  %108 = vmatpush.bf16.msra.mxu0 %v93
  %109 = vmatpush.bf16.msra.mxu0 %v92
  %110 = vmatpush.bf16.msra.mxu0 %v91
  %111 = vmatpush.bf16.msra.mxu0 %v90
  %112 = vmatpush.bf16.msra.mxu0 %v89
  %113 = vmatpush.bf16.msra.mxu0 %v88
  %114 = vmatpush.bf16.msra.mxu0 %v87
  %115 = vmatpush.bf16.msra.mxu0 %v86
  %116 = vmatmul.bf16.gmra.mxu0 %v47
  %v117 = vpop.f32.mrf.mxu0
  %v118 = vadd.f32 0.0, %v117
  %v119 = vpop.f32.mrf.mxu0
  %v120 = vadd.f32 0.0, %v119
  %121 = vdwg.mxu0
  %122 = vmatpush.bf16.msra.mxu0 0
  %123 = vmatpush.bf16.msra.mxu0 0
  %124 = vmatpush.bf16.msra.mxu0 0
  %125 = vmatpush.bf16.msra.mxu0 0
  %126 = vmatpush.bf16.msra.mxu0 0
  %127 = vmatpush.bf16.msra.mxu0 0
  %128 = vmatpush.bf16.msra.mxu0 0
  %129 = vmatpush.bf16.msra.mxu0 %v94
  %130 = vmatmul.bf16.gmra.mxu0 %v106
  %v131 = vpop.f32.mrf.mxu0
  %v132 = vadd.f32 %v118, %v131
  %v133 = vpop.f32.mrf.mxu0
  %v134 = vadd.f32 %v120, %v133
  %135 = vdwg.mxu0
  %v136 = vld [vmem:[%s2] sm:$0xff]
  %v137 = vld [vmem:[%s2 + $0x8] sm:$0xff]
  %v138 = vld [vmem:[%s3] sm:$0xff]
  %v139 = vld [vmem:[%s3 + $0x8] sm:$0xff]
  %vm140 = vcmask 261120
  %v141 = vsel %vm140, %v132, 0.0
  %142 = vadd.xlane.f32.xlu0 %v141
  %v143 = vpop.xlane.xlu0 %142
  %v144 = vsel %vm140, %v134, 0.0
  %145 = vadd.xlane.f32.xlu0 %v144
  %v146 = vpop.xlane.xlu0 %145
  %v147 = vrcp.pop 32.0
  %v148 = vmul.f32 32.0, %v147
  %v149 = vsub.f32 1.0, %v148
  %v150 = vmul.f32 %v147, %v149
  %v151 = vadd.f32 %v147, %v150
  %vm152 = vweird.f32 %v147
  %v153 = vsel %vm152, %v147, %v151
  %v154 = vmul.f32 %v143, %v153
  %v155 = vmul.f32 %v146, %v153
  %v156 = vmul.f32 %v132, %v132
  %v157 = vmul.f32 %v134, %v134
  %v158 = vsel %vm140, %v156, 0.0
  %159 = vadd.xlane.f32.xlu0 %v158
  %v160 = vpop.xlane.xlu0 %159
  %v161 = vsel %vm140, %v157, 0.0
  %162 = vadd.xlane.f32.xlu0 %v161
  %v163 = vpop.xlane.xlu0 %162
  %v164 = vmul.f32 %v160, %v153
  %v165 = vmul.f32 %v163, %v153
  %v166 = vmul.f32 %v154, %v154
  %v167 = vmul.f32 %v155, %v155
  %v168 = vsub.f32 %v164, %v166
  %v169 = vsub.f32 %v165, %v167
  %v170 = vmax.f32 %v168, 0.0
  %v171 = vmax.f32 %v169, 0.0
  %v172 = vadd.f32 %v170, 1e-05
  %v173 = vadd.f32 %v171, 1e-05
  %v174 = vrsqrt.pop %v172
  %v175 = vmul.f32 %v174, %v172
  %v176 = vmul.f32 %v175, %v174
  %v177 = vmul.f32 0.5, %v176
  %v178 = vsub.f32 1.5, %v177
  %v179 = vmul.f32 %v174, %v178
  %vm180 = vweird.f32 %v172
  %vm181 = vweird.f32 %v174
  %vm182 = vmor %vm180, %vm181
  %v183 = vsel %vm182, %v174, %v179
  %v184 = vrsqrt.pop %v173
  %v185 = vmul.f32 %v184, %v173
  %v186 = vmul.f32 %v185, %v184
  %v187 = vmul.f32 0.5, %v186
  %v188 = vsub.f32 1.5, %v187
  %v189 = vmul.f32 %v184, %v188
  %vm190 = vweird.f32 %v173
  %vm191 = vweird.f32 %v184
  %vm192 = vmor %vm190, %vm191
  %v193 = vsel %vm192, %v184, %v189
  %v194 = vmul.f32 %v136, %v183
  %v195 = vmul.f32 %v137, %v193
  %v196 = vmul.f32 %v154, %v194
  %v197 = vmul.f32 %v155, %v195
  %v198 = vsub.f32 %v138, %v196
  %v199 = vsub.f32 %v139, %v197
  %201 = vset.pattern.permute.xlu0 0
  %202 = vperm.xlu0 %201, %v194
  %v203 = vpop.permute.xlu0 %202
  %206 = vset.pattern.permute.xlu0 0
  %207 = vperm.xlu0 %206, %v195
  %v208 = vpop.permute.xlu0 %207
  %v210 = vmul.f32 %v132, %v203
  %v211 = vmul.f32 %v134, %v208
  %213 = vset.pattern.permute.xlu0 0
  %214 = vperm.xlu0 %213, %v198
  %v215 = vpop.permute.xlu0 %214
  %218 = vset.pattern.permute.xlu0 0
  %219 = vperm.xlu0 %218, %v199
  %v220 = vpop.permute.xlu0 %219
  %v222 = vadd.f32 %v210, %v215
  %v223 = vadd.f32 %v211, %v220
  %v224 = vld [vmem:[%s4] sm:$0xff]
  %v225 = vld [vmem:[%s4 + $0x8] sm:$0xff]
  %v226 = vadd.f32 %v222, %v224
  %v227 = vadd.f32 %v223, %v225
  %v228 = vmax.f32 %v226, 0.0
  %v229 = vmax.f32 %v227, 0.0
  %230 = vst.msk [vmem:[%s5] sm:$0xff] %vm140, %v228
  %231 = vst.msk [vmem:[%s5 + $0x8] sm:$0xff] %vm140, %v229
  // Predicated region
  $region22: #{_lambda_.30} parent=0 // pred_check
    _
  $region23: #{_lambda_.30} parent=0 // pred_check_branch
    %233 = sbr.rel (0) target = $region25
  $region24: #{_lambda_.30} parent=0 // pred_region
    _
  $region25: #{_lambda_.30} parent=0 // pred_fallthru
    _
  // Predicated region
  $region26: #{_lambda_.30} parent=0 // pred_check
    _
  $region27: #{_lambda_.30} parent=0 // pred_check_branch
    %235 = sbr.rel (0) target = $region29
  $region28: #{_lambda_.30} parent=0 // pred_region
    _
  $region29: #{_lambda_.30} parent=0 // pred_fallthru
    _

// kernel: _lambda_.28
$region0: #{_lambda_.28}
  #allocation0 [shape = 'u32[]', space=smem, size = 0x4, offset = 0x4, fixed_abs, tag = 'smem constant byte address 0x4 - core index']
  #allocation1 [shape = 'u32[72,128]{1,0:T(1,128)}', space=vmem, size = 0x9000, scoped, tag = 'internal scratch']
  %s0 = inlined_call_operand.vmem [shape: bf16[144,32], index: 0, kind: input, shape index: {}]
  %s1 = inlined_call_operand.vmem [shape: bf16[16,144], index: 1, kind: input, shape index: {}]
  %s2 = inlined_call_operand.vmem [shape: f32[16,1], index: 2, kind: input, shape index: {}]
  %s3 = inlined_call_operand.vmem [shape: f32[16,1], index: 3, kind: input, shape index: {}]
  %s4 = inlined_call_operand.vmem [shape: bf16[8,32], index: 4, kind: input, shape index: {}]
  %s5 = inlined_call_operand.vmem [shape: bf16[16,8], index: 5, kind: input, shape index: {}]
  %s6 = inlined_call_operand.vmem [shape: f32[16,1], index: 6, kind: input, shape index: {}]
  %s7 = inlined_call_operand.vmem [shape: f32[16,1], index: 7, kind: input, shape index: {}]
  %s8 = inlined_call_operand.vmem [shape: f32[16,32], index: 8, kind: output, shape index: {}]
  %s9 = sld [smem:[#allocation0]]
  $region42: #{_lambda_.28} parent=0
    _
  %s11 = ssub.s32 1, %s9
  %s12 = scalar_select 0, %s11, %s9
  // Predicated region
  $region2: #{_lambda_.28} parent=0 // pred_check
    _
  $region3: #{_lambda_.28} parent=0 // pred_check_branch
    %14 = sbr.rel (0) target = $region5
  $region4: #{_lambda_.28} parent=0 // pred_region
    _
  $region5: #{_lambda_.28} parent=0 // pred_fallthru
    _
  // Predicated region
  $region6: #{_lambda_.28} parent=0 // pred_check
    _
  $region7: #{_lambda_.28} parent=0 // pred_check_branch
    %16 = sbr.rel (0) target = $region9
  $region8: #{_lambda_.28} parent=0 // pred_region
    _
  $region9: #{_lambda_.28} parent=0 // pred_fallthru
    _
  // Predicated region
  $region10: #{_lambda_.28} parent=0 // pred_check
    _
  $region11: #{_lambda_.28} parent=0 // pred_check_branch
    %18 = sbr.rel (0) target = $region13
  $region12: #{_lambda_.28} parent=0 // pred_region
    _
  $region13: #{_lambda_.28} parent=0 // pred_fallthru
    _
  // Predicated region
  $region14: #{_lambda_.28} parent=0 // pred_check
    _
  $region15: #{_lambda_.28} parent=0 // pred_check_branch
    %20 = sbr.rel (0) target = $region17
  $region16: #{_lambda_.28} parent=0 // pred_region
    _
  $region17: #{_lambda_.28} parent=0 // pred_fallthru
    _
  // Predicated region
  $region18: #{_lambda_.28} parent=0 // pred_check
    _
  $region19: #{_lambda_.28} parent=0 // pred_check_branch
    %22 = sbr.rel (0) target = $region21
  $region20: #{_lambda_.28} parent=0 // pred_region
    _
  $region21: #{_lambda_.28} parent=0 // pred_fallthru
    _
  // Predicated region
  $region22: #{_lambda_.28} parent=0 // pred_check
    _
  $region23: #{_lambda_.28} parent=0 // pred_check_branch
    %24 = sbr.rel (0) target = $region25
  $region24: #{_lambda_.28} parent=0 // pred_region
    _
  $region25: #{_lambda_.28} parent=0 // pred_fallthru
    _
  // Predicated region
  $region26: #{_lambda_.28} parent=0 // pred_check
    _
  $region27: #{_lambda_.28} parent=0 // pred_check_branch
    %26 = sbr.rel (0) target = $region29
  $region28: #{_lambda_.28} parent=0 // pred_region
    _
  $region29: #{_lambda_.28} parent=0 // pred_fallthru
    _
  // Predicated region
  $region30: #{_lambda_.28} parent=0 // pred_check
    _
  $region31: #{_lambda_.28} parent=0 // pred_check_branch
    %28 = sbr.rel (0) target = $region33
  $region32: #{_lambda_.28} parent=0 // pred_region
    _
  $region33: #{_lambda_.28} parent=0 // pred_fallthru
    _
  %v30 = vld [vmem:[%s1] sm:$0xff]
  %v31 = vld [vmem:[%s1 + $0x8] sm:$0xff]
  %v32 = vld [vmem:[%s0] sm:$0xf]
  %v33 = vld [vmem:[%s0 + $0x4] sm:$0xf]
  %v34 = vld [vmem:[%s0 + $0x8] sm:$0xf]
  %v35 = vld [vmem:[%s0 + $0xc] sm:$0xf]
  %v36 = vld [vmem:[%s0 + $0x10] sm:$0xf]
  %v37 = vld [vmem:[%s0 + $0x14] sm:$0xf]
  %v38 = vld [vmem:[%s0 + $0x18] sm:$0xf]
  %v39 = vld [vmem:[%s0 + $0x1c] sm:$0xf]
  %v40 = vld [vmem:[%s0 + $0x20] sm:$0xf]
  %v41 = vld [vmem:[%s0 + $0x24] sm:$0xf]
  %v42 = vld [vmem:[%s0 + $0x28] sm:$0xf]
  %v43 = vld [vmem:[%s0 + $0x2c] sm:$0xf]
  %v44 = vld [vmem:[%s0 + $0x30] sm:$0xf]
  %v45 = vld [vmem:[%s0 + $0x34] sm:$0xf]
  %v46 = vld [vmem:[%s0 + $0x38] sm:$0xf]
  %v47 = vld [vmem:[%s0 + $0x3c] sm:$0xf]
  %v48 = vld [vmem:[%s0 + $0x40] sm:$0xf]
  %v49 = vld [vmem:[%s0 + $0x44] sm:$0xf]
  %v52 = vunpack.c.l.b16 %v30
  %v53 = vunpack.c.h.b16 %v30
  %v54 = vunpack.c.l.b16 %v31
  %v55 = vunpack.c.h.b16 %v31
  %v56 = vpack.c.b16 %v54, %v52
  %v57 = vpack.c.b16 %v55, %v53
  %v77 = vunpack.c.l.b16 %v32
  %v78 = vunpack.c.l.b16 %v33
  %v79 = vunpack.c.l.b16 %v34
  %v80 = vunpack.c.l.b16 %v35
  %v81 = vunpack.c.l.b16 %v36
  %v82 = vunpack.c.l.b16 %v37
  %v83 = vunpack.c.l.b16 %v38
  %v84 = vunpack.c.l.b16 %v39
  %v85 = vunpack.c.l.b16 %v40
  %v86 = vunpack.c.l.b16 %v41
  %v87 = vunpack.c.l.b16 %v42
  %v88 = vunpack.c.l.b16 %v43
  %v89 = vunpack.c.l.b16 %v44
  %v90 = vunpack.c.l.b16 %v45
  %v91 = vunpack.c.l.b16 %v46
  %v92 = vunpack.c.l.b16 %v47
  %v93 = vunpack.c.l.b16 %v48
  %v94 = vunpack.c.l.b16 %v49
  %v95 = vpack.c.b16 %v78, %v77
  %v96 = vpack.c.b16 %v80, %v79
  %v97 = vpack.c.b16 %v82, %v81
  %v98 = vpack.c.b16 %v84, %v83
  %v99 = vpack.c.b16 %v86, %v85
  %v100 = vpack.c.b16 %v88, %v87
  %v101 = vpack.c.b16 %v90, %v89
  %v102 = vpack.c.b16 %v92, %v91
  %v103 = vpack.c.b16 %v94, %v93
  %vm113 = vcmask 130048
  %v115 = vsel %vm113, %v57, 0
  %117 = vmatpush.bf16.msra.mxu0 %v102
  %118 = vmatpush.bf16.msra.mxu0 %v101
  %119 = vmatpush.bf16.msra.mxu0 %v100
  %120 = vmatpush.bf16.msra.mxu0 %v99
  %121 = vmatpush.bf16.msra.mxu0 %v98
  %122 = vmatpush.bf16.msra.mxu0 %v97
  %123 = vmatpush.bf16.msra.mxu0 %v96
  %124 = vmatpush.bf16.msra.mxu0 %v95
  %125 = vmatmul.bf16.gmra.mxu0 %v56
  %v126 = vpop.f32.mrf.mxu0
  %v127 = vadd.f32 0.0, %v126
  %v128 = vpop.f32.mrf.mxu0
  %v129 = vadd.f32 0.0, %v128
  %130 = vdwg.mxu0
  %131 = vmatpush.bf16.msra.mxu0 0
  %132 = vmatpush.bf16.msra.mxu0 0
  %133 = vmatpush.bf16.msra.mxu0 0
  %134 = vmatpush.bf16.msra.mxu0 0
  %135 = vmatpush.bf16.msra.mxu0 0
  %136 = vmatpush.bf16.msra.mxu0 0
  %137 = vmatpush.bf16.msra.mxu0 0
  %138 = vmatpush.bf16.msra.mxu0 %v103
  %139 = vmatmul.bf16.gmra.mxu0 %v115
  %v140 = vpop.f32.mrf.mxu0
  %v141 = vadd.f32 %v127, %v140
  %v142 = vpop.f32.mrf.mxu0
  %v143 = vadd.f32 %v129, %v142
  %144 = vdwg.mxu0
  %v145 = vld [vmem:[%s5] sm:$0xf]
  %v146 = vld [vmem:[%s5 + $0x4] sm:$0xf]
  %v147 = vld [vmem:[%s4] sm:$0xf]
  %v150 = vunpack.c.l.b16 %v145
  %v151 = vunpack.c.l.b16 %v146
  %v152 = vpack.c.b16 %v151, %v150
  %vm153 = vcmask 64512
  %v155 = vsel %vm153, %v152, 0
  %vm157 = vcmask 1043456
  %v159 = vsel %vm157, %v147, 0
  %161 = vmatpush.bf16.msra.mxu0 0
  %162 = vmatpush.bf16.msra.mxu0 0
  %163 = vmatpush.bf16.msra.mxu0 0
  %164 = vmatpush.bf16.msra.mxu0 0
  %165 = vmatpush.bf16.msra.mxu0 0
  %166 = vmatpush.bf16.msra.mxu0 0
  %167 = vmatpush.bf16.msra.mxu0 0
  %168 = vmatpush.bf16.msra.mxu0 %v159
  %169 = vmatmul.bf16.gmra.mxu0 %v155
  %v170 = vpop.f32.mrf.mxu0
  %v171 = vadd.f32 0.0, %v170
  %v172 = vpop.f32.mrf.mxu0
  %v173 = vadd.f32 0.0, %v172
  %174 = vdwg.mxu0
  %v175 = vld [vmem:[%s2] sm:$0xff]
  %v176 = vld [vmem:[%s2 + $0x8] sm:$0xff]
  %v177 = vld [vmem:[%s3] sm:$0xff]
  %v178 = vld [vmem:[%s3 + $0x8] sm:$0xff]
  %vm179 = vcmask 261120
  %v180 = vsel %vm179, %v141, 0.0
  %181 = vadd.xlane.f32.xlu0 %v180
  %v182 = vpop.xlane.xlu0 %181
  %v183 = vsel %vm179, %v143, 0.0
  %184 = vadd.xlane.f32.xlu0 %v183
  %v185 = vpop.xlane.xlu0 %184
  %v186 = vrcp.pop 32.0
  %v187 = vmul.f32 32.0, %v186
  %v188 = vsub.f32 1.0, %v187
  %v189 = vmul.f32 %v186, %v188
  %v190 = vadd.f32 %v186, %v189
  %vm191 = vweird.f32 %v186
  %v192 = vsel %vm191, %v186, %v190
  %v193 = vmul.f32 %v182, %v192
  %v194 = vmul.f32 %v185, %v192
  %v195 = vmul.f32 %v141, %v141
  %v196 = vmul.f32 %v143, %v143
  %v197 = vsel %vm179, %v195, 0.0
  %198 = vadd.xlane.f32.xlu0 %v197
  %v199 = vpop.xlane.xlu0 %198
  %v200 = vsel %vm179, %v196, 0.0
  %201 = vadd.xlane.f32.xlu0 %v200
  %v202 = vpop.xlane.xlu0 %201
  %v203 = vmul.f32 %v199, %v192
  %v204 = vmul.f32 %v202, %v192
  %v205 = vmul.f32 %v193, %v193
  %v206 = vmul.f32 %v194, %v194
  %v207 = vsub.f32 %v203, %v205
  %v208 = vsub.f32 %v204, %v206
  %v209 = vmax.f32 %v207, 0.0
  %v210 = vmax.f32 %v208, 0.0
  %v211 = vadd.f32 %v209, 1e-05
  %v212 = vadd.f32 %v210, 1e-05
  %v213 = vrsqrt.pop %v211
  %v214 = vmul.f32 %v213, %v211
  %v215 = vmul.f32 %v214, %v213
  %v216 = vmul.f32 0.5, %v215
  %v217 = vsub.f32 1.5, %v216
  %v218 = vmul.f32 %v213, %v217
  %vm219 = vweird.f32 %v211
  %vm220 = vweird.f32 %v213
  %vm221 = vmor %vm219, %vm220
  %v222 = vsel %vm221, %v213, %v218
  %v223 = vrsqrt.pop %v212
  %v224 = vmul.f32 %v223, %v212
  %v225 = vmul.f32 %v224, %v223
  %v226 = vmul.f32 0.5, %v225
  %v227 = vsub.f32 1.5, %v226
  %v228 = vmul.f32 %v223, %v227
  %vm229 = vweird.f32 %v212
  %vm230 = vweird.f32 %v223
  %vm231 = vmor %vm229, %vm230
  %v232 = vsel %vm231, %v223, %v228
  %v233 = vmul.f32 %v175, %v222
  %v234 = vmul.f32 %v176, %v232
  %v235 = vmul.f32 %v193, %v233
  %v236 = vmul.f32 %v194, %v234
  %v237 = vsub.f32 %v177, %v235
  %v238 = vsub.f32 %v178, %v236
  %240 = vset.pattern.permute.xlu0 0
  %241 = vperm.xlu0 %240, %v233
  %v242 = vpop.permute.xlu0 %241
  %245 = vset.pattern.permute.xlu0 0
  %246 = vperm.xlu0 %245, %v234
  %v247 = vpop.permute.xlu0 %246
  %v249 = vmul.f32 %v141, %v242
  %v250 = vmul.f32 %v143, %v247
  %252 = vset.pattern.permute.xlu0 0
  %253 = vperm.xlu0 %252, %v237
  %v254 = vpop.permute.xlu0 %253
  %257 = vset.pattern.permute.xlu0 0
  %258 = vperm.xlu0 %257, %v238
  %v259 = vpop.permute.xlu0 %258
  %v261 = vadd.f32 %v249, %v254
  %v262 = vadd.f32 %v250, %v259
  %v263 = vld [vmem:[%s6] sm:$0xff]
  %v264 = vld [vmem:[%s6 + $0x8] sm:$0xff]
  %v265 = vld [vmem:[%s7] sm:$0xff]
  %v266 = vld [vmem:[%s7 + $0x8] sm:$0xff]
  %v267 = vsel %vm179, %v171, 0.0
  %268 = vadd.xlane.f32.xlu0 %v267
  %v269 = vpop.xlane.xlu0 %268
  %v270 = vsel %vm179, %v173, 0.0
  %271 = vadd.xlane.f32.xlu0 %v270
  %v272 = vpop.xlane.xlu0 %271
  %v273 = vmul.f32 %v269, %v192
  %v274 = vmul.f32 %v272, %v192
  %v275 = vmul.f32 %v171, %v171
  %v276 = vmul.f32 %v173, %v173
  %v277 = vsel %vm179, %v275, 0.0
  %278 = vadd.xlane.f32.xlu0 %v277
  %v279 = vpop.xlane.xlu0 %278
  %v280 = vsel %vm179, %v276, 0.0
  %281 = vadd.xlane.f32.xlu0 %v280
  %v282 = vpop.xlane.xlu0 %281
  %v283 = vmul.f32 %v279, %v192
  %v284 = vmul.f32 %v282, %v192
  %v285 = vmul.f32 %v273, %v273
  %v286 = vmul.f32 %v274, %v274
  %v287 = vsub.f32 %v283, %v285
  %v288 = vsub.f32 %v284, %v286
  %v289 = vmax.f32 %v287, 0.0
  %v290 = vmax.f32 %v288, 0.0
  %v291 = vadd.f32 %v289, 1e-05
  %v292 = vadd.f32 %v290, 1e-05
  %v293 = vrsqrt.pop %v291
  %v294 = vmul.f32 %v293, %v291
  %v295 = vmul.f32 %v294, %v293
  %v296 = vmul.f32 0.5, %v295
  %v297 = vsub.f32 1.5, %v296
  %v298 = vmul.f32 %v293, %v297
  %vm299 = vweird.f32 %v291
  %vm300 = vweird.f32 %v293
  %vm301 = vmor %vm299, %vm300
  %v302 = vsel %vm301, %v293, %v298
  %v303 = vrsqrt.pop %v292
  %v304 = vmul.f32 %v303, %v292
  %v305 = vmul.f32 %v304, %v303
  %v306 = vmul.f32 0.5, %v305
  %v307 = vsub.f32 1.5, %v306
  %v308 = vmul.f32 %v303, %v307
  %vm309 = vweird.f32 %v292
  %vm310 = vweird.f32 %v303
  %vm311 = vmor %vm309, %vm310
  %v312 = vsel %vm311, %v303, %v308
  %v313 = vmul.f32 %v263, %v302
  %v314 = vmul.f32 %v264, %v312
  %v315 = vmul.f32 %v273, %v313
  %v316 = vmul.f32 %v274, %v314
  %v317 = vsub.f32 %v265, %v315
  %v318 = vsub.f32 %v266, %v316
  %320 = vset.pattern.permute.xlu0 0
  %321 = vperm.xlu0 %320, %v313
  %v322 = vpop.permute.xlu0 %321
  %325 = vset.pattern.permute.xlu0 0
  %326 = vperm.xlu0 %325, %v314
  %v327 = vpop.permute.xlu0 %326
  %v329 = vmul.f32 %v171, %v322
  %v330 = vmul.f32 %v173, %v327
  %332 = vset.pattern.permute.xlu0 0
  %333 = vperm.xlu0 %332, %v317
  %v334 = vpop.permute.xlu0 %333
  %337 = vset.pattern.permute.xlu0 0
  %338 = vperm.xlu0 %337, %v318
  %v339 = vpop.permute.xlu0 %338
  %v341 = vadd.f32 %v329, %v334
  %v342 = vadd.f32 %v330, %v339
  %v343 = vadd.f32 %v261, %v341
  %v344 = vadd.f32 %v262, %v342
  %v345 = vmax.f32 %v343, 0.0
  %v346 = vmax.f32 %v344, 0.0
  %347 = vst.msk [vmem:[%s8] sm:$0xff] %vm179, %v345
  %348 = vst.msk [vmem:[%s8 + $0x8] sm:$0xff] %vm179, %v346
  // Predicated region
  $region34: #{_lambda_.28} parent=0 // pred_check
    _
  $region35: #{_lambda_.28} parent=0 // pred_check_branch
    %350 = sbr.rel (0) target = $region37
  $region36: #{_lambda_.28} parent=0 // pred_region
    _
  $region37: #{_lambda_.28} parent=0 // pred_fallthru
    _
  // Predicated region
  $region38: #{_lambda_.28} parent=0 // pred_check
    _
  $region39: #{_lambda_.28} parent=0 // pred_check_branch
    %352 = sbr.rel (0) target = $region41
  $region40: #{_lambda_.28} parent=0 // pred_region
    _
  $region41: #{_lambda_.28} parent=0 // pred_fallthru
    _

// kernel: _lambda_.31
$region0: #{_lambda_.31}
  #allocation0 [shape = 'u32[]', space=smem, size = 0x4, offset = 0x4, fixed_abs, tag = 'smem constant byte address 0x4 - core index']
  #allocation1 [shape = 'u32[72,128]{1,0:T(1,128)}', space=vmem, size = 0x9000, scoped, tag = 'internal scratch']
  %s0 = inlined_call_operand.vmem [shape: bf16[144,8], index: 0, kind: input, shape index: {}]
  %s1 = inlined_call_operand.vmem [shape: bf16[32,144], index: 1, kind: input, shape index: {}]
  %s2 = inlined_call_operand.vmem [shape: f32[32,1], index: 2, kind: input, shape index: {}]
  %s3 = inlined_call_operand.vmem [shape: f32[32,1], index: 3, kind: input, shape index: {}]
  %s4 = inlined_call_operand.vmem [shape: f32[32,8], index: 4, kind: output, shape index: {}]
  %s5 = sld [smem:[#allocation0]]
  $region26: #{_lambda_.31} parent=0
    _
  %s7 = ssub.s32 1, %s5
  %s8 = scalar_select 0, %s7, %s5
  // Predicated region
  $region2: #{_lambda_.31} parent=0 // pred_check
    _
  $region3: #{_lambda_.31} parent=0 // pred_check_branch
    %10 = sbr.rel (0) target = $region5
  $region4: #{_lambda_.31} parent=0 // pred_region
    _
  $region5: #{_lambda_.31} parent=0 // pred_fallthru
    _
  // Predicated region
  $region6: #{_lambda_.31} parent=0 // pred_check
    _
  $region7: #{_lambda_.31} parent=0 // pred_check_branch
    %12 = sbr.rel (0) target = $region9
  $region8: #{_lambda_.31} parent=0 // pred_region
    _
  $region9: #{_lambda_.31} parent=0 // pred_fallthru
    _
  // Predicated region
  $region10: #{_lambda_.31} parent=0 // pred_check
    _
  $region11: #{_lambda_.31} parent=0 // pred_check_branch
    %14 = sbr.rel (0) target = $region13
  $region12: #{_lambda_.31} parent=0 // pred_region
    _
  $region13: #{_lambda_.31} parent=0 // pred_fallthru
    _
  // Predicated region
  $region14: #{_lambda_.31} parent=0 // pred_check
    _
  $region15: #{_lambda_.31} parent=0 // pred_check_branch
    %16 = sbr.rel (0) target = $region17
  $region16: #{_lambda_.31} parent=0 // pred_region
    _
  $region17: #{_lambda_.31} parent=0 // pred_fallthru
    _
  %v18 = vld [vmem:[%s1] sm:$0xff]
  %v19 = vld [vmem:[%s1 + $0x8] sm:$0xff]
  %v20 = vld [vmem:[%s1 + $0x10] sm:$0xff]
  %v21 = vld [vmem:[%s1 + $0x18] sm:$0xff]
  %v22 = vld [vmem:[%s0] sm:$0xf]
  %v23 = vld [vmem:[%s0 + $0x4] sm:$0xf]
  %v24 = vld [vmem:[%s0 + $0x8] sm:$0xf]
  %v25 = vld [vmem:[%s0 + $0xc] sm:$0xf]
  %v26 = vld [vmem:[%s0 + $0x10] sm:$0xf]
  %v27 = vld [vmem:[%s0 + $0x14] sm:$0xf]
  %v28 = vld [vmem:[%s0 + $0x18] sm:$0xf]
  %v29 = vld [vmem:[%s0 + $0x1c] sm:$0xf]
  %v30 = vld [vmem:[%s0 + $0x20] sm:$0xf]
  %v31 = vld [vmem:[%s0 + $0x24] sm:$0xf]
  %v32 = vld [vmem:[%s0 + $0x28] sm:$0xf]
  %v33 = vld [vmem:[%s0 + $0x2c] sm:$0xf]
  %v34 = vld [vmem:[%s0 + $0x30] sm:$0xf]
  %v35 = vld [vmem:[%s0 + $0x34] sm:$0xf]
  %v36 = vld [vmem:[%s0 + $0x38] sm:$0xf]
  %v37 = vld [vmem:[%s0 + $0x3c] sm:$0xf]
  %v38 = vld [vmem:[%s0 + $0x40] sm:$0xf]
  %v39 = vld [vmem:[%s0 + $0x44] sm:$0xf]
  %v44 = vunpack.c.l.b16 %v18
  %v45 = vunpack.c.h.b16 %v18
  %v46 = vunpack.c.l.b16 %v19
  %v47 = vunpack.c.h.b16 %v19
  %v48 = vunpack.c.l.b16 %v20
  %v49 = vunpack.c.h.b16 %v20
  %v50 = vunpack.c.l.b16 %v21
  %v51 = vunpack.c.h.b16 %v21
  %v52 = vpack.c.b16 %v46, %v44
  %v53 = vpack.c.b16 %v47, %v45
  %v54 = vpack.c.b16 %v50, %v48
  %v55 = vpack.c.b16 %v51, %v49
  %v76 = vunpack.c.l.b16 %v22
  %v77 = vunpack.c.l.b16 %v23
  %v78 = vunpack.c.l.b16 %v24
  %v79 = vunpack.c.l.b16 %v25
  %v80 = vunpack.c.l.b16 %v26
  %v81 = vunpack.c.l.b16 %v27
  %v82 = vunpack.c.l.b16 %v28
  %v83 = vunpack.c.l.b16 %v29
  %v84 = vunpack.c.l.b16 %v30
  %v85 = vunpack.c.l.b16 %v31
  %v86 = vunpack.c.l.b16 %v32
  %v87 = vunpack.c.l.b16 %v33
  %v88 = vunpack.c.l.b16 %v34
  %v89 = vunpack.c.l.b16 %v35
  %v90 = vunpack.c.l.b16 %v36
  %v91 = vunpack.c.l.b16 %v37
  %v92 = vunpack.c.l.b16 %v38
  %v93 = vunpack.c.l.b16 %v39
  %v94 = vpack.c.b16 %v77, %v76
  %v95 = vpack.c.b16 %v79, %v78
  %v96 = vpack.c.b16 %v81, %v80
  %v97 = vpack.c.b16 %v83, %v82
  %v98 = vpack.c.b16 %v85, %v84
  %v99 = vpack.c.b16 %v87, %v86
  %v100 = vpack.c.b16 %v89, %v88
  %v101 = vpack.c.b16 %v91, %v90
  %v102 = vpack.c.b16 %v93, %v92
  %vm112 = vcmask 130048
  %v114 = vsel %vm112, %v53, 0
  %v117 = vsel %vm112, %v55, 0
  %119 = vmatpush.bf16.msra.mxu0 %v101
  %120 = vmatpush.bf16.msra.mxu0 %v100
  %121 = vmatpush.bf16.msra.mxu0 %v99
  %122 = vmatpush.bf16.msra.mxu0 %v98
  %123 = vmatpush.bf16.msra.mxu0 %v97
  %124 = vmatpush.bf16.msra.mxu0 %v96
  %125 = vmatpush.bf16.msra.mxu0 %v95
  %126 = vmatpush.bf16.msra.mxu0 %v94
  %127 = vmatmul.bf16.gmra.mxu0 %v52
  %v128 = vpop.f32.mrf.mxu0
  %v129 = vadd.f32 0.0, %v128
  %v130 = vpop.f32.mrf.mxu0
  %v131 = vadd.f32 0.0, %v130
  %132 = vmatmul.bf16.gmra.mxu0 %v54
  %v133 = vpop.f32.mrf.mxu0
  %v134 = vadd.f32 0.0, %v133
  %v135 = vpop.f32.mrf.mxu0
  %v136 = vadd.f32 0.0, %v135
  %137 = vdwg.mxu0
  %138 = vmatpush.bf16.msra.mxu0 0
  %139 = vmatpush.bf16.msra.mxu0 0
  %140 = vmatpush.bf16.msra.mxu0 0
  %141 = vmatpush.bf16.msra.mxu0 0
  %142 = vmatpush.bf16.msra.mxu0 0
  %143 = vmatpush.bf16.msra.mxu0 0
  %144 = vmatpush.bf16.msra.mxu0 0
  %145 = vmatpush.bf16.msra.mxu0 %v102
  %146 = vmatmul.bf16.gmra.mxu0 %v114
  %v147 = vpop.f32.mrf.mxu0
  %v148 = vadd.f32 %v129, %v147
  %v149 = vpop.f32.mrf.mxu0
  %v150 = vadd.f32 %v131, %v149
  %151 = vmatmul.bf16.gmra.mxu0 %v117
  %v152 = vpop.f32.mrf.mxu0
  %v153 = vadd.f32 %v134, %v152
  %v154 = vpop.f32.mrf.mxu0
  %v155 = vadd.f32 %v136, %v154
  %156 = vdwg.mxu0
  %v157 = vld [vmem:[%s2] sm:$0xff]
  %v158 = vld [vmem:[%s2 + $0x8] sm:$0xff]
  %v159 = vld [vmem:[%s2 + $0x10] sm:$0xff]
  %v160 = vld [vmem:[%s2 + $0x18] sm:$0xff]
  %v161 = vld [vmem:[%s3] sm:$0xff]
  %v162 = vld [vmem:[%s3 + $0x8] sm:$0xff]
  %v163 = vld [vmem:[%s3 + $0x10] sm:$0xff]
  %v164 = vld [vmem:[%s3 + $0x18] sm:$0xff]
  %vm165 = vcmask 64512
  %v166 = vsel %vm165, %v148, 0.0
  %167 = vadd.xlane.f32.xlu0 %v166
  %v168 = vpop.xlane.xlu0 %167
  %v169 = vsel %vm165, %v150, 0.0
  %170 = vadd.xlane.f32.xlu0 %v169
  %v171 = vpop.xlane.xlu0 %170
  %v172 = vsel %vm165, %v153, 0.0
  %173 = vadd.xlane.f32.xlu0 %v172
  %v174 = vpop.xlane.xlu0 %173
  %v175 = vsel %vm165, %v155, 0.0
  %176 = vadd.xlane.f32.xlu0 %v175
  %v177 = vpop.xlane.xlu0 %176
  %v178 = vrcp.pop 8.0
  %v179 = vmul.f32 8.0, %v178
  %v180 = vsub.f32 1.0, %v179
  %v181 = vmul.f32 %v178, %v180
  %v182 = vadd.f32 %v178, %v181
  %vm183 = vweird.f32 %v178
  %v184 = vsel %vm183, %v178, %v182
  %v185 = vmul.f32 %v168, %v184
  %v186 = vmul.f32 %v171, %v184
  %v187 = vmul.f32 %v174, %v184
  %v188 = vmul.f32 %v177, %v184
  %v189 = vmul.f32 %v148, %v148
  %v190 = vmul.f32 %v150, %v150
  %v191 = vmul.f32 %v153, %v153
  %v192 = vmul.f32 %v155, %v155
  %v193 = vsel %vm165, %v189, 0.0
  %194 = vadd.xlane.f32.xlu0 %v193
  %v195 = vpop.xlane.xlu0 %194
  %v196 = vsel %vm165, %v190, 0.0
  %197 = vadd.xlane.f32.xlu0 %v196
  %v198 = vpop.xlane.xlu0 %197
  %v199 = vsel %vm165, %v191, 0.0
  %200 = vadd.xlane.f32.xlu0 %v199
  %v201 = vpop.xlane.xlu0 %200
  %v202 = vsel %vm165, %v192, 0.0
  %203 = vadd.xlane.f32.xlu0 %v202
  %v204 = vpop.xlane.xlu0 %203
  %v205 = vmul.f32 %v195, %v184
  %v206 = vmul.f32 %v198, %v184
  %v207 = vmul.f32 %v201, %v184
  %v208 = vmul.f32 %v204, %v184
  %v209 = vmul.f32 %v185, %v185
  %v210 = vmul.f32 %v186, %v186
  %v211 = vmul.f32 %v187, %v187
  %v212 = vmul.f32 %v188, %v188
  %v213 = vsub.f32 %v205, %v209
  %v214 = vsub.f32 %v206, %v210
  %v215 = vsub.f32 %v207, %v211
  %v216 = vsub.f32 %v208, %v212
  %v217 = vmax.f32 %v213, 0.0
  %v218 = vmax.f32 %v214, 0.0
  %v219 = vmax.f32 %v215, 0.0
  %v220 = vmax.f32 %v216, 0.0
  %v221 = vadd.f32 %v217, 1e-05
  %v222 = vadd.f32 %v218, 1e-05
  %v223 = vadd.f32 %v219, 1e-05
  %v224 = vadd.f32 %v220, 1e-05
  %v225 = vrsqrt.pop %v221
  %v226 = vmul.f32 %v225, %v221
  %v227 = vmul.f32 %v226, %v225
  %v228 = vmul.f32 0.5, %v227
  %v229 = vsub.f32 1.5, %v228
  %v230 = vmul.f32 %v225, %v229
  %vm231 = vweird.f32 %v221
  %vm232 = vweird.f32 %v225
  %vm233 = vmor %vm231, %vm232
  %v234 = vsel %vm233, %v225, %v230
  %v235 = vrsqrt.pop %v222
  %v236 = vmul.f32 %v235, %v222
  %v237 = vmul.f32 %v236, %v235
  %v238 = vmul.f32 0.5, %v237
  %v239 = vsub.f32 1.5, %v238
  %v240 = vmul.f32 %v235, %v239
  %vm241 = vweird.f32 %v222
  %vm242 = vweird.f32 %v235
  %vm243 = vmor %vm241, %vm242
  %v244 = vsel %vm243, %v235, %v240
  %v245 = vrsqrt.pop %v223
  %v246 = vmul.f32 %v245, %v223
  %v247 = vmul.f32 %v246, %v245
  %v248 = vmul.f32 0.5, %v247
  %v249 = vsub.f32 1.5, %v248
  %v250 = vmul.f32 %v245, %v249
  %vm251 = vweird.f32 %v223
  %vm252 = vweird.f32 %v245
  %vm253 = vmor %vm251, %vm252
  %v254 = vsel %vm253, %v245, %v250
  %v255 = vrsqrt.pop %v224
  %v256 = vmul.f32 %v255, %v224
  %v257 = vmul.f32 %v256, %v255
  %v258 = vmul.f32 0.5, %v257
  %v259 = vsub.f32 1.5, %v258
  %v260 = vmul.f32 %v255, %v259
  %vm261 = vweird.f32 %v224
  %vm262 = vweird.f32 %v255
  %vm263 = vmor %vm261, %vm262
  %v264 = vsel %vm263, %v255, %v260
  %v265 = vmul.f32 %v157, %v234
  %v266 = vmul.f32 %v158, %v244
  %v267 = vmul.f32 %v159, %v254
  %v268 = vmul.f32 %v160, %v264
  %v269 = vmul.f32 %v185, %v265
  %v270 = vmul.f32 %v186, %v266
  %v271 = vmul.f32 %v187, %v267
  %v272 = vmul.f32 %v188, %v268
  %v273 = vsub.f32 %v161, %v269
  %v274 = vsub.f32 %v162, %v270
  %v275 = vsub.f32 %v163, %v271
  %v276 = vsub.f32 %v164, %v272
  %278 = vset.pattern.permute.xlu0 0
  %279 = vperm.xlu0 %278, %v265
  %v280 = vpop.permute.xlu0 %279
  %283 = vset.pattern.permute.xlu0 0
  %284 = vperm.xlu0 %283, %v266
  %v285 = vpop.permute.xlu0 %284
  %288 = vset.pattern.permute.xlu0 0
  %289 = vperm.xlu0 %288, %v267
  %v290 = vpop.permute.xlu0 %289
  %293 = vset.pattern.permute.xlu0 0
  %294 = vperm.xlu0 %293, %v268
  %v295 = vpop.permute.xlu0 %294
  %v297 = vmul.f32 %v148, %v280
  %v298 = vmul.f32 %v150, %v285
  %v299 = vmul.f32 %v153, %v290
  %v300 = vmul.f32 %v155, %v295
  %302 = vset.pattern.permute.xlu0 0
  %303 = vperm.xlu0 %302, %v273
  %v304 = vpop.permute.xlu0 %303
  %307 = vset.pattern.permute.xlu0 0
  %308 = vperm.xlu0 %307, %v274
  %v309 = vpop.permute.xlu0 %308
  %312 = vset.pattern.permute.xlu0 0
  %313 = vperm.xlu0 %312, %v275
  %v314 = vpop.permute.xlu0 %313
  %317 = vset.pattern.permute.xlu0 0
  %318 = vperm.xlu0 %317, %v276
  %v319 = vpop.permute.xlu0 %318
  %v321 = vadd.f32 %v297, %v304
  %v322 = vadd.f32 %v298, %v309
  %v323 = vadd.f32 %v299, %v314
  %v324 = vadd.f32 %v300, %v319
  %v325 = vmax.f32 %v321, 0.0
  %v326 = vmax.f32 %v322, 0.0
  %v327 = vmax.f32 %v323, 0.0
  %v328 = vmax.f32 %v324, 0.0
  %329 = vst.msk [vmem:[%s4] sm:$0xff] %vm165, %v325
  %330 = vst.msk [vmem:[%s4 + $0x8] sm:$0xff] %vm165, %v326
  %331 = vst.msk [vmem:[%s4 + $0x10] sm:$0xff] %vm165, %v327
  %332 = vst.msk [vmem:[%s4 + $0x18] sm:$0xff] %vm165, %v328
  // Predicated region
  $region18: #{_lambda_.31} parent=0 // pred_check
    _
  $region19: #{_lambda_.31} parent=0 // pred_check_branch
    %334 = sbr.rel (0) target = $region21
  $region20: #{_lambda_.31} parent=0 // pred_region
    _
  $region21: #{_lambda_.31} parent=0 // pred_fallthru
    _
  // Predicated region
  $region22: #{_lambda_.31} parent=0 // pred_check
    _
  $region23: #{_lambda_.31} parent=0 // pred_check_branch
    %336 = sbr.rel (0) target = $region25
  $region24: #{_lambda_.31} parent=0 // pred_region
    _
  $region25: #{_lambda_.31} parent=0 // pred_fallthru
    _

// kernel: _lambda_.33
$region0: #{_lambda_.33}
  #allocation0 [shape = 'u32[]', space=smem, size = 0x4, offset = 0x4, fixed_abs, tag = 'smem constant byte address 0x4 - core index']
  #allocation1 [shape = 'u32[72,128]{1,0:T(1,128)}', space=vmem, size = 0x9000, scoped, tag = 'internal scratch']
  %s0 = inlined_call_operand.vmem [shape: bf16[288,8], index: 0, kind: input, shape index: {}]
  %s1 = inlined_call_operand.vmem [shape: bf16[32,288], index: 1, kind: input, shape index: {}]
  %s2 = inlined_call_operand.vmem [shape: f32[32,1], index: 2, kind: input, shape index: {}]
  %s3 = inlined_call_operand.vmem [shape: f32[32,1], index: 3, kind: input, shape index: {}]
  %s4 = inlined_call_operand.vmem [shape: f32[32,8], index: 4, kind: output, shape index: {}]
  %s5 = sld [smem:[#allocation0]]
  $region26: #{_lambda_.33} parent=0
    _
  %s7 = ssub.s32 1, %s5
  %s8 = scalar_select 0, %s7, %s5
  // Predicated region
  $region2: #{_lambda_.33} parent=0 // pred_check
    _
  $region3: #{_lambda_.33} parent=0 // pred_check_branch
    %10 = sbr.rel (0) target = $region5
  $region4: #{_lambda_.33} parent=0 // pred_region
    _
  $region5: #{_lambda_.33} parent=0 // pred_fallthru
    _
  // Predicated region
  $region6: #{_lambda_.33} parent=0 // pred_check
    _
  $region7: #{_lambda_.33} parent=0 // pred_check_branch
    %12 = sbr.rel (0) target = $region9
  $region8: #{_lambda_.33} parent=0 // pred_region
    _
  $region9: #{_lambda_.33} parent=0 // pred_fallthru
    _
  // Predicated region
  $region10: #{_lambda_.33} parent=0 // pred_check
    _
  $region11: #{_lambda_.33} parent=0 // pred_check_branch
    %14 = sbr.rel (0) target = $region13
  $region12: #{_lambda_.33} parent=0 // pred_region
    _
  $region13: #{_lambda_.33} parent=0 // pred_fallthru
    _
  // Predicated region
  $region14: #{_lambda_.33} parent=0 // pred_check
    _
  $region15: #{_lambda_.33} parent=0 // pred_check_branch
    %16 = sbr.rel (0) target = $region17
  $region16: #{_lambda_.33} parent=0 // pred_region
    _
  $region17: #{_lambda_.33} parent=0 // pred_fallthru
    _
  %v18 = vld [vmem:[%s1] sm:$0xff]
  %v19 = vld [vmem:[%s1 + $0x8] sm:$0xf]
  %v20 = vld [vmem:[%s1 + $0xc] sm:$0xff]
  %v21 = vld [vmem:[%s1 + $0x14] sm:$0xf]
  %v22 = vld [vmem:[%s1 + $0x18] sm:$0xff]
  %v23 = vld [vmem:[%s1 + $0x20] sm:$0xf]
  %v24 = vld [vmem:[%s1 + $0x24] sm:$0xff]
  %v25 = vld [vmem:[%s1 + $0x2c] sm:$0xf]
  %v26 = vld [vmem:[%s0] sm:$0xf]
  %v27 = vld [vmem:[%s0 + $0x4] sm:$0xf]
  %v28 = vld [vmem:[%s0 + $0x8] sm:$0xf]
  %v29 = vld [vmem:[%s0 + $0xc] sm:$0xf]
  %v30 = vld [vmem:[%s0 + $0x10] sm:$0xf]
  %v31 = vld [vmem:[%s0 + $0x14] sm:$0xf]
  %v32 = vld [vmem:[%s0 + $0x18] sm:$0xf]
  %v33 = vld [vmem:[%s0 + $0x1c] sm:$0xf]
  %v34 = vld [vmem:[%s0 + $0x20] sm:$0xf]
  %v35 = vld [vmem:[%s0 + $0x24] sm:$0xf]
  %v36 = vld [vmem:[%s0 + $0x28] sm:$0xf]
  %v37 = vld [vmem:[%s0 + $0x2c] sm:$0xf]
  %v38 = vld [vmem:[%s0 + $0x30] sm:$0xf]
  %v39 = vld [vmem:[%s0 + $0x34] sm:$0xf]
  %v40 = vld [vmem:[%s0 + $0x38] sm:$0xf]
  %v41 = vld [vmem:[%s0 + $0x3c] sm:$0xf]
  %v42 = vld [vmem:[%s0 + $0x40] sm:$0xf]
  %v43 = vld [vmem:[%s0 + $0x44] sm:$0xf]
  %v44 = vld [vmem:[%s0 + $0x48] sm:$0xf]
  %v45 = vld [vmem:[%s0 + $0x4c] sm:$0xf]
  %v46 = vld [vmem:[%s0 + $0x50] sm:$0xf]
  %v47 = vld [vmem:[%s0 + $0x54] sm:$0xf]
  %v48 = vld [vmem:[%s0 + $0x58] sm:$0xf]
  %v49 = vld [vmem:[%s0 + $0x5c] sm:$0xf]
  %v50 = vld [vmem:[%s0 + $0x60] sm:$0xf]
  %v51 = vld [vmem:[%s0 + $0x64] sm:$0xf]
  %v52 = vld [vmem:[%s0 + $0x68] sm:$0xf]
  %v53 = vld [vmem:[%s0 + $0x6c] sm:$0xf]
  %v54 = vld [vmem:[%s0 + $0x70] sm:$0xf]
  %v55 = vld [vmem:[%s0 + $0x74] sm:$0xf]
  %v56 = vld [vmem:[%s0 + $0x78] sm:$0xf]
  %v57 = vld [vmem:[%s0 + $0x7c] sm:$0xf]
  %v58 = vld [vmem:[%s0 + $0x80] sm:$0xf]
  %v59 = vld [vmem:[%s0 + $0x84] sm:$0xf]
  %v60 = vld [vmem:[%s0 + $0x88] sm:$0xf]
  %v61 = vld [vmem:[%s0 + $0x8c] sm:$0xf]
  %v70 = vunpack.c.l.b16 %v18
  %v71 = vunpack.c.h.b16 %v18
  %v72 = vunpack.c.l.b16 %v19
  %v73 = vunpack.c.l.b16 %v20
  %v74 = vunpack.c.h.b16 %v20
  %v75 = vunpack.c.l.b16 %v21
  %v76 = vunpack.c.l.b16 %v22
  %v77 = vunpack.c.h.b16 %v22
  %v78 = vunpack.c.l.b16 %v23
  %v79 = vunpack.c.l.b16 %v24
  %v80 = vunpack.c.h.b16 %v24
  %v81 = vunpack.c.l.b16 %v25
  %v82 = vpack.c.b16 %v73, %v70
  %v83 = vpack.c.b16 %v74, %v71
  %v84 = vpack.c.b16 %v75, %v72
  %v85 = vpack.c.b16 %v79, %v76
  %v86 = vpack.c.b16 %v80, %v77
  %v87 = vpack.c.b16 %v81, %v78
  %v128 = vunpack.c.l.b16 %v26
  %v129 = vunpack.c.l.b16 %v27
  %v130 = vunpack.c.l.b16 %v28
  %v131 = vunpack.c.l.b16 %v29
  %v132 = vunpack.c.l.b16 %v30
  %v133 = vunpack.c.l.b16 %v31
  %v134 = vunpack.c.l.b16 %v32
  %v135 = vunpack.c.l.b16 %v33
  %v136 = vunpack.c.l.b16 %v34
  %v137 = vunpack.c.l.b16 %v35
  %v138 = vunpack.c.l.b16 %v36
  %v139 = vunpack.c.l.b16 %v37
  %v140 = vunpack.c.l.b16 %v38
  %v141 = vunpack.c.l.b16 %v39
  %v142 = vunpack.c.l.b16 %v40
  %v143 = vunpack.c.l.b16 %v41
  %v144 = vunpack.c.l.b16 %v42
  %v145 = vunpack.c.l.b16 %v43
  %v146 = vunpack.c.l.b16 %v44
  %v147 = vunpack.c.l.b16 %v45
  %v148 = vunpack.c.l.b16 %v46
  %v149 = vunpack.c.l.b16 %v47
  %v150 = vunpack.c.l.b16 %v48
  %v151 = vunpack.c.l.b16 %v49
  %v152 = vunpack.c.l.b16 %v50
  %v153 = vunpack.c.l.b16 %v51
  %v154 = vunpack.c.l.b16 %v52
  %v155 = vunpack.c.l.b16 %v53
  %v156 = vunpack.c.l.b16 %v54
  %v157 = vunpack.c.l.b16 %v55
  %v158 = vunpack.c.l.b16 %v56
  %v159 = vunpack.c.l.b16 %v57
  %v160 = vunpack.c.l.b16 %v58
  %v161 = vunpack.c.l.b16 %v59
  %v162 = vunpack.c.l.b16 %v60
  %v163 = vunpack.c.l.b16 %v61
  %v164 = vpack.c.b16 %v129, %v128
  %v165 = vpack.c.b16 %v131, %v130
  %v166 = vpack.c.b16 %v133, %v132
  %v167 = vpack.c.b16 %v135, %v134
  %v168 = vpack.c.b16 %v137, %v136
  %v169 = vpack.c.b16 %v139, %v138
  %v170 = vpack.c.b16 %v141, %v140
  %v171 = vpack.c.b16 %v143, %v142
  %v172 = vpack.c.b16 %v145, %v144
  %v173 = vpack.c.b16 %v147, %v146
  %v174 = vpack.c.b16 %v149, %v148
  %v175 = vpack.c.b16 %v151, %v150
  %v176 = vpack.c.b16 %v153, %v152
  %v177 = vpack.c.b16 %v155, %v154
  %v178 = vpack.c.b16 %v157, %v156
  %v179 = vpack.c.b16 %v159, %v158
  %v180 = vpack.c.b16 %v161, %v160
  %v181 = vpack.c.b16 %v163, %v162
  %vm200 = vcmask 261120
  %v202 = vsel %vm200, %v84, 0
  %v205 = vsel %vm200, %v87, 0
  %207 = vmatpush.bf16.msra.mxu0 %v171
  %208 = vmatpush.bf16.msra.mxu0 %v170
  %209 = vmatpush.bf16.msra.mxu0 %v169
  %210 = vmatpush.bf16.msra.mxu0 %v168
  %211 = vmatpush.bf16.msra.mxu0 %v167
  %212 = vmatpush.bf16.msra.mxu0 %v166
  %213 = vmatpush.bf16.msra.mxu0 %v165
  %214 = vmatpush.bf16.msra.mxu0 %v164
  %215 = vmatmul.bf16.gmra.mxu0 %v82
  %v216 = vpop.f32.mrf.mxu0
  %v217 = vadd.f32 0.0, %v216
  %v218 = vpop.f32.mrf.mxu0
  %v219 = vadd.f32 0.0, %v218
  %220 = vmatmul.bf16.gmra.mxu0 %v85
  %v221 = vpop.f32.mrf.mxu0
  %v222 = vadd.f32 0.0, %v221
  %v223 = vpop.f32.mrf.mxu0
  %v224 = vadd.f32 0.0, %v223
  %225 = vdwg.mxu0
  %226 = vmatpush.bf16.msra.mxu0 %v179
  %227 = vmatpush.bf16.msra.mxu0 %v178
  %228 = vmatpush.bf16.msra.mxu0 %v177
  %229 = vmatpush.bf16.msra.mxu0 %v176
  %230 = vmatpush.bf16.msra.mxu0 %v175
  %231 = vmatpush.bf16.msra.mxu0 %v174
  %232 = vmatpush.bf16.msra.mxu0 %v173
  %233 = vmatpush.bf16.msra.mxu0 %v172
  %234 = vmatmul.bf16.gmra.mxu0 %v83
  %v235 = vpop.f32.mrf.mxu0
  %v236 = vadd.f32 %v217, %v235
  %v237 = vpop.f32.mrf.mxu0
  %v238 = vadd.f32 %v219, %v237
  %239 = vmatmul.bf16.gmra.mxu0 %v86
  %v240 = vpop.f32.mrf.mxu0
  %v241 = vadd.f32 %v222, %v240
  %v242 = vpop.f32.mrf.mxu0
  %v243 = vadd.f32 %v224, %v242
  %244 = vdwg.mxu0
  %245 = vmatpush.bf16.msra.mxu0 0
  %246 = vmatpush.bf16.msra.mxu0 0
  %247 = vmatpush.bf16.msra.mxu0 0
  %248 = vmatpush.bf16.msra.mxu0 0
  %249 = vmatpush.bf16.msra.mxu0 0
  %250 = vmatpush.bf16.msra.mxu0 0
  %251 = vmatpush.bf16.msra.mxu0 %v181
  %252 = vmatpush.bf16.msra.mxu0 %v180
  %253 = vmatmul.bf16.gmra.mxu0 %v202
  %v254 = vpop.f32.mrf.mxu0
  %v255 = vadd.f32 %v236, %v254
  %v256 = vpop.f32.mrf.mxu0
  %v257 = vadd.f32 %v238, %v256
  %258 = vmatmul.bf16.gmra.mxu0 %v205
  %v259 = vpop.f32.mrf.mxu0
  %v260 = vadd.f32 %v241, %v259
  %v261 = vpop.f32.mrf.mxu0
  %v262 = vadd.f32 %v243, %v261
  %263 = vdwg.mxu0
  %v264 = vld [vmem:[%s2] sm:$0xff]
  %v265 = vld [vmem:[%s2 + $0x8] sm:$0xff]
  %v266 = vld [vmem:[%s2 + $0x10] sm:$0xff]
  %v267 = vld [vmem:[%s2 + $0x18] sm:$0xff]
  %v268 = vld [vmem:[%s3] sm:$0xff]
  %v269 = vld [vmem:[%s3 + $0x8] sm:$0xff]
  %v270 = vld [vmem:[%s3 + $0x10] sm:$0xff]
  %v271 = vld [vmem:[%s3 + $0x18] sm:$0xff]
  %vm272 = vcmask 64512
  %v273 = vsel %vm272, %v255, 0.0
  %274 = vadd.xlane.f32.xlu0 %v273
  %v275 = vpop.xlane.xlu0 %274
  %v276 = vsel %vm272, %v257, 0.0
  %277 = vadd.xlane.f32.xlu0 %v276
  %v278 = vpop.xlane.xlu0 %277
  %v279 = vsel %vm272, %v260, 0.0
  %280 = vadd.xlane.f32.xlu0 %v279
  %v281 = vpop.xlane.xlu0 %280
  %v282 = vsel %vm272, %v262, 0.0
  %283 = vadd.xlane.f32.xlu0 %v282
  %v284 = vpop.xlane.xlu0 %283
  %v285 = vrcp.pop 8.0
  %v286 = vmul.f32 8.0, %v285
  %v287 = vsub.f32 1.0, %v286
  %v288 = vmul.f32 %v285, %v287
  %v289 = vadd.f32 %v285, %v288
  %vm290 = vweird.f32 %v285
  %v291 = vsel %vm290, %v285, %v289
  %v292 = vmul.f32 %v275, %v291
  %v293 = vmul.f32 %v278, %v291
  %v294 = vmul.f32 %v281, %v291
  %v295 = vmul.f32 %v284, %v291
  %v296 = vmul.f32 %v255, %v255
  %v297 = vmul.f32 %v257, %v257
  %v298 = vmul.f32 %v260, %v260
  %v299 = vmul.f32 %v262, %v262
  %v300 = vsel %vm272, %v296, 0.0
  %301 = vadd.xlane.f32.xlu0 %v300
  %v302 = vpop.xlane.xlu0 %301
  %v303 = vsel %vm272, %v297, 0.0
  %304 = vadd.xlane.f32.xlu0 %v303
  %v305 = vpop.xlane.xlu0 %304
  %v306 = vsel %vm272, %v298, 0.0
  %307 = vadd.xlane.f32.xlu0 %v306
  %v308 = vpop.xlane.xlu0 %307
  %v309 = vsel %vm272, %v299, 0.0
  %310 = vadd.xlane.f32.xlu0 %v309
  %v311 = vpop.xlane.xlu0 %310
  %v312 = vmul.f32 %v302, %v291
  %v313 = vmul.f32 %v305, %v291
  %v314 = vmul.f32 %v308, %v291
  %v315 = vmul.f32 %v311, %v291
  %v316 = vmul.f32 %v292, %v292
  %v317 = vmul.f32 %v293, %v293
  %v318 = vmul.f32 %v294, %v294
  %v319 = vmul.f32 %v295, %v295
  %v320 = vsub.f32 %v312, %v316
  %v321 = vsub.f32 %v313, %v317
  %v322 = vsub.f32 %v314, %v318
  %v323 = vsub.f32 %v315, %v319
  %v324 = vmax.f32 %v320, 0.0
  %v325 = vmax.f32 %v321, 0.0
  %v326 = vmax.f32 %v322, 0.0
  %v327 = vmax.f32 %v323, 0.0
  %v328 = vadd.f32 %v324, 1e-05
  %v329 = vadd.f32 %v325, 1e-05
  %v330 = vadd.f32 %v326, 1e-05
  %v331 = vadd.f32 %v327, 1e-05
  %v332 = vrsqrt.pop %v328
  %v333 = vmul.f32 %v332, %v328
  %v334 = vmul.f32 %v333, %v332
  %v335 = vmul.f32 0.5, %v334
  %v336 = vsub.f32 1.5, %v335
  %v337 = vmul.f32 %v332, %v336
  %vm338 = vweird.f32 %v328
  %vm339 = vweird.f32 %v332
  %vm340 = vmor %vm338, %vm339
  %v341 = vsel %vm340, %v332, %v337
  %v342 = vrsqrt.pop %v329
  %v343 = vmul.f32 %v342, %v329
  %v344 = vmul.f32 %v343, %v342
  %v345 = vmul.f32 0.5, %v344
  %v346 = vsub.f32 1.5, %v345
  %v347 = vmul.f32 %v342, %v346
  %vm348 = vweird.f32 %v329
  %vm349 = vweird.f32 %v342
  %vm350 = vmor %vm348, %vm349
  %v351 = vsel %vm350, %v342, %v347
  %v352 = vrsqrt.pop %v330
  %v353 = vmul.f32 %v352, %v330
  %v354 = vmul.f32 %v353, %v352
  %v355 = vmul.f32 0.5, %v354
  %v356 = vsub.f32 1.5, %v355
  %v357 = vmul.f32 %v352, %v356
  %vm358 = vweird.f32 %v330
  %vm359 = vweird.f32 %v352
  %vm360 = vmor %vm358, %vm359
  %v361 = vsel %vm360, %v352, %v357
  %v362 = vrsqrt.pop %v331
  %v363 = vmul.f32 %v362, %v331
  %v364 = vmul.f32 %v363, %v362
  %v365 = vmul.f32 0.5, %v364
  %v366 = vsub.f32 1.5, %v365
  %v367 = vmul.f32 %v362, %v366
  %vm368 = vweird.f32 %v331
  %vm369 = vweird.f32 %v362
  %vm370 = vmor %vm368, %vm369
  %v371 = vsel %vm370, %v362, %v367
  %v372 = vmul.f32 %v264, %v341
  %v373 = vmul.f32 %v265, %v351
  %v374 = vmul.f32 %v266, %v361
  %v375 = vmul.f32 %v267, %v371
  %v376 = vmul.f32 %v292, %v372
  %v377 = vmul.f32 %v293, %v373
  %v378 = vmul.f32 %v294, %v374
  %v379 = vmul.f32 %v295, %v375
  %v380 = vsub.f32 %v268, %v376
  %v381 = vsub.f32 %v269, %v377
  %v382 = vsub.f32 %v270, %v378
  %v383 = vsub.f32 %v271, %v379
  %385 = vset.pattern.permute.xlu0 0
  %386 = vperm.xlu0 %385, %v372
  %v387 = vpop.permute.xlu0 %386
  %390 = vset.pattern.permute.xlu0 0
  %391 = vperm.xlu0 %390, %v373
  %v392 = vpop.permute.xlu0 %391
  %395 = vset.pattern.permute.xlu0 0
  %396 = vperm.xlu0 %395, %v374
  %v397 = vpop.permute.xlu0 %396
  %400 = vset.pattern.permute.xlu0 0
  %401 = vperm.xlu0 %400, %v375
  %v402 = vpop.permute.xlu0 %401
  %v404 = vmul.f32 %v255, %v387
  %v405 = vmul.f32 %v257, %v392
  %v406 = vmul.f32 %v260, %v397
  %v407 = vmul.f32 %v262, %v402
  %409 = vset.pattern.permute.xlu0 0
  %410 = vperm.xlu0 %409, %v380
  %v411 = vpop.permute.xlu0 %410
  %414 = vset.pattern.permute.xlu0 0
  %415 = vperm.xlu0 %414, %v381
  %v416 = vpop.permute.xlu0 %415
  %419 = vset.pattern.permute.xlu0 0
  %420 = vperm.xlu0 %419, %v382
  %v421 = vpop.permute.xlu0 %420
  %424 = vset.pattern.permute.xlu0 0
  %425 = vperm.xlu0 %424, %v383
  %v426 = vpop.permute.xlu0 %425
  %v428 = vadd.f32 %v404, %v411
  %v429 = vadd.f32 %v405, %v416
  %v430 = vadd.f32 %v406, %v421
  %v431 = vadd.f32 %v407, %v426
  %v432 = vmax.f32 %v428, 0.0
  %v433 = vmax.f32 %v429, 0.0
  %v434 = vmax.f32 %v430, 0.0
  %v435 = vmax.f32 %v431, 0.0
  %436 = vst.msk [vmem:[%s4] sm:$0xff] %vm272, %v432
  %437 = vst.msk [vmem:[%s4 + $0x8] sm:$0xff] %vm272, %v433
  %438 = vst.msk [vmem:[%s4 + $0x10] sm:$0xff] %vm272, %v434
  %439 = vst.msk [vmem:[%s4 + $0x18] sm:$0xff] %vm272, %v435
  // Predicated region
  $region18: #{_lambda_.33} parent=0 // pred_check
    _
  $region19: #{_lambda_.33} parent=0 // pred_check_branch
    %441 = sbr.rel (0) target = $region21
  $region20: #{_lambda_.33} parent=0 // pred_region
    _
  $region21: #{_lambda_.33} parent=0 // pred_fallthru
    _
  // Predicated region
  $region22: #{_lambda_.33} parent=0 // pred_check
    _
  $region23: #{_lambda_.33} parent=0 // pred_check_branch
    %443 = sbr.rel (0) target = $region25
  $region24: #{_lambda_.33} parent=0 // pred_region
    _
  $region25: #{_lambda_.33} parent=0 // pred_fallthru
    _

// kernel: _lambda_.34
$region0: #{_lambda_.34}
  #allocation0 [shape = 'u32[]', space=smem, size = 0x4, offset = 0x4, fixed_abs, tag = 'smem constant byte address 0x4 - core index']
  #allocation1 [shape = 'u32[72,128]{1,0:T(1,128)}', space=vmem, size = 0x9000, scoped, tag = 'internal scratch']
  %s0 = inlined_call_operand.vmem [shape: bf16[288,8], index: 0, kind: input, shape index: {}]
  %s1 = inlined_call_operand.vmem [shape: bf16[32,288], index: 1, kind: input, shape index: {}]
  %s2 = inlined_call_operand.vmem [shape: f32[32,1], index: 2, kind: input, shape index: {}]
  %s3 = inlined_call_operand.vmem [shape: f32[32,1], index: 3, kind: input, shape index: {}]
  %s4 = inlined_call_operand.vmem [shape: f32[32,8], index: 4, kind: input, shape index: {}]
  %s5 = inlined_call_operand.vmem [shape: f32[32,8], index: 5, kind: output, shape index: {}]
  %s6 = sld [smem:[#allocation0]]
  $region30: #{_lambda_.34} parent=0
    _
  %s8 = ssub.s32 1, %s6
  %s9 = scalar_select 0, %s8, %s6
  // Predicated region
  $region2: #{_lambda_.34} parent=0 // pred_check
    _
  $region3: #{_lambda_.34} parent=0 // pred_check_branch
    %11 = sbr.rel (0) target = $region5
  $region4: #{_lambda_.34} parent=0 // pred_region
    _
  $region5: #{_lambda_.34} parent=0 // pred_fallthru
    _
  // Predicated region
  $region6: #{_lambda_.34} parent=0 // pred_check
    _
  $region7: #{_lambda_.34} parent=0 // pred_check_branch
    %13 = sbr.rel (0) target = $region9
  $region8: #{_lambda_.34} parent=0 // pred_region
    _
  $region9: #{_lambda_.34} parent=0 // pred_fallthru
    _
  // Predicated region
  $region10: #{_lambda_.34} parent=0 // pred_check
    _
  $region11: #{_lambda_.34} parent=0 // pred_check_branch
    %15 = sbr.rel (0) target = $region13
  $region12: #{_lambda_.34} parent=0 // pred_region
    _
  $region13: #{_lambda_.34} parent=0 // pred_fallthru
    _
  // Predicated region
  $region14: #{_lambda_.34} parent=0 // pred_check
    _
  $region15: #{_lambda_.34} parent=0 // pred_check_branch
    %17 = sbr.rel (0) target = $region17
  $region16: #{_lambda_.34} parent=0 // pred_region
    _
  $region17: #{_lambda_.34} parent=0 // pred_fallthru
    _
  // Predicated region
  $region18: #{_lambda_.34} parent=0 // pred_check
    _
  $region19: #{_lambda_.34} parent=0 // pred_check_branch
    %19 = sbr.rel (0) target = $region21
  $region20: #{_lambda_.34} parent=0 // pred_region
    _
  $region21: #{_lambda_.34} parent=0 // pred_fallthru
    _
  %v21 = vld [vmem:[%s1] sm:$0xff]
  %v22 = vld [vmem:[%s1 + $0x8] sm:$0xf]
  %v23 = vld [vmem:[%s1 + $0xc] sm:$0xff]
  %v24 = vld [vmem:[%s1 + $0x14] sm:$0xf]
  %v25 = vld [vmem:[%s1 + $0x18] sm:$0xff]
  %v26 = vld [vmem:[%s1 + $0x20] sm:$0xf]
  %v27 = vld [vmem:[%s1 + $0x24] sm:$0xff]
  %v28 = vld [vmem:[%s1 + $0x2c] sm:$0xf]
  %v29 = vld [vmem:[%s0] sm:$0xf]
  %v30 = vld [vmem:[%s0 + $0x4] sm:$0xf]
  %v31 = vld [vmem:[%s0 + $0x8] sm:$0xf]
  %v32 = vld [vmem:[%s0 + $0xc] sm:$0xf]
  %v33 = vld [vmem:[%s0 + $0x10] sm:$0xf]
  %v34 = vld [vmem:[%s0 + $0x14] sm:$0xf]
  %v35 = vld [vmem:[%s0 + $0x18] sm:$0xf]
  %v36 = vld [vmem:[%s0 + $0x1c] sm:$0xf]
  %v37 = vld [vmem:[%s0 + $0x20] sm:$0xf]
  %v38 = vld [vmem:[%s0 + $0x24] sm:$0xf]
  %v39 = vld [vmem:[%s0 + $0x28] sm:$0xf]
  %v40 = vld [vmem:[%s0 + $0x2c] sm:$0xf]
  %v41 = vld [vmem:[%s0 + $0x30] sm:$0xf]
  %v42 = vld [vmem:[%s0 + $0x34] sm:$0xf]
  %v43 = vld [vmem:[%s0 + $0x38] sm:$0xf]
  %v44 = vld [vmem:[%s0 + $0x3c] sm:$0xf]
  %v45 = vld [vmem:[%s0 + $0x40] sm:$0xf]
  %v46 = vld [vmem:[%s0 + $0x44] sm:$0xf]
  %v47 = vld [vmem:[%s0 + $0x48] sm:$0xf]
  %v48 = vld [vmem:[%s0 + $0x4c] sm:$0xf]
  %v49 = vld [vmem:[%s0 + $0x50] sm:$0xf]
  %v50 = vld [vmem:[%s0 + $0x54] sm:$0xf]
  %v51 = vld [vmem:[%s0 + $0x58] sm:$0xf]
  %v52 = vld [vmem:[%s0 + $0x5c] sm:$0xf]
  %v53 = vld [vmem:[%s0 + $0x60] sm:$0xf]
  %v54 = vld [vmem:[%s0 + $0x64] sm:$0xf]
  %v55 = vld [vmem:[%s0 + $0x68] sm:$0xf]
  %v56 = vld [vmem:[%s0 + $0x6c] sm:$0xf]
  %v57 = vld [vmem:[%s0 + $0x70] sm:$0xf]
  %v58 = vld [vmem:[%s0 + $0x74] sm:$0xf]
  %v59 = vld [vmem:[%s0 + $0x78] sm:$0xf]
  %v60 = vld [vmem:[%s0 + $0x7c] sm:$0xf]
  %v61 = vld [vmem:[%s0 + $0x80] sm:$0xf]
  %v62 = vld [vmem:[%s0 + $0x84] sm:$0xf]
  %v63 = vld [vmem:[%s0 + $0x88] sm:$0xf]
  %v64 = vld [vmem:[%s0 + $0x8c] sm:$0xf]
  %v73 = vunpack.c.l.b16 %v21
  %v74 = vunpack.c.h.b16 %v21
  %v75 = vunpack.c.l.b16 %v22
  %v76 = vunpack.c.l.b16 %v23
  %v77 = vunpack.c.h.b16 %v23
  %v78 = vunpack.c.l.b16 %v24
  %v79 = vunpack.c.l.b16 %v25
  %v80 = vunpack.c.h.b16 %v25
  %v81 = vunpack.c.l.b16 %v26
  %v82 = vunpack.c.l.b16 %v27
  %v83 = vunpack.c.h.b16 %v27
  %v84 = vunpack.c.l.b16 %v28
  %v85 = vpack.c.b16 %v76, %v73
  %v86 = vpack.c.b16 %v77, %v74
  %v87 = vpack.c.b16 %v78, %v75
  %v88 = vpack.c.b16 %v82, %v79
  %v89 = vpack.c.b16 %v83, %v80
  %v90 = vpack.c.b16 %v84, %v81
  %v131 = vunpack.c.l.b16 %v29
  %v132 = vunpack.c.l.b16 %v30
  %v133 = vunpack.c.l.b16 %v31
  %v134 = vunpack.c.l.b16 %v32
  %v135 = vunpack.c.l.b16 %v33
  %v136 = vunpack.c.l.b16 %v34
  %v137 = vunpack.c.l.b16 %v35
  %v138 = vunpack.c.l.b16 %v36
  %v139 = vunpack.c.l.b16 %v37
  %v140 = vunpack.c.l.b16 %v38
  %v141 = vunpack.c.l.b16 %v39
  %v142 = vunpack.c.l.b16 %v40
  %v143 = vunpack.c.l.b16 %v41
  %v144 = vunpack.c.l.b16 %v42
  %v145 = vunpack.c.l.b16 %v43
  %v146 = vunpack.c.l.b16 %v44
  %v147 = vunpack.c.l.b16 %v45
  %v148 = vunpack.c.l.b16 %v46
  %v149 = vunpack.c.l.b16 %v47
  %v150 = vunpack.c.l.b16 %v48
  %v151 = vunpack.c.l.b16 %v49
  %v152 = vunpack.c.l.b16 %v50
  %v153 = vunpack.c.l.b16 %v51
  %v154 = vunpack.c.l.b16 %v52
  %v155 = vunpack.c.l.b16 %v53
  %v156 = vunpack.c.l.b16 %v54
  %v157 = vunpack.c.l.b16 %v55
  %v158 = vunpack.c.l.b16 %v56
  %v159 = vunpack.c.l.b16 %v57
  %v160 = vunpack.c.l.b16 %v58
  %v161 = vunpack.c.l.b16 %v59
  %v162 = vunpack.c.l.b16 %v60
  %v163 = vunpack.c.l.b16 %v61
  %v164 = vunpack.c.l.b16 %v62
  %v165 = vunpack.c.l.b16 %v63
  %v166 = vunpack.c.l.b16 %v64
  %v167 = vpack.c.b16 %v132, %v131
  %v168 = vpack.c.b16 %v134, %v133
  %v169 = vpack.c.b16 %v136, %v135
  %v170 = vpack.c.b16 %v138, %v137
  %v171 = vpack.c.b16 %v140, %v139
  %v172 = vpack.c.b16 %v142, %v141
  %v173 = vpack.c.b16 %v144, %v143
  %v174 = vpack.c.b16 %v146, %v145
  %v175 = vpack.c.b16 %v148, %v147
  %v176 = vpack.c.b16 %v150, %v149
  %v177 = vpack.c.b16 %v152, %v151
  %v178 = vpack.c.b16 %v154, %v153
  %v179 = vpack.c.b16 %v156, %v155
  %v180 = vpack.c.b16 %v158, %v157
  %v181 = vpack.c.b16 %v160, %v159
  %v182 = vpack.c.b16 %v162, %v161
  %v183 = vpack.c.b16 %v164, %v163
  %v184 = vpack.c.b16 %v166, %v165
  %vm203 = vcmask 261120
  %v205 = vsel %vm203, %v87, 0
  %v208 = vsel %vm203, %v90, 0
  %210 = vmatpush.bf16.msra.mxu0 %v174
  %211 = vmatpush.bf16.msra.mxu0 %v173
  %212 = vmatpush.bf16.msra.mxu0 %v172
  %213 = vmatpush.bf16.msra.mxu0 %v171
  %214 = vmatpush.bf16.msra.mxu0 %v170
  %215 = vmatpush.bf16.msra.mxu0 %v169
  %216 = vmatpush.bf16.msra.mxu0 %v168
  %217 = vmatpush.bf16.msra.mxu0 %v167
  %218 = vmatmul.bf16.gmra.mxu0 %v85
  %v219 = vpop.f32.mrf.mxu0
  %v220 = vadd.f32 0.0, %v219
  %v221 = vpop.f32.mrf.mxu0
  %v222 = vadd.f32 0.0, %v221
  %223 = vmatmul.bf16.gmra.mxu0 %v88
  %v224 = vpop.f32.mrf.mxu0
  %v225 = vadd.f32 0.0, %v224
  %v226 = vpop.f32.mrf.mxu0
  %v227 = vadd.f32 0.0, %v226
  %228 = vdwg.mxu0
  %229 = vmatpush.bf16.msra.mxu0 %v182
  %230 = vmatpush.bf16.msra.mxu0 %v181
  %231 = vmatpush.bf16.msra.mxu0 %v180
  %232 = vmatpush.bf16.msra.mxu0 %v179
  %233 = vmatpush.bf16.msra.mxu0 %v178
  %234 = vmatpush.bf16.msra.mxu0 %v177
  %235 = vmatpush.bf16.msra.mxu0 %v176
  %236 = vmatpush.bf16.msra.mxu0 %v175
  %237 = vmatmul.bf16.gmra.mxu0 %v86
  %v238 = vpop.f32.mrf.mxu0
  %v239 = vadd.f32 %v220, %v238
  %v240 = vpop.f32.mrf.mxu0
  %v241 = vadd.f32 %v222, %v240
  %242 = vmatmul.bf16.gmra.mxu0 %v89
  %v243 = vpop.f32.mrf.mxu0
  %v244 = vadd.f32 %v225, %v243
  %v245 = vpop.f32.mrf.mxu0
  %v246 = vadd.f32 %v227, %v245
  %247 = vdwg.mxu0
  %248 = vmatpush.bf16.msra.mxu0 0
  %249 = vmatpush.bf16.msra.mxu0 0
  %250 = vmatpush.bf16.msra.mxu0 0
  %251 = vmatpush.bf16.msra.mxu0 0
  %252 = vmatpush.bf16.msra.mxu0 0
  %253 = vmatpush.bf16.msra.mxu0 0
  %254 = vmatpush.bf16.msra.mxu0 %v184
  %255 = vmatpush.bf16.msra.mxu0 %v183
  %256 = vmatmul.bf16.gmra.mxu0 %v205
  %v257 = vpop.f32.mrf.mxu0
  %v258 = vadd.f32 %v239, %v257
  %v259 = vpop.f32.mrf.mxu0
  %v260 = vadd.f32 %v241, %v259
  %261 = vmatmul.bf16.gmra.mxu0 %v208
  %v262 = vpop.f32.mrf.mxu0
  %v263 = vadd.f32 %v244, %v262
  %v264 = vpop.f32.mrf.mxu0
  %v265 = vadd.f32 %v246, %v264
  %266 = vdwg.mxu0
  %v267 = vld [vmem:[%s2] sm:$0xff]
  %v268 = vld [vmem:[%s2 + $0x8] sm:$0xff]
  %v269 = vld [vmem:[%s2 + $0x10] sm:$0xff]
  %v270 = vld [vmem:[%s2 + $0x18] sm:$0xff]
  %v271 = vld [vmem:[%s3] sm:$0xff]
  %v272 = vld [vmem:[%s3 + $0x8] sm:$0xff]
  %v273 = vld [vmem:[%s3 + $0x10] sm:$0xff]
  %v274 = vld [vmem:[%s3 + $0x18] sm:$0xff]
  %vm275 = vcmask 64512
  %v276 = vsel %vm275, %v258, 0.0
  %277 = vadd.xlane.f32.xlu0 %v276
  %v278 = vpop.xlane.xlu0 %277
  %v279 = vsel %vm275, %v260, 0.0
  %280 = vadd.xlane.f32.xlu0 %v279
  %v281 = vpop.xlane.xlu0 %280
  %v282 = vsel %vm275, %v263, 0.0
  %283 = vadd.xlane.f32.xlu0 %v282
  %v284 = vpop.xlane.xlu0 %283
  %v285 = vsel %vm275, %v265, 0.0
  %286 = vadd.xlane.f32.xlu0 %v285
  %v287 = vpop.xlane.xlu0 %286
  %v288 = vrcp.pop 8.0
  %v289 = vmul.f32 8.0, %v288
  %v290 = vsub.f32 1.0, %v289
  %v291 = vmul.f32 %v288, %v290
  %v292 = vadd.f32 %v288, %v291
  %vm293 = vweird.f32 %v288
  %v294 = vsel %vm293, %v288, %v292
  %v295 = vmul.f32 %v278, %v294
  %v296 = vmul.f32 %v281, %v294
  %v297 = vmul.f32 %v284, %v294
  %v298 = vmul.f32 %v287, %v294
  %v299 = vmul.f32 %v258, %v258
  %v300 = vmul.f32 %v260, %v260
  %v301 = vmul.f32 %v263, %v263
  %v302 = vmul.f32 %v265, %v265
  %v303 = vsel %vm275, %v299, 0.0
  %304 = vadd.xlane.f32.xlu0 %v303
  %v305 = vpop.xlane.xlu0 %304
  %v306 = vsel %vm275, %v300, 0.0
  %307 = vadd.xlane.f32.xlu0 %v306
  %v308 = vpop.xlane.xlu0 %307
  %v309 = vsel %vm275, %v301, 0.0
  %310 = vadd.xlane.f32.xlu0 %v309
  %v311 = vpop.xlane.xlu0 %310
  %v312 = vsel %vm275, %v302, 0.0
  %313 = vadd.xlane.f32.xlu0 %v312
  %v314 = vpop.xlane.xlu0 %313
  %v315 = vmul.f32 %v305, %v294
  %v316 = vmul.f32 %v308, %v294
  %v317 = vmul.f32 %v311, %v294
  %v318 = vmul.f32 %v314, %v294
  %v319 = vmul.f32 %v295, %v295
  %v320 = vmul.f32 %v296, %v296
  %v321 = vmul.f32 %v297, %v297
  %v322 = vmul.f32 %v298, %v298
  %v323 = vsub.f32 %v315, %v319
  %v324 = vsub.f32 %v316, %v320
  %v325 = vsub.f32 %v317, %v321
  %v326 = vsub.f32 %v318, %v322
  %v327 = vmax.f32 %v323, 0.0
  %v328 = vmax.f32 %v324, 0.0
  %v329 = vmax.f32 %v325, 0.0
  %v330 = vmax.f32 %v326, 0.0
  %v331 = vadd.f32 %v327, 1e-05
  %v332 = vadd.f32 %v328, 1e-05
  %v333 = vadd.f32 %v329, 1e-05
  %v334 = vadd.f32 %v330, 1e-05
  %v335 = vrsqrt.pop %v331
  %v336 = vmul.f32 %v335, %v331
  %v337 = vmul.f32 %v336, %v335
  %v338 = vmul.f32 0.5, %v337
  %v339 = vsub.f32 1.5, %v338
  %v340 = vmul.f32 %v335, %v339
  %vm341 = vweird.f32 %v331
  %vm342 = vweird.f32 %v335
  %vm343 = vmor %vm341, %vm342
  %v344 = vsel %vm343, %v335, %v340
  %v345 = vrsqrt.pop %v332
  %v346 = vmul.f32 %v345, %v332
  %v347 = vmul.f32 %v346, %v345
  %v348 = vmul.f32 0.5, %v347
  %v349 = vsub.f32 1.5, %v348
  %v350 = vmul.f32 %v345, %v349
  %vm351 = vweird.f32 %v332
  %vm352 = vweird.f32 %v345
  %vm353 = vmor %vm351, %vm352
  %v354 = vsel %vm353, %v345, %v350
  %v355 = vrsqrt.pop %v333
  %v356 = vmul.f32 %v355, %v333
  %v357 = vmul.f32 %v356, %v355
  %v358 = vmul.f32 0.5, %v357
  %v359 = vsub.f32 1.5, %v358
  %v360 = vmul.f32 %v355, %v359
  %vm361 = vweird.f32 %v333
  %vm362 = vweird.f32 %v355
  %vm363 = vmor %vm361, %vm362
  %v364 = vsel %vm363, %v355, %v360
  %v365 = vrsqrt.pop %v334
  %v366 = vmul.f32 %v365, %v334
  %v367 = vmul.f32 %v366, %v365
  %v368 = vmul.f32 0.5, %v367
  %v369 = vsub.f32 1.5, %v368
  %v370 = vmul.f32 %v365, %v369
  %vm371 = vweird.f32 %v334
  %vm372 = vweird.f32 %v365
  %vm373 = vmor %vm371, %vm372
  %v374 = vsel %vm373, %v365, %v370
  %v375 = vmul.f32 %v267, %v344
  %v376 = vmul.f32 %v268, %v354
  %v377 = vmul.f32 %v269, %v364
  %v378 = vmul.f32 %v270, %v374
  %v379 = vmul.f32 %v295, %v375
  %v380 = vmul.f32 %v296, %v376
  %v381 = vmul.f32 %v297, %v377
  %v382 = vmul.f32 %v298, %v378
  %v383 = vsub.f32 %v271, %v379
  %v384 = vsub.f32 %v272, %v380
  %v385 = vsub.f32 %v273, %v381
  %v386 = vsub.f32 %v274, %v382
  %388 = vset.pattern.permute.xlu0 0
  %389 = vperm.xlu0 %388, %v375
  %v390 = vpop.permute.xlu0 %389
  %393 = vset.pattern.permute.xlu0 0
  %394 = vperm.xlu0 %393, %v376
  %v395 = vpop.permute.xlu0 %394
  %398 = vset.pattern.permute.xlu0 0
  %399 = vperm.xlu0 %398, %v377
  %v400 = vpop.permute.xlu0 %399
  %403 = vset.pattern.permute.xlu0 0
  %404 = vperm.xlu0 %403, %v378
  %v405 = vpop.permute.xlu0 %404
  %v407 = vmul.f32 %v258, %v390
  %v408 = vmul.f32 %v260, %v395
  %v409 = vmul.f32 %v263, %v400
  %v410 = vmul.f32 %v265, %v405
  %412 = vset.pattern.permute.xlu0 0
  %413 = vperm.xlu0 %412, %v383
  %v414 = vpop.permute.xlu0 %413
  %417 = vset.pattern.permute.xlu0 0
  %418 = vperm.xlu0 %417, %v384
  %v419 = vpop.permute.xlu0 %418
  %422 = vset.pattern.permute.xlu0 0
  %423 = vperm.xlu0 %422, %v385
  %v424 = vpop.permute.xlu0 %423
  %427 = vset.pattern.permute.xlu0 0
  %428 = vperm.xlu0 %427, %v386
  %v429 = vpop.permute.xlu0 %428
  %v431 = vadd.f32 %v407, %v414
  %v432 = vadd.f32 %v408, %v419
  %v433 = vadd.f32 %v409, %v424
  %v434 = vadd.f32 %v410, %v429
  %v435 = vld [vmem:[%s4] sm:$0xff]
  %v436 = vld [vmem:[%s4 + $0x8] sm:$0xff]
  %v437 = vld [vmem:[%s4 + $0x10] sm:$0xff]
  %v438 = vld [vmem:[%s4 + $0x18] sm:$0xff]
  %v439 = vadd.f32 %v431, %v435
  %v440 = vadd.f32 %v432, %v436
  %v441 = vadd.f32 %v433, %v437
  %v442 = vadd.f32 %v434, %v438
  %v443 = vmax.f32 %v439, 0.0
  %v444 = vmax.f32 %v440, 0.0
  %v445 = vmax.f32 %v441, 0.0
  %v446 = vmax.f32 %v442, 0.0
  %447 = vst.msk [vmem:[%s5] sm:$0xff] %vm275, %v443
  %448 = vst.msk [vmem:[%s5 + $0x8] sm:$0xff] %vm275, %v444
  %449 = vst.msk [vmem:[%s5 + $0x10] sm:$0xff] %vm275, %v445
  %450 = vst.msk [vmem:[%s5 + $0x18] sm:$0xff] %vm275, %v446
  // Predicated region
  $region22: #{_lambda_.34} parent=0 // pred_check
    _
  $region23: #{_lambda_.34} parent=0 // pred_check_branch
    %452 = sbr.rel (0) target = $region25
  $region24: #{_lambda_.34} parent=0 // pred_region
    _
  $region25: #{_lambda_.34} parent=0 // pred_fallthru
    _
  // Predicated region
  $region26: #{_lambda_.34} parent=0 // pred_check
    _
  $region27: #{_lambda_.34} parent=0 // pred_check_branch
    %454 = sbr.rel (0) target = $region29
  $region28: #{_lambda_.34} parent=0 // pred_region
    _
  $region29: #{_lambda_.34} parent=0 // pred_fallthru
    _

// kernel: _lambda_.32
$region0: #{_lambda_.32}
  #allocation0 [shape = 'u32[]', space=smem, size = 0x4, offset = 0x4, fixed_abs, tag = 'smem constant byte address 0x4 - core index']
  #allocation1 [shape = 'u32[72,128]{1,0:T(1,128)}', space=vmem, size = 0x9000, scoped, tag = 'internal scratch']
  %s0 = inlined_call_operand.vmem [shape: bf16[288,8], index: 0, kind: input, shape index: {}]
  %s1 = inlined_call_operand.vmem [shape: bf16[32,288], index: 1, kind: input, shape index: {}]
  %s2 = inlined_call_operand.vmem [shape: f32[32,1], index: 2, kind: input, shape index: {}]
  %s3 = inlined_call_operand.vmem [shape: f32[32,1], index: 3, kind: input, shape index: {}]
  %s4 = inlined_call_operand.vmem [shape: bf16[16,8], index: 4, kind: input, shape index: {}]
  %s5 = inlined_call_operand.vmem [shape: bf16[32,16], index: 5, kind: input, shape index: {}]
  %s6 = inlined_call_operand.vmem [shape: f32[32,1], index: 6, kind: input, shape index: {}]
  %s7 = inlined_call_operand.vmem [shape: f32[32,1], index: 7, kind: input, shape index: {}]
  %s8 = inlined_call_operand.vmem [shape: f32[32,8], index: 8, kind: output, shape index: {}]
  %s9 = sld [smem:[#allocation0]]
  $region42: #{_lambda_.32} parent=0
    _
  %s11 = ssub.s32 1, %s9
  %s12 = scalar_select 0, %s11, %s9
  // Predicated region
  $region2: #{_lambda_.32} parent=0 // pred_check
    _
  $region3: #{_lambda_.32} parent=0 // pred_check_branch
    %14 = sbr.rel (0) target = $region5
  $region4: #{_lambda_.32} parent=0 // pred_region
    _
  $region5: #{_lambda_.32} parent=0 // pred_fallthru
    _
  // Predicated region
  $region6: #{_lambda_.32} parent=0 // pred_check
    _
  $region7: #{_lambda_.32} parent=0 // pred_check_branch
    %16 = sbr.rel (0) target = $region9
  $region8: #{_lambda_.32} parent=0 // pred_region
    _
  $region9: #{_lambda_.32} parent=0 // pred_fallthru
    _
  // Predicated region
  $region10: #{_lambda_.32} parent=0 // pred_check
    _
  $region11: #{_lambda_.32} parent=0 // pred_check_branch
    %18 = sbr.rel (0) target = $region13
  $region12: #{_lambda_.32} parent=0 // pred_region
    _
  $region13: #{_lambda_.32} parent=0 // pred_fallthru
    _
  // Predicated region
  $region14: #{_lambda_.32} parent=0 // pred_check
    _
  $region15: #{_lambda_.32} parent=0 // pred_check_branch
    %20 = sbr.rel (0) target = $region17
  $region16: #{_lambda_.32} parent=0 // pred_region
    _
  $region17: #{_lambda_.32} parent=0 // pred_fallthru
    _
  // Predicated region
  $region18: #{_lambda_.32} parent=0 // pred_check
    _
  $region19: #{_lambda_.32} parent=0 // pred_check_branch
    %22 = sbr.rel (0) target = $region21
  $region20: #{_lambda_.32} parent=0 // pred_region
    _
  $region21: #{_lambda_.32} parent=0 // pred_fallthru
    _
  // Predicated region
  $region22: #{_lambda_.32} parent=0 // pred_check
    _
  $region23: #{_lambda_.32} parent=0 // pred_check_branch
    %24 = sbr.rel (0) target = $region25
  $region24: #{_lambda_.32} parent=0 // pred_region
    _
  $region25: #{_lambda_.32} parent=0 // pred_fallthru
    _
  // Predicated region
  $region26: #{_lambda_.32} parent=0 // pred_check
    _
  $region27: #{_lambda_.32} parent=0 // pred_check_branch
    %26 = sbr.rel (0) target = $region29
  $region28: #{_lambda_.32} parent=0 // pred_region
    _
  $region29: #{_lambda_.32} parent=0 // pred_fallthru
    _
  // Predicated region
  $region30: #{_lambda_.32} parent=0 // pred_check
    _
  $region31: #{_lambda_.32} parent=0 // pred_check_branch
    %28 = sbr.rel (0) target = $region33
  $region32: #{_lambda_.32} parent=0 // pred_region
    _
  $region33: #{_lambda_.32} parent=0 // pred_fallthru
    _
  %v30 = vld [vmem:[%s1] sm:$0xff]
  %v31 = vld [vmem:[%s1 + $0x8] sm:$0xf]
  %v32 = vld [vmem:[%s1 + $0xc] sm:$0xff]
  %v33 = vld [vmem:[%s1 + $0x14] sm:$0xf]
  %v34 = vld [vmem:[%s1 + $0x18] sm:$0xff]
  %v35 = vld [vmem:[%s1 + $0x20] sm:$0xf]
  %v36 = vld [vmem:[%s1 + $0x24] sm:$0xff]
  %v37 = vld [vmem:[%s1 + $0x2c] sm:$0xf]
  %v38 = vld [vmem:[%s0] sm:$0xf]
  %v39 = vld [vmem:[%s0 + $0x4] sm:$0xf]
  %v40 = vld [vmem:[%s0 + $0x8] sm:$0xf]
  %v41 = vld [vmem:[%s0 + $0xc] sm:$0xf]
  %v42 = vld [vmem:[%s0 + $0x10] sm:$0xf]
  %v43 = vld [vmem:[%s0 + $0x14] sm:$0xf]
  %v44 = vld [vmem:[%s0 + $0x18] sm:$0xf]
  %v45 = vld [vmem:[%s0 + $0x1c] sm:$0xf]
  %v46 = vld [vmem:[%s0 + $0x20] sm:$0xf]
  %v47 = vld [vmem:[%s0 + $0x24] sm:$0xf]
  %v48 = vld [vmem:[%s0 + $0x28] sm:$0xf]
  %v49 = vld [vmem:[%s0 + $0x2c] sm:$0xf]
  %v50 = vld [vmem:[%s0 + $0x30] sm:$0xf]
  %v51 = vld [vmem:[%s0 + $0x34] sm:$0xf]
  %v52 = vld [vmem:[%s0 + $0x38] sm:$0xf]
  %v53 = vld [vmem:[%s0 + $0x3c] sm:$0xf]
  %v54 = vld [vmem:[%s0 + $0x40] sm:$0xf]
  %v55 = vld [vmem:[%s0 + $0x44] sm:$0xf]
  %v56 = vld [vmem:[%s0 + $0x48] sm:$0xf]
  %v57 = vld [vmem:[%s0 + $0x4c] sm:$0xf]
  %v58 = vld [vmem:[%s0 + $0x50] sm:$0xf]
  %v59 = vld [vmem:[%s0 + $0x54] sm:$0xf]
  %v60 = vld [vmem:[%s0 + $0x58] sm:$0xf]
  %v61 = vld [vmem:[%s0 + $0x5c] sm:$0xf]
  %v62 = vld [vmem:[%s0 + $0x60] sm:$0xf]
  %v63 = vld [vmem:[%s0 + $0x64] sm:$0xf]
  %v64 = vld [vmem:[%s0 + $0x68] sm:$0xf]
  %v65 = vld [vmem:[%s0 + $0x6c] sm:$0xf]
  %v66 = vld [vmem:[%s0 + $0x70] sm:$0xf]
  %v67 = vld [vmem:[%s0 + $0x74] sm:$0xf]
  %v68 = vld [vmem:[%s0 + $0x78] sm:$0xf]
  %v69 = vld [vmem:[%s0 + $0x7c] sm:$0xf]
  %v70 = vld [vmem:[%s0 + $0x80] sm:$0xf]
  %v71 = vld [vmem:[%s0 + $0x84] sm:$0xf]
  %v72 = vld [vmem:[%s0 + $0x88] sm:$0xf]
  %v73 = vld [vmem:[%s0 + $0x8c] sm:$0xf]
  %v82 = vunpack.c.l.b16 %v30
  %v83 = vunpack.c.h.b16 %v30
  %v84 = vunpack.c.l.b16 %v31
  %v85 = vunpack.c.l.b16 %v32
  %v86 = vunpack.c.h.b16 %v32
  %v87 = vunpack.c.l.b16 %v33
  %v88 = vunpack.c.l.b16 %v34
  %v89 = vunpack.c.h.b16 %v34
  %v90 = vunpack.c.l.b16 %v35
  %v91 = vunpack.c.l.b16 %v36
  %v92 = vunpack.c.h.b16 %v36
  %v93 = vunpack.c.l.b16 %v37
  %v94 = vpack.c.b16 %v85, %v82
  %v95 = vpack.c.b16 %v86, %v83
  %v96 = vpack.c.b16 %v87, %v84
  %v97 = vpack.c.b16 %v91, %v88
  %v98 = vpack.c.b16 %v92, %v89
  %v99 = vpack.c.b16 %v93, %v90
  %v140 = vunpack.c.l.b16 %v38
  %v141 = vunpack.c.l.b16 %v39
  %v142 = vunpack.c.l.b16 %v40
  %v143 = vunpack.c.l.b16 %v41
  %v144 = vunpack.c.l.b16 %v42
  %v145 = vunpack.c.l.b16 %v43
  %v146 = vunpack.c.l.b16 %v44
  %v147 = vunpack.c.l.b16 %v45
  %v148 = vunpack.c.l.b16 %v46
  %v149 = vunpack.c.l.b16 %v47
  %v150 = vunpack.c.l.b16 %v48
  %v151 = vunpack.c.l.b16 %v49
  %v152 = vunpack.c.l.b16 %v50
  %v153 = vunpack.c.l.b16 %v51
  %v154 = vunpack.c.l.b16 %v52
  %v155 = vunpack.c.l.b16 %v53
  %v156 = vunpack.c.l.b16 %v54
  %v157 = vunpack.c.l.b16 %v55
  %v158 = vunpack.c.l.b16 %v56
  %v159 = vunpack.c.l.b16 %v57
  %v160 = vunpack.c.l.b16 %v58
  %v161 = vunpack.c.l.b16 %v59
  %v162 = vunpack.c.l.b16 %v60
  %v163 = vunpack.c.l.b16 %v61
  %v164 = vunpack.c.l.b16 %v62
  %v165 = vunpack.c.l.b16 %v63
  %v166 = vunpack.c.l.b16 %v64
  %v167 = vunpack.c.l.b16 %v65
  %v168 = vunpack.c.l.b16 %v66
  %v169 = vunpack.c.l.b16 %v67
  %v170 = vunpack.c.l.b16 %v68
  %v171 = vunpack.c.l.b16 %v69
  %v172 = vunpack.c.l.b16 %v70
  %v173 = vunpack.c.l.b16 %v71
  %v174 = vunpack.c.l.b16 %v72
  %v175 = vunpack.c.l.b16 %v73
  %v176 = vpack.c.b16 %v141, %v140
  %v177 = vpack.c.b16 %v143, %v142
  %v178 = vpack.c.b16 %v145, %v144
  %v179 = vpack.c.b16 %v147, %v146
  %v180 = vpack.c.b16 %v149, %v148
  %v181 = vpack.c.b16 %v151, %v150
  %v182 = vpack.c.b16 %v153, %v152
  %v183 = vpack.c.b16 %v155, %v154
  %v184 = vpack.c.b16 %v157, %v156
  %v185 = vpack.c.b16 %v159, %v158
  %v186 = vpack.c.b16 %v161, %v160
  %v187 = vpack.c.b16 %v163, %v162
  %v188 = vpack.c.b16 %v165, %v164
  %v189 = vpack.c.b16 %v167, %v166
  %v190 = vpack.c.b16 %v169, %v168
  %v191 = vpack.c.b16 %v171, %v170
  %v192 = vpack.c.b16 %v173, %v172
  %v193 = vpack.c.b16 %v175, %v174
  %vm212 = vcmask 261120
  %v214 = vsel %vm212, %v96, 0
  %v217 = vsel %vm212, %v99, 0
  %219 = vmatpush.bf16.msra.mxu0 %v183
  %220 = vmatpush.bf16.msra.mxu0 %v182
  %221 = vmatpush.bf16.msra.mxu0 %v181
  %222 = vmatpush.bf16.msra.mxu0 %v180
  %223 = vmatpush.bf16.msra.mxu0 %v179
  %224 = vmatpush.bf16.msra.mxu0 %v178
  %225 = vmatpush.bf16.msra.mxu0 %v177
  %226 = vmatpush.bf16.msra.mxu0 %v176
  %227 = vmatmul.bf16.gmra.mxu0 %v94
  %v228 = vpop.f32.mrf.mxu0
  %v229 = vadd.f32 0.0, %v228
  %v230 = vpop.f32.mrf.mxu0
  %v231 = vadd.f32 0.0, %v230
  %232 = vmatmul.bf16.gmra.mxu0 %v97
  %v233 = vpop.f32.mrf.mxu0
  %v234 = vadd.f32 0.0, %v233
  %v235 = vpop.f32.mrf.mxu0
  %v236 = vadd.f32 0.0, %v235
  %237 = vdwg.mxu0
  %238 = vmatpush.bf16.msra.mxu0 %v191
  %239 = vmatpush.bf16.msra.mxu0 %v190
  %240 = vmatpush.bf16.msra.mxu0 %v189
  %241 = vmatpush.bf16.msra.mxu0 %v188
  %242 = vmatpush.bf16.msra.mxu0 %v187
  %243 = vmatpush.bf16.msra.mxu0 %v186
  %244 = vmatpush.bf16.msra.mxu0 %v185
  %245 = vmatpush.bf16.msra.mxu0 %v184
  %246 = vmatmul.bf16.gmra.mxu0 %v95
  %v247 = vpop.f32.mrf.mxu0
  %v248 = vadd.f32 %v229, %v247
  %v249 = vpop.f32.mrf.mxu0
  %v250 = vadd.f32 %v231, %v249
  %251 = vmatmul.bf16.gmra.mxu0 %v98
  %v252 = vpop.f32.mrf.mxu0
  %v253 = vadd.f32 %v234, %v252
  %v254 = vpop.f32.mrf.mxu0
  %v255 = vadd.f32 %v236, %v254
  %256 = vdwg.mxu0
  %257 = vmatpush.bf16.msra.mxu0 0
  %258 = vmatpush.bf16.msra.mxu0 0
  %259 = vmatpush.bf16.msra.mxu0 0
  %260 = vmatpush.bf16.msra.mxu0 0
  %261 = vmatpush.bf16.msra.mxu0 0
  %262 = vmatpush.bf16.msra.mxu0 0
  %263 = vmatpush.bf16.msra.mxu0 %v193
  %264 = vmatpush.bf16.msra.mxu0 %v192
  %265 = vmatmul.bf16.gmra.mxu0 %v214
  %v266 = vpop.f32.mrf.mxu0
  %v267 = vadd.f32 %v248, %v266
  %v268 = vpop.f32.mrf.mxu0
  %v269 = vadd.f32 %v250, %v268
  %270 = vmatmul.bf16.gmra.mxu0 %v217
  %v271 = vpop.f32.mrf.mxu0
  %v272 = vadd.f32 %v253, %v271
  %v273 = vpop.f32.mrf.mxu0
  %v274 = vadd.f32 %v255, %v273
  %275 = vdwg.mxu0
  %v276 = vld [vmem:[%s5] sm:$0xf]
  %v277 = vld [vmem:[%s5 + $0x4] sm:$0xf]
  %v278 = vld [vmem:[%s5 + $0x8] sm:$0xf]
  %v279 = vld [vmem:[%s5 + $0xc] sm:$0xf]
  %v280 = vld [vmem:[%s4] sm:$0xf]
  %v281 = vld [vmem:[%s4 + $0x4] sm:$0xf]
  %v286 = vunpack.c.l.b16 %v276
  %v287 = vunpack.c.l.b16 %v277
  %v288 = vunpack.c.l.b16 %v278
  %v289 = vunpack.c.l.b16 %v279
  %v290 = vpack.c.b16 %v287, %v286
  %v291 = vpack.c.b16 %v289, %v288
  %v294 = vunpack.c.l.b16 %v280
  %v295 = vunpack.c.l.b16 %v281
  %v296 = vpack.c.b16 %v295, %v294
  %vm298 = vcmask 130048
  %v300 = vsel %vm298, %v290, 0
  %v303 = vsel %vm298, %v291, 0
  %305 = vmatpush.bf16.msra.mxu0 0
  %306 = vmatpush.bf16.msra.mxu0 0
  %307 = vmatpush.bf16.msra.mxu0 0
  %308 = vmatpush.bf16.msra.mxu0 0
  %309 = vmatpush.bf16.msra.mxu0 0
  %310 = vmatpush.bf16.msra.mxu0 0
  %311 = vmatpush.bf16.msra.mxu0 0
  %312 = vmatpush.bf16.msra.mxu0 %v296
  %313 = vmatmul.bf16.gmra.mxu0 %v300
  %v314 = vpop.f32.mrf.mxu0
  %v315 = vadd.f32 0.0, %v314
  %v316 = vpop.f32.mrf.mxu0
  %v317 = vadd.f32 0.0, %v316
  %318 = vmatmul.bf16.gmra.mxu0 %v303
  %v319 = vpop.f32.mrf.mxu0
  %v320 = vadd.f32 0.0, %v319
  %v321 = vpop.f32.mrf.mxu0
  %v322 = vadd.f32 0.0, %v321
  %323 = vdwg.mxu0
  %v324 = vld [vmem:[%s2] sm:$0xff]
  %v325 = vld [vmem:[%s2 + $0x8] sm:$0xff]
  %v326 = vld [vmem:[%s2 + $0x10] sm:$0xff]
  %v327 = vld [vmem:[%s2 + $0x18] sm:$0xff]
  %v328 = vld [vmem:[%s3] sm:$0xff]
  %v329 = vld [vmem:[%s3 + $0x8] sm:$0xff]
  %v330 = vld [vmem:[%s3 + $0x10] sm:$0xff]
  %v331 = vld [vmem:[%s3 + $0x18] sm:$0xff]
  %vm332 = vcmask 64512
  %v333 = vsel %vm332, %v267, 0.0
  %334 = vadd.xlane.f32.xlu0 %v333
  %v335 = vpop.xlane.xlu0 %334
  %v336 = vsel %vm332, %v269, 0.0
  %337 = vadd.xlane.f32.xlu0 %v336
  %v338 = vpop.xlane.xlu0 %337
  %v339 = vsel %vm332, %v272, 0.0
  %340 = vadd.xlane.f32.xlu0 %v339
  %v341 = vpop.xlane.xlu0 %340
  %v342 = vsel %vm332, %v274, 0.0
  %343 = vadd.xlane.f32.xlu0 %v342
  %v344 = vpop.xlane.xlu0 %343
  %v345 = vrcp.pop 8.0
  %v346 = vmul.f32 8.0, %v345
  %v347 = vsub.f32 1.0, %v346
  %v348 = vmul.f32 %v345, %v347
  %v349 = vadd.f32 %v345, %v348
  %vm350 = vweird.f32 %v345
  %v351 = vsel %vm350, %v345, %v349
  %v352 = vmul.f32 %v335, %v351
  %v353 = vmul.f32 %v338, %v351
  %v354 = vmul.f32 %v341, %v351
  %v355 = vmul.f32 %v344, %v351
  %v356 = vmul.f32 %v267, %v267
  %v357 = vmul.f32 %v269, %v269
  %v358 = vmul.f32 %v272, %v272
  %v359 = vmul.f32 %v274, %v274
  %v360 = vsel %vm332, %v356, 0.0
  %361 = vadd.xlane.f32.xlu0 %v360
  %v362 = vpop.xlane.xlu0 %361
  %v363 = vsel %vm332, %v357, 0.0
  %364 = vadd.xlane.f32.xlu0 %v363
  %v365 = vpop.xlane.xlu0 %364
  %v366 = vsel %vm332, %v358, 0.0
  %367 = vadd.xlane.f32.xlu0 %v366
  %v368 = vpop.xlane.xlu0 %367
  %v369 = vsel %vm332, %v359, 0.0
  %370 = vadd.xlane.f32.xlu0 %v369
  %v371 = vpop.xlane.xlu0 %370
  %v372 = vmul.f32 %v362, %v351
  %v373 = vmul.f32 %v365, %v351
  %v374 = vmul.f32 %v368, %v351
  %v375 = vmul.f32 %v371, %v351
  %v376 = vmul.f32 %v352, %v352
  %v377 = vmul.f32 %v353, %v353
  %v378 = vmul.f32 %v354, %v354
  %v379 = vmul.f32 %v355, %v355
  %v380 = vsub.f32 %v372, %v376
  %v381 = vsub.f32 %v373, %v377
  %v382 = vsub.f32 %v374, %v378
  %v383 = vsub.f32 %v375, %v379
  %v384 = vmax.f32 %v380, 0.0
  %v385 = vmax.f32 %v381, 0.0
  %v386 = vmax.f32 %v382, 0.0
  %v387 = vmax.f32 %v383, 0.0
  %v388 = vadd.f32 %v384, 1e-05
  %v389 = vadd.f32 %v385, 1e-05
  %v390 = vadd.f32 %v386, 1e-05
  %v391 = vadd.f32 %v387, 1e-05
  %v392 = vrsqrt.pop %v388
  %v393 = vmul.f32 %v392, %v388
  %v394 = vmul.f32 %v393, %v392
  %v395 = vmul.f32 0.5, %v394
  %v396 = vsub.f32 1.5, %v395
  %v397 = vmul.f32 %v392, %v396
  %vm398 = vweird.f32 %v388
  %vm399 = vweird.f32 %v392
  %vm400 = vmor %vm398, %vm399
  %v401 = vsel %vm400, %v392, %v397
  %v402 = vrsqrt.pop %v389
  %v403 = vmul.f32 %v402, %v389
  %v404 = vmul.f32 %v403, %v402
  %v405 = vmul.f32 0.5, %v404
  %v406 = vsub.f32 1.5, %v405
  %v407 = vmul.f32 %v402, %v406
  %vm408 = vweird.f32 %v389
  %vm409 = vweird.f32 %v402
  %vm410 = vmor %vm408, %vm409
  %v411 = vsel %vm410, %v402, %v407
  %v412 = vrsqrt.pop %v390
  %v413 = vmul.f32 %v412, %v390
  %v414 = vmul.f32 %v413, %v412
  %v415 = vmul.f32 0.5, %v414
  %v416 = vsub.f32 1.5, %v415
  %v417 = vmul.f32 %v412, %v416
  %vm418 = vweird.f32 %v390
  %vm419 = vweird.f32 %v412
  %vm420 = vmor %vm418, %vm419
  %v421 = vsel %vm420, %v412, %v417
  %v422 = vrsqrt.pop %v391
  %v423 = vmul.f32 %v422, %v391
  %v424 = vmul.f32 %v423, %v422
  %v425 = vmul.f32 0.5, %v424
  %v426 = vsub.f32 1.5, %v425
  %v427 = vmul.f32 %v422, %v426
  %vm428 = vweird.f32 %v391
  %vm429 = vweird.f32 %v422
  %vm430 = vmor %vm428, %vm429
  %v431 = vsel %vm430, %v422, %v427
  %v432 = vmul.f32 %v324, %v401
  %v433 = vmul.f32 %v325, %v411
  %v434 = vmul.f32 %v326, %v421
  %v435 = vmul.f32 %v327, %v431
  %v436 = vmul.f32 %v352, %v432
  %v437 = vmul.f32 %v353, %v433
  %v438 = vmul.f32 %v354, %v434
  %v439 = vmul.f32 %v355, %v435
  %v440 = vsub.f32 %v328, %v436
  %v441 = vsub.f32 %v329, %v437
  %v442 = vsub.f32 %v330, %v438
  %v443 = vsub.f32 %v331, %v439
  %445 = vset.pattern.permute.xlu0 0
  %446 = vperm.xlu0 %445, %v432
  %v447 = vpop.permute.xlu0 %446
  %450 = vset.pattern.permute.xlu0 0
  %451 = vperm.xlu0 %450, %v433
  %v452 = vpop.permute.xlu0 %451
  %455 = vset.pattern.permute.xlu0 0
  %456 = vperm.xlu0 %455, %v434
  %v457 = vpop.permute.xlu0 %456
  %460 = vset.pattern.permute.xlu0 0
  %461 = vperm.xlu0 %460, %v435
  %v462 = vpop.permute.xlu0 %461
  %v464 = vmul.f32 %v267, %v447
  %v465 = vmul.f32 %v269, %v452
  %v466 = vmul.f32 %v272, %v457
  %v467 = vmul.f32 %v274, %v462
  %469 = vset.pattern.permute.xlu0 0
  %470 = vperm.xlu0 %469, %v440
  %v471 = vpop.permute.xlu0 %470
  %474 = vset.pattern.permute.xlu0 0
  %475 = vperm.xlu0 %474, %v441
  %v476 = vpop.permute.xlu0 %475
  %479 = vset.pattern.permute.xlu0 0
  %480 = vperm.xlu0 %479, %v442
  %v481 = vpop.permute.xlu0 %480
  %484 = vset.pattern.permute.xlu0 0
  %485 = vperm.xlu0 %484, %v443
  %v486 = vpop.permute.xlu0 %485
  %v488 = vadd.f32 %v464, %v471
  %v489 = vadd.f32 %v465, %v476
  %v490 = vadd.f32 %v466, %v481
  %v491 = vadd.f32 %v467, %v486
  %v492 = vld [vmem:[%s6] sm:$0xff]
  %v493 = vld [vmem:[%s6 + $0x8] sm:$0xff]
  %v494 = vld [vmem:[%s6 + $0x10] sm:$0xff]
  %v495 = vld [vmem:[%s6 + $0x18] sm:$0xff]
  %v496 = vld [vmem:[%s7] sm:$0xff]
  %v497 = vld [vmem:[%s7 + $0x8] sm:$0xff]
  %v498 = vld [vmem:[%s7 + $0x10] sm:$0xff]
  %v499 = vld [vmem:[%s7 + $0x18] sm:$0xff]
  %v500 = vsel %vm332, %v315, 0.0
  %501 = vadd.xlane.f32.xlu0 %v500
  %v502 = vpop.xlane.xlu0 %501
  %v503 = vsel %vm332, %v317, 0.0
  %504 = vadd.xlane.f32.xlu0 %v503
  %v505 = vpop.xlane.xlu0 %504
  %v506 = vsel %vm332, %v320, 0.0
  %507 = vadd.xlane.f32.xlu0 %v506
  %v508 = vpop.xlane.xlu0 %507
  %v509 = vsel %vm332, %v322, 0.0
  %510 = vadd.xlane.f32.xlu0 %v509
  %v511 = vpop.xlane.xlu0 %510
  %v512 = vmul.f32 %v502, %v351
  %v513 = vmul.f32 %v505, %v351
  %v514 = vmul.f32 %v508, %v351
  %v515 = vmul.f32 %v511, %v351
  %v516 = vmul.f32 %v315, %v315
  %v517 = vmul.f32 %v317, %v317
  %v518 = vmul.f32 %v320, %v320
  %v519 = vmul.f32 %v322, %v322
  %v520 = vsel %vm332, %v516, 0.0
  %521 = vadd.xlane.f32.xlu0 %v520
  %v522 = vpop.xlane.xlu0 %521
  %v523 = vsel %vm332, %v517, 0.0
  %524 = vadd.xlane.f32.xlu0 %v523
  %v525 = vpop.xlane.xlu0 %524
  %v526 = vsel %vm332, %v518, 0.0
  %527 = vadd.xlane.f32.xlu0 %v526
  %v528 = vpop.xlane.xlu0 %527
  %v529 = vsel %vm332, %v519, 0.0
  %530 = vadd.xlane.f32.xlu0 %v529
  %v531 = vpop.xlane.xlu0 %530
  %v532 = vmul.f32 %v522, %v351
  %v533 = vmul.f32 %v525, %v351
  %v534 = vmul.f32 %v528, %v351
  %v535 = vmul.f32 %v531, %v351
  %v536 = vmul.f32 %v512, %v512
  %v537 = vmul.f32 %v513, %v513
  %v538 = vmul.f32 %v514, %v514
  %v539 = vmul.f32 %v515, %v515
  %v540 = vsub.f32 %v532, %v536
  %v541 = vsub.f32 %v533, %v537
  %v542 = vsub.f32 %v534, %v538
  %v543 = vsub.f32 %v535, %v539
  %v544 = vmax.f32 %v540, 0.0
  %v545 = vmax.f32 %v541, 0.0
  %v546 = vmax.f32 %v542, 0.0
  %v547 = vmax.f32 %v543, 0.0
  %v548 = vadd.f32 %v544, 1e-05
  %v549 = vadd.f32 %v545, 1e-05
  %v550 = vadd.f32 %v546, 1e-05
  %v551 = vadd.f32 %v547, 1e-05
  %v552 = vrsqrt.pop %v548
  %v553 = vmul.f32 %v552, %v548
  %v554 = vmul.f32 %v553, %v552
  %v555 = vmul.f32 0.5, %v554
  %v556 = vsub.f32 1.5, %v555
  %v557 = vmul.f32 %v552, %v556
  %vm558 = vweird.f32 %v548
  %vm559 = vweird.f32 %v552
  %vm560 = vmor %vm558, %vm559
  %v561 = vsel %vm560, %v552, %v557
  %v562 = vrsqrt.pop %v549
  %v563 = vmul.f32 %v562, %v549
  %v564 = vmul.f32 %v563, %v562
  %v565 = vmul.f32 0.5, %v564
  %v566 = vsub.f32 1.5, %v565
  %v567 = vmul.f32 %v562, %v566
  %vm568 = vweird.f32 %v549
  %vm569 = vweird.f32 %v562
  %vm570 = vmor %vm568, %vm569
  %v571 = vsel %vm570, %v562, %v567
  %v572 = vrsqrt.pop %v550
  %v573 = vmul.f32 %v572, %v550
  %v574 = vmul.f32 %v573, %v572
  %v575 = vmul.f32 0.5, %v574
  %v576 = vsub.f32 1.5, %v575
  %v577 = vmul.f32 %v572, %v576
  %vm578 = vweird.f32 %v550
  %vm579 = vweird.f32 %v572
  %vm580 = vmor %vm578, %vm579
  %v581 = vsel %vm580, %v572, %v577
  %v582 = vrsqrt.pop %v551
  %v583 = vmul.f32 %v582, %v551
  %v584 = vmul.f32 %v583, %v582
  %v585 = vmul.f32 0.5, %v584
  %v586 = vsub.f32 1.5, %v585
  %v587 = vmul.f32 %v582, %v586
  %vm588 = vweird.f32 %v551
  %vm589 = vweird.f32 %v582
  %vm590 = vmor %vm588, %vm589
  %v591 = vsel %vm590, %v582, %v587
  %v592 = vmul.f32 %v492, %v561
  %v593 = vmul.f32 %v493, %v571
  %v594 = vmul.f32 %v494, %v581
  %v595 = vmul.f32 %v495, %v591
  %v596 = vmul.f32 %v512, %v592
  %v597 = vmul.f32 %v513, %v593
  %v598 = vmul.f32 %v514, %v594
  %v599 = vmul.f32 %v515, %v595
  %v600 = vsub.f32 %v496, %v596
  %v601 = vsub.f32 %v497, %v597
  %v602 = vsub.f32 %v498, %v598
  %v603 = vsub.f32 %v499, %v599
  %605 = vset.pattern.permute.xlu0 0
  %606 = vperm.xlu0 %605, %v592
  %v607 = vpop.permute.xlu0 %606
  %610 = vset.pattern.permute.xlu0 0
  %611 = vperm.xlu0 %610, %v593
  %v612 = vpop.permute.xlu0 %611
  %615 = vset.pattern.permute.xlu0 0
  %616 = vperm.xlu0 %615, %v594
  %v617 = vpop.permute.xlu0 %616
  %620 = vset.pattern.permute.xlu0 0
  %621 = vperm.xlu0 %620, %v595
  %v622 = vpop.permute.xlu0 %621
  %v624 = vmul.f32 %v315, %v607
  %v625 = vmul.f32 %v317, %v612
  %v626 = vmul.f32 %v320, %v617
  %v627 = vmul.f32 %v322, %v622
  %629 = vset.pattern.permute.xlu0 0
  %630 = vperm.xlu0 %629, %v600
  %v631 = vpop.permute.xlu0 %630
  %634 = vset.pattern.permute.xlu0 0
  %635 = vperm.xlu0 %634, %v601
  %v636 = vpop.permute.xlu0 %635
  %639 = vset.pattern.permute.xlu0 0
  %640 = vperm.xlu0 %639, %v602
  %v641 = vpop.permute.xlu0 %640
  %644 = vset.pattern.permute.xlu0 0
  %645 = vperm.xlu0 %644, %v603
  %v646 = vpop.permute.xlu0 %645
  %v648 = vadd.f32 %v624, %v631
  %v649 = vadd.f32 %v625, %v636
  %v650 = vadd.f32 %v626, %v641
  %v651 = vadd.f32 %v627, %v646
  %v652 = vadd.f32 %v488, %v648
  %v653 = vadd.f32 %v489, %v649
  %v654 = vadd.f32 %v490, %v650
  %v655 = vadd.f32 %v491, %v651
  %v656 = vmax.f32 %v652, 0.0
  %v657 = vmax.f32 %v653, 0.0
  %v658 = vmax.f32 %v654, 0.0
  %v659 = vmax.f32 %v655, 0.0
  %660 = vst.msk [vmem:[%s8] sm:$0xff] %vm332, %v656
  %661 = vst.msk [vmem:[%s8 + $0x8] sm:$0xff] %vm332, %v657
  %662 = vst.msk [vmem:[%s8 + $0x10] sm:$0xff] %vm332, %v658
  %663 = vst.msk [vmem:[%s8 + $0x18] sm:$0xff] %vm332, %v659
  // Predicated region
  $region34: #{_lambda_.32} parent=0 // pred_check
    _
  $region35: #{_lambda_.32} parent=0 // pred_check_branch
    %665 = sbr.rel (0) target = $region37
  $region36: #{_lambda_.32} parent=0 // pred_region
    _
  $region37: #{_lambda_.32} parent=0 // pred_fallthru
    _
  // Predicated region
  $region38: #{_lambda_.32} parent=0 // pred_check
    _
  $region39: #{_lambda_.32} parent=0 // pred_check_branch
    %667 = sbr.rel (0) target = $region41
  $region40: #{_lambda_.32} parent=0 // pred_region
    _
  $region41: #{_lambda_.32} parent=0 // pred_fallthru
    _

// kernel: _lambda_.35
$region0: #{_lambda_.35}
  #allocation0 [shape = 'u32[]', space=smem, size = 0x4, offset = 0x4, fixed_abs, tag = 'smem constant byte address 0x4 - core index']
  #allocation1 [shape = 'u32[72,128]{1,0:T(1,128)}', space=vmem, size = 0x9000, scoped, tag = 'internal scratch']
  %s0 = inlined_call_operand.vmem [shape: bf16[2,128], index: 0, kind: input, shape index: {}]
  %s1 = inlined_call_operand.vmem [shape: bf16[128,10], index: 1, kind: input, shape index: {}]
  %s2 = inlined_call_operand.vmem [shape: f32[1,10], index: 2, kind: input, shape index: {}]
  %s3 = inlined_call_operand.hbm [shape: f32[2,10], index: 3, kind: output, shape index: {}]
  %s4 = sld [smem:[#allocation0]]
  $region22: #{_lambda_.35} parent=0
    _
  %s6 = ssub.s32 1, %s4
  %s7 = scalar_select 0, %s6, %s4
  $region1: #{_lambda_.35} parent=0
    #allocation2 [shape = 'u8[1024]{0}', space=vmem, size = 0x400, scoped, tag = 'output window, operand 0, single buffered']
    #allocation3 [shape = 's32[1]{0}', space=sflag, size = 0x4, scoped, tag = 'scoped memory for _lambda_.35']
    %8 = vsyncpa [#allocation3], 0
    // Predicated region
    $region2: #{_lambda_.35} parent=1 // pred_check
      _
    $region3: #{_lambda_.35} parent=1 // pred_check_branch
      %10 = sbr.rel (0) target = $region5
    $region4: #{_lambda_.35} parent=1 // pred_region
      _
    $region5: #{_lambda_.35} parent=1 // pred_fallthru
      _
    // Predicated region
    $region6: #{_lambda_.35} parent=1 // pred_check
      _
    $region7: #{_lambda_.35} parent=1 // pred_check_branch
      %12 = sbr.rel (0) target = $region9
    $region8: #{_lambda_.35} parent=1 // pred_region
      _
    $region9: #{_lambda_.35} parent=1 // pred_fallthru
      _
    // Predicated region
    $region10: #{_lambda_.35} parent=1 // pred_check
      _
    $region11: #{_lambda_.35} parent=1 // pred_check_branch
      %14 = sbr.rel (0) target = $region13
    $region12: #{_lambda_.35} parent=1 // pred_region
      _
    $region13: #{_lambda_.35} parent=1 // pred_fallthru
      _
    %v15 = vld [vmem:[%s0] sm:$0x1]
    %v16 = vld [vmem:[%s1] sm:$0xf]
    %v17 = vld [vmem:[%s1 + $0x4] sm:$0xf]
    %v18 = vld [vmem:[%s1 + $0x8] sm:$0xf]
    %v19 = vld [vmem:[%s1 + $0xc] sm:$0xf]
    %v20 = vld [vmem:[%s1 + $0x10] sm:$0xf]
    %v21 = vld [vmem:[%s1 + $0x14] sm:$0xf]
    %v22 = vld [vmem:[%s1 + $0x18] sm:$0xf]
    %v23 = vld [vmem:[%s1 + $0x1c] sm:$0xf]
    %v24 = vld [vmem:[%s1 + $0x20] sm:$0xf]
    %v25 = vld [vmem:[%s1 + $0x24] sm:$0xf]
    %v26 = vld [vmem:[%s1 + $0x28] sm:$0xf]
    %v27 = vld [vmem:[%s1 + $0x2c] sm:$0xf]
    %v28 = vld [vmem:[%s1 + $0x30] sm:$0xf]
    %v29 = vld [vmem:[%s1 + $0x34] sm:$0xf]
    %v30 = vld [vmem:[%s1 + $0x38] sm:$0xf]
    %v31 = vld [vmem:[%s1 + $0x3c] sm:$0xf]
    %v32 = vld [vmem:[%s2] sm:$0x1]
    %v34 = vperm.slane %v32, 0
    %v52 = vunpack.c.l.b16 %v16
    %v53 = vunpack.c.l.b16 %v17
    %v54 = vunpack.c.l.b16 %v18
    %v55 = vunpack.c.l.b16 %v19
    %v56 = vunpack.c.l.b16 %v20
    %v57 = vunpack.c.l.b16 %v21
    %v58 = vunpack.c.l.b16 %v22
    %v59 = vunpack.c.l.b16 %v23
    %v60 = vunpack.c.l.b16 %v24
    %v61 = vunpack.c.l.b16 %v25
    %v62 = vunpack.c.l.b16 %v26
    %v63 = vunpack.c.l.b16 %v27
    %v64 = vunpack.c.l.b16 %v28
    %v65 = vunpack.c.l.b16 %v29
    %v66 = vunpack.c.l.b16 %v30
    %v67 = vunpack.c.l.b16 %v31
    %v68 = vpack.c.b16 %v53, %v52
    %v69 = vpack.c.b16 %v55, %v54
    %v70 = vpack.c.b16 %v57, %v56
    %v71 = vpack.c.b16 %v59, %v58
    %v72 = vpack.c.b16 %v61, %v60
    %v73 = vpack.c.b16 %v63, %v62
    %v74 = vpack.c.b16 %v65, %v64
    %v75 = vpack.c.b16 %v67, %v66
    %84 = vmatpush.bf16.msra.mxu0 %v75
    %85 = vmatpush.bf16.msra.mxu0 %v74
    %86 = vmatpush.bf16.msra.mxu0 %v73
    %87 = vmatpush.bf16.msra.mxu0 %v72
    %88 = vmatpush.bf16.msra.mxu0 %v71
    %89 = vmatpush.bf16.msra.mxu0 %v70
    %90 = vmatpush.bf16.msra.mxu0 %v69
    %91 = vmatpush.bf16.msra.mxu0 %v68
    %92 = vmatmul.bf16.gmra.mxu0 %v15
    %v93 = vpop.f32.mrf.mxu0
    %v94 = vadd.f32 %v34, %v93
    %v95 = vpop.f32.mrf.mxu0
    %96 = vdwg.mxu0
    %vm97 = vcmask 74752
    %98 = vst.msk [vmem:[#allocation2] sm:$0x3] %vm97, %v94
    // Predicated region
    $region14: #{_lambda_.35} parent=1 // pred_check
      _
    $region15: #{_lambda_.35} parent=1 // pred_check_branch
      %100 = sbr.rel (0) target = $region17
    $region16: #{_lambda_.35} parent=1 // pred_region
      %102 = vsyncadd [#allocation3], 0
      %s104 = sshll.u32 [#allocation2], 4
      %s105 = int_to_ptr.vmem [resolvable:$true] %s104
      %s106 = sshll.u32 %s3, 4
      %s107 = int_to_ptr.hbm [resolvable:$true] %s106
      %109 = dma.vmem_to_hbm [thread:$0]  %s105, 32, %s107, [#allocation3]
    $region17: #{_lambda_.35} parent=1 // pred_fallthru
      _
    // Predicated region
    $region18: #{_lambda_.35} parent=1 // pred_check
      _
    $region19: #{_lambda_.35} parent=1 // pred_check_branch
      %111 = sbr.rel (0) target = $region21
    $region20: #{_lambda_.35} parent=1 // pred_region
      %113 = dma.done [#allocation3], 32
    $region21: #{_lambda_.35} parent=1 // pred_fallthru
      _
    %114 = vsyncpa [#allocation3], 1

</llo_original>
